<compile_context>
chip_gen: v6e
topology: v6e:2x2x1
jax: 0.10.0
libtpu: 0.0.40
codegen_flags: <defaults>
</compile_context>

<pallas_src>
import jax
import jax.numpy as jnp
from jax.experimental import pallas as pl
from jax.experimental.pallas import tpu as pltpu

NUM_LAYERS = 5
INPUT = 3       # LSTM input_size  (== hidden_size for this module)
HIDDEN = 3      # LSTM hidden_size (== Linear in/out features)
BATCH = 2
SEQ = 8
GATES = 4 * HIDDEN


def _sigmoid_exact(z):
    # Used only by the plain-JAX reference.
    return 1.0 / (1.0 + jnp.exp(-z))


def net_kernel(x_ref, p_ref, y_ref):
    """Whole forward pass in one kernel (single VMEM block, no grid).

    x_ref: (T*B, F) float32, time-major: row t*B + b == x_input[b, t, :]
    p_ref: (39, 4H) packed parameters:
             rows [0, L*F)            w_ih, layer-major, (in, gate) layout
             rows [L*F, L*F+L*H)      w_hh, layer-major, (hid, gate) layout
             rows [L*F+L*H, +L)       b_ih + b_hh, one row per layer
             rows [+0, +H)            Linear weight (in, out), cols [0, H)
             row  [+H]                Linear bias,             cols [0, H)
    y_ref: (B, H) output
    """
    B, T, F, H, L, G = BATCH, SEQ, INPUT, HIDDEN, NUM_LAYERS, GATES
    # NOTE: the l>=1 input width equals H; offsets below rely on F == H == 3
    # (true for nn.LSTM(3, 3, 5)).

    x = x_ref[...]                                    # (T*B, F)
    p = p_ref[...]                                    # (39, G)

    off_hh = L * F                                    # 15
    off_b = off_hh + L * H                            # 30
    off_lin = off_b + L                               # 35

    # ---------------- hoisted, off the serial chain -------------------------
    # Layer-0 input projection + bias for ALL timesteps: K=F VPU FMAs on a
    # (T*B, G) tile.  Independent of the recurrence, so it overlaps with the
    # first diagonals "for free".
    xp0 = jnp.broadcast_to(p[off_b:off_b + 1, :], (T * B, G))
    for k in range(F):
        xp0 = xp0 + x[:, k:k + 1] * jnp.broadcast_to(p[k:k + 1, :], (T * B, G))

    # Pre-broadcast every weight/bias row to (B, G) exactly once (JAX does not
    # CSE broadcast_in_dim, so this must not live inside the cell update).
    whh_rows = [[jnp.broadcast_to(
                    p[off_hh + l * H + k:off_hh + l * H + k + 1, :], (B, G))
                 for k in range(H)] for l in range(L)]
    wih_rows = [None] + [[jnp.broadcast_to(
                    p[l * F + k:l * F + k + 1, :], (B, G))
                 for k in range(H)] for l in range(1, L)]
    b_rows = [None] + [jnp.broadcast_to(
                    p[off_b + l:off_b + l + 1, :], (B, G))
                 for l in range(1, L)]

    # ---------------- wavefront over (layer, time) --------------------------
    h_st = [jnp.zeros((B, H), jnp.float32) for _ in range(L)]
    c_st = [jnp.zeros((B, H), jnp.float32) for _ in range(L)]

    for d in range(T + L - 1):
        lo = max(0, d - T + 1)
        hi = min(L, d + 1)
        new_h = {}
        new_c = {}
        for l in range(lo, hi):            # all cells on this diagonal are independent
            t = d - l
            if l == 0:
                gates = xp0[t * B:(t + 1) * B, :]          # bias already folded in
            else:
                hin = h_st[l - 1]          # h[l-1][t], produced on diagonal d-1
                gates = b_rows[l]
                for k in range(H):
                    gates = gates + hin[:, k:k + 1] * wih_rows[l][k]
            h_own = h_st[l]                # h[l][t-1]
            for k in range(H):
                gates = gates + h_own[:, k:k + 1] * whh_rows[l][k]

            # sigmoid via tanh identity -> no exp, no divide on the chain.
            sg = 0.5 * (1.0 + jnp.tanh(0.5 * gates))
            tg = jnp.tanh(gates)
            i_g = sg[:, 0 * H:1 * H]
            f_g = sg[:, 1 * H:2 * H]
            g_g = tg[:, 2 * H:3 * H]
            o_g = sg[:, 3 * H:4 * H]

            c_new = f_g * c_st[l] + i_g * g_g
            new_c[l] = c_new
            new_h[l] = o_g * jnp.tanh(c_new)

        # Commit after the whole diagonal (snapshot semantics: every read above
        # saw the diagonal d-1 values).
        for l in range(lo, hi):
            h_st[l] = new_h[l]
            c_st[l] = new_c[l]

    # ---------------- final Linear + Block (VPU FMAs, no MXU) ---------------
    h_last = h_st[L - 1]                                  # last layer, last step
    lin = jnp.broadcast_to(p[off_lin + H:off_lin + H + 1, 0:H], (B, H))
    for k in range(H):
        lin = lin + h_last[:, k:k + 1] * jnp.broadcast_to(
            p[off_lin + k:off_lin + k + 1, 0:H], (B, H))

    x_last = x[(T - 1) * B:T * B, :]                      # x_input[:, -1, :]
    y_ref[...] = jnp.maximum((1.0 + lin) * x_last, 0.0)


@jax.jit
def net_forward(x, w_ih, w_hh, b, w_lin, b_lin):
    B, T, F = x.shape
    G = 4 * HIDDEN
    # Time-major + flattened so the kernel never slices the middle axis.
    x_tm = jnp.transpose(x, (1, 0, 2)).reshape(T * B, F)

    # Pack all parameters into ONE buffer -> 2 input DMAs instead of 6.
    params = jnp.concatenate([
        w_ih.reshape(NUM_LAYERS * F, G),
        w_hh.reshape(NUM_LAYERS * HIDDEN, G),
        b.reshape(NUM_LAYERS, G),
        jnp.pad(w_lin, ((0, 0), (0, G - HIDDEN))),
        jnp.pad(b_lin, ((0, 0), (0, G - HIDDEN))),
    ], axis=0).astype(jnp.float32)                        # (39, G)

    vmem = lambda: pl.BlockSpec(memory_space=pltpu.MemorySpace.VMEM)
    # NOTE(v7x): only after growing B to >= 8 per core would a leading
    # "parallel" batch grid axis (2nd TensorCore) pay off; at B=2 a single
    # block with no grid is strictly cheaper on v5e/v6e/v7x alike.
    return pl.pallas_call(
        net_kernel,
        out_shape=jax.ShapeDtypeStruct((B, HIDDEN), jnp.float32),
        in_specs=[vmem(), vmem()],
        out_specs=vmem(),
    )(x_tm, params)


def reference_forward(x, w_ih, w_hh, b, w_lin, b_lin):
    """Plain-JAX reference with the PyTorch module's math (sanity check)."""
    B, T, _ = x.shape
    H = HIDDEN
    seq = [x[:, t, :] for t in range(T)]
    for l in range(NUM_LAYERS):
        h = jnp.zeros((B, H), jnp.float32)
        c = jnp.zeros((B, H), jnp.float32)
        outs = []
        for t in range(T):
            gates = seq[t] @ w_ih[l] + h @ w_hh[l] + b[l]
            i_g = _sigmoid_exact(gates[:, 0 * H:1 * H])
            f_g = _sigmoid_exact(gates[:, 1 * H:2 * H])
            g_g = jnp.tanh(gates[:, 2 * H:3 * H])
            o_g = _sigmoid_exact(gates[:, 3 * H:4 * H])
            c = f_g * c + i_g * g_g
            h = o_g * jnp.tanh(c)
            outs.append(h)
        seq = outs
    lin = seq[-1] @ w_lin + b_lin
    return jnp.maximum((1.0 + lin) * x[:, -1, :], 0.0)


if __name__ == "__main__":
    key = jax.random.PRNGKey(0)
    ks = jax.random.split(key, 8)
    scale = 1.0 / (HIDDEN ** 0.5)   # PyTorch-style uniform(-1/sqrt(H), 1/sqrt(H))
    u = lambda kk, shape: jax.random.uniform(kk, shape, jnp.float32, -scale, scale)

    # Deterministic synthetic parameters (shapes from nn.LSTM(3, 3, 5) + nn.Linear(3, 3)).
    # input_size == hidden_size == 3, so every layer's w_ih has the same shape.
    w_ih = u(ks[0], (NUM_LAYERS, INPUT, 4 * HIDDEN))     # transposed weight_ih_l{k}
    w_hh = u(ks[1], (NUM_LAYERS, HIDDEN, 4 * HIDDEN))    # transposed weight_hh_l{k}
    b_lstm = (u(ks[2], (NUM_LAYERS, 1, 4 * HIDDEN))
              + u(ks[3], (NUM_LAYERS, 1, 4 * HIDDEN)))   # b_ih + b_hh folded together
    w_lin = u(ks[4], (HIDDEN, HIDDEN))                   # transposed Linear.weight
    b_lin = u(ks[5], (1, HIDDEN))

    x = jax.random.normal(ks[6], (BATCH, SEQ, INPUT), jnp.float32)

    y = net_forward(x, w_ih, w_hh, b_lstm, w_lin, b_lin)
    jax.block_until_ready(y)

    y_ref = reference_forward(x, w_ih, w_hh, b_lstm, w_lin, b_lin)
    assert y.shape == (BATCH, HIDDEN)
    # Tolerance covers float32 reassociation (VPU FMAs vs. reference dots) and
    # the sigmoid-as-tanh identity (mathematically exact, ULP-level diffs).
    assert jnp.allclose(y, y_ref, atol=1e-4, rtol=1e-4), (y, y_ref)

    print("KERNEL_OK")
</pallas_src>

<mosaic_0001>
module attributes {stable_mosaic.version = 11 : i64} {
  func.func @net_kernel(%arg0: memref<16x3xf32, #tpu.memory_space<vmem>>, %arg1: memref<39x12xf32, #tpu.memory_space<vmem>>, %arg2: memref<2x3xf32, #tpu.memory_space<vmem>>) attributes {dimension_semantics = [], scalar_prefetch = 0 : i64, scratch_operands = 0 : i64, tpu.core_type = #tpu.core_type<tc>} {
    %c0 = arith.constant 0 : index
    %c0_0 = arith.constant 0 : index
    %0 = vector.load %arg0[%c0, %c0_0] : memref<16x3xf32, #tpu.memory_space<vmem>>, vector<16x3xf32>
    %c0_1 = arith.constant 0 : index
    %c0_2 = arith.constant 0 : index
    %1 = vector.load %arg1[%c0_1, %c0_2] : memref<39x12xf32, #tpu.memory_space<vmem>>, vector<39x12xf32>
    %2 = vector.extract_strided_slice %1 {offsets = [30, 0], sizes = [1, 12], strides = [1, 1]} : vector<39x12xf32> to vector<1x12xf32>
    %3 = vector.shape_cast %2 : vector<1x12xf32> to vector<1x12xf32>
    %4 = vector.broadcast %3 : vector<1x12xf32> to vector<16x12xf32>
    %5 = vector.extract_strided_slice %0 {offsets = [0, 0], sizes = [16, 1], strides = [1, 1]} : vector<16x3xf32> to vector<16x1xf32>
    %6 = vector.extract_strided_slice %1 {offsets = [0, 0], sizes = [1, 12], strides = [1, 1]} : vector<39x12xf32> to vector<1x12xf32>
    %7 = vector.shape_cast %6 : vector<1x12xf32> to vector<1x12xf32>
    %8 = vector.broadcast %7 : vector<1x12xf32> to vector<16x12xf32>
    %9 = vector.broadcast %5 : vector<16x1xf32> to vector<16x12xf32>
    %10 = arith.mulf %9, %8 : vector<16x12xf32>
    %11 = arith.addf %4, %10 : vector<16x12xf32>
    %12 = vector.extract_strided_slice %0 {offsets = [0, 1], sizes = [16, 1], strides = [1, 1]} : vector<16x3xf32> to vector<16x1xf32>
    %13 = vector.extract_strided_slice %1 {offsets = [1, 0], sizes = [1, 12], strides = [1, 1]} : vector<39x12xf32> to vector<1x12xf32>
    %14 = vector.shape_cast %13 : vector<1x12xf32> to vector<1x12xf32>
    %15 = vector.broadcast %14 : vector<1x12xf32> to vector<16x12xf32>
    %16 = vector.broadcast %12 : vector<16x1xf32> to vector<16x12xf32>
    %17 = arith.mulf %16, %15 : vector<16x12xf32>
    %18 = arith.addf %11, %17 : vector<16x12xf32>
    %19 = vector.extract_strided_slice %0 {offsets = [0, 2], sizes = [16, 1], strides = [1, 1]} : vector<16x3xf32> to vector<16x1xf32>
    %20 = vector.extract_strided_slice %1 {offsets = [2, 0], sizes = [1, 12], strides = [1, 1]} : vector<39x12xf32> to vector<1x12xf32>
    %21 = vector.shape_cast %20 : vector<1x12xf32> to vector<1x12xf32>
    %22 = vector.broadcast %21 : vector<1x12xf32> to vector<16x12xf32>
    %23 = vector.broadcast %19 : vector<16x1xf32> to vector<16x12xf32>
    %24 = arith.mulf %23, %22 : vector<16x12xf32>
    %25 = arith.addf %18, %24 : vector<16x12xf32>
    %26 = vector.extract_strided_slice %1 {offsets = [15, 0], sizes = [1, 12], strides = [1, 1]} : vector<39x12xf32> to vector<1x12xf32>
    %27 = vector.shape_cast %26 : vector<1x12xf32> to vector<1x12xf32>
    %28 = vector.broadcast %27 : vector<1x12xf32> to vector<2x12xf32>
    %29 = vector.extract_strided_slice %1 {offsets = [16, 0], sizes = [1, 12], strides = [1, 1]} : vector<39x12xf32> to vector<1x12xf32>
    %30 = vector.shape_cast %29 : vector<1x12xf32> to vector<1x12xf32>
    %31 = vector.broadcast %30 : vector<1x12xf32> to vector<2x12xf32>
    %32 = vector.extract_strided_slice %1 {offsets = [17, 0], sizes = [1, 12], strides = [1, 1]} : vector<39x12xf32> to vector<1x12xf32>
    %33 = vector.shape_cast %32 : vector<1x12xf32> to vector<1x12xf32>
    %34 = vector.broadcast %33 : vector<1x12xf32> to vector<2x12xf32>
    %35 = vector.extract_strided_slice %1 {offsets = [18, 0], sizes = [1, 12], strides = [1, 1]} : vector<39x12xf32> to vector<1x12xf32>
    %36 = vector.shape_cast %35 : vector<1x12xf32> to vector<1x12xf32>
    %37 = vector.broadcast %36 : vector<1x12xf32> to vector<2x12xf32>
    %38 = vector.extract_strided_slice %1 {offsets = [19, 0], sizes = [1, 12], strides = [1, 1]} : vector<39x12xf32> to vector<1x12xf32>
    %39 = vector.shape_cast %38 : vector<1x12xf32> to vector<1x12xf32>
    %40 = vector.broadcast %39 : vector<1x12xf32> to vector<2x12xf32>
    %41 = vector.extract_strided_slice %1 {offsets = [20, 0], sizes = [1, 12], strides = [1, 1]} : vector<39x12xf32> to vector<1x12xf32>
    %42 = vector.shape_cast %41 : vector<1x12xf32> to vector<1x12xf32>
    %43 = vector.broadcast %42 : vector<1x12xf32> to vector<2x12xf32>
    %44 = vector.extract_strided_slice %1 {offsets = [21, 0], sizes = [1, 12], strides = [1, 1]} : vector<39x12xf32> to vector<1x12xf32>
    %45 = vector.shape_cast %44 : vector<1x12xf32> to vector<1x12xf32>
    %46 = vector.broadcast %45 : vector<1x12xf32> to vector<2x12xf32>
    %47 = vector.extract_strided_slice %1 {offsets = [22, 0], sizes = [1, 12], strides = [1, 1]} : vector<39x12xf32> to vector<1x12xf32>
    %48 = vector.shape_cast %47 : vector<1x12xf32> to vector<1x12xf32>
    %49 = vector.broadcast %48 : vector<1x12xf32> to vector<2x12xf32>
    %50 = vector.extract_strided_slice %1 {offsets = [23, 0], sizes = [1, 12], strides = [1, 1]} : vector<39x12xf32> to vector<1x12xf32>
    %51 = vector.shape_cast %50 : vector<1x12xf32> to vector<1x12xf32>
    %52 = vector.broadcast %51 : vector<1x12xf32> to vector<2x12xf32>
    %53 = vector.extract_strided_slice %1 {offsets = [24, 0], sizes = [1, 12], strides = [1, 1]} : vector<39x12xf32> to vector<1x12xf32>
    %54 = vector.shape_cast %53 : vector<1x12xf32> to vector<1x12xf32>
    %55 = vector.broadcast %54 : vector<1x12xf32> to vector<2x12xf32>
    %56 = vector.extract_strided_slice %1 {offsets = [25, 0], sizes = [1, 12], strides = [1, 1]} : vector<39x12xf32> to vector<1x12xf32>
    %57 = vector.shape_cast %56 : vector<1x12xf32> to vector<1x12xf32>
    %58 = vector.broadcast %57 : vector<1x12xf32> to vector<2x12xf32>
    %59 = vector.extract_strided_slice %1 {offsets = [26, 0], sizes = [1, 12], strides = [1, 1]} : vector<39x12xf32> to vector<1x12xf32>
    %60 = vector.shape_cast %59 : vector<1x12xf32> to vector<1x12xf32>
    %61 = vector.broadcast %60 : vector<1x12xf32> to vector<2x12xf32>
    %62 = vector.extract_strided_slice %1 {offsets = [27, 0], sizes = [1, 12], strides = [1, 1]} : vector<39x12xf32> to vector<1x12xf32>
    %63 = vector.shape_cast %62 : vector<1x12xf32> to vector<1x12xf32>
    %64 = vector.broadcast %63 : vector<1x12xf32> to vector<2x12xf32>
    %65 = vector.extract_strided_slice %1 {offsets = [28, 0], sizes = [1, 12], strides = [1, 1]} : vector<39x12xf32> to vector<1x12xf32>
    %66 = vector.shape_cast %65 : vector<1x12xf32> to vector<1x12xf32>
    %67 = vector.broadcast %66 : vector<1x12xf32> to vector<2x12xf32>
    %68 = vector.extract_strided_slice %1 {offsets = [29, 0], sizes = [1, 12], strides = [1, 1]} : vector<39x12xf32> to vector<1x12xf32>
    %69 = vector.shape_cast %68 : vector<1x12xf32> to vector<1x12xf32>
    %70 = vector.broadcast %69 : vector<1x12xf32> to vector<2x12xf32>
    %71 = vector.extract_strided_slice %1 {offsets = [3, 0], sizes = [1, 12], strides = [1, 1]} : vector<39x12xf32> to vector<1x12xf32>
    %72 = vector.shape_cast %71 : vector<1x12xf32> to vector<1x12xf32>
    %73 = vector.broadcast %72 : vector<1x12xf32> to vector<2x12xf32>
    %74 = vector.extract_strided_slice %1 {offsets = [4, 0], sizes = [1, 12], strides = [1, 1]} : vector<39x12xf32> to vector<1x12xf32>
    %75 = vector.shape_cast %74 : vector<1x12xf32> to vector<1x12xf32>
    %76 = vector.broadcast %75 : vector<1x12xf32> to vector<2x12xf32>
    %77 = vector.extract_strided_slice %1 {offsets = [5, 0], sizes = [1, 12], strides = [1, 1]} : vector<39x12xf32> to vector<1x12xf32>
    %78 = vector.shape_cast %77 : vector<1x12xf32> to vector<1x12xf32>
    %79 = vector.broadcast %78 : vector<1x12xf32> to vector<2x12xf32>
    %80 = vector.extract_strided_slice %1 {offsets = [6, 0], sizes = [1, 12], strides = [1, 1]} : vector<39x12xf32> to vector<1x12xf32>
    %81 = vector.shape_cast %80 : vector<1x12xf32> to vector<1x12xf32>
    %82 = vector.broadcast %81 : vector<1x12xf32> to vector<2x12xf32>
    %83 = vector.extract_strided_slice %1 {offsets = [7, 0], sizes = [1, 12], strides = [1, 1]} : vector<39x12xf32> to vector<1x12xf32>
    %84 = vector.shape_cast %83 : vector<1x12xf32> to vector<1x12xf32>
    %85 = vector.broadcast %84 : vector<1x12xf32> to vector<2x12xf32>
    %86 = vector.extract_strided_slice %1 {offsets = [8, 0], sizes = [1, 12], strides = [1, 1]} : vector<39x12xf32> to vector<1x12xf32>
    %87 = vector.shape_cast %86 : vector<1x12xf32> to vector<1x12xf32>
    %88 = vector.broadcast %87 : vector<1x12xf32> to vector<2x12xf32>
    %89 = vector.extract_strided_slice %1 {offsets = [9, 0], sizes = [1, 12], strides = [1, 1]} : vector<39x12xf32> to vector<1x12xf32>
    %90 = vector.shape_cast %89 : vector<1x12xf32> to vector<1x12xf32>
    %91 = vector.broadcast %90 : vector<1x12xf32> to vector<2x12xf32>
    %92 = vector.extract_strided_slice %1 {offsets = [10, 0], sizes = [1, 12], strides = [1, 1]} : vector<39x12xf32> to vector<1x12xf32>
    %93 = vector.shape_cast %92 : vector<1x12xf32> to vector<1x12xf32>
    %94 = vector.broadcast %93 : vector<1x12xf32> to vector<2x12xf32>
    %95 = vector.extract_strided_slice %1 {offsets = [11, 0], sizes = [1, 12], strides = [1, 1]} : vector<39x12xf32> to vector<1x12xf32>
    %96 = vector.shape_cast %95 : vector<1x12xf32> to vector<1x12xf32>
    %97 = vector.broadcast %96 : vector<1x12xf32> to vector<2x12xf32>
    %98 = vector.extract_strided_slice %1 {offsets = [12, 0], sizes = [1, 12], strides = [1, 1]} : vector<39x12xf32> to vector<1x12xf32>
    %99 = vector.shape_cast %98 : vector<1x12xf32> to vector<1x12xf32>
    %100 = vector.broadcast %99 : vector<1x12xf32> to vector<2x12xf32>
    %101 = vector.extract_strided_slice %1 {offsets = [13, 0], sizes = [1, 12], strides = [1, 1]} : vector<39x12xf32> to vector<1x12xf32>
    %102 = vector.shape_cast %101 : vector<1x12xf32> to vector<1x12xf32>
    %103 = vector.broadcast %102 : vector<1x12xf32> to vector<2x12xf32>
    %104 = vector.extract_strided_slice %1 {offsets = [14, 0], sizes = [1, 12], strides = [1, 1]} : vector<39x12xf32> to vector<1x12xf32>
    %105 = vector.shape_cast %104 : vector<1x12xf32> to vector<1x12xf32>
    %106 = vector.broadcast %105 : vector<1x12xf32> to vector<2x12xf32>
    %107 = vector.extract_strided_slice %1 {offsets = [31, 0], sizes = [1, 12], strides = [1, 1]} : vector<39x12xf32> to vector<1x12xf32>
    %108 = vector.shape_cast %107 : vector<1x12xf32> to vector<1x12xf32>
    %109 = vector.broadcast %108 : vector<1x12xf32> to vector<2x12xf32>
    %110 = vector.extract_strided_slice %1 {offsets = [32, 0], sizes = [1, 12], strides = [1, 1]} : vector<39x12xf32> to vector<1x12xf32>
    %111 = vector.shape_cast %110 : vector<1x12xf32> to vector<1x12xf32>
    %112 = vector.broadcast %111 : vector<1x12xf32> to vector<2x12xf32>
    %113 = vector.extract_strided_slice %1 {offsets = [33, 0], sizes = [1, 12], strides = [1, 1]} : vector<39x12xf32> to vector<1x12xf32>
    %114 = vector.shape_cast %113 : vector<1x12xf32> to vector<1x12xf32>
    %115 = vector.broadcast %114 : vector<1x12xf32> to vector<2x12xf32>
    %116 = vector.extract_strided_slice %1 {offsets = [34, 0], sizes = [1, 12], strides = [1, 1]} : vector<39x12xf32> to vector<1x12xf32>
    %117 = vector.shape_cast %116 : vector<1x12xf32> to vector<1x12xf32>
    %118 = vector.broadcast %117 : vector<1x12xf32> to vector<2x12xf32>
    %cst = arith.constant 0.000000e+00 : f32
    %119 = vector.broadcast %cst : f32 to vector<2x3xf32>
    %cst_3 = arith.constant 0.000000e+00 : f32
    %120 = vector.broadcast %cst_3 : f32 to vector<2x3xf32>
    %cst_4 = arith.constant 0.000000e+00 : f32
    %121 = vector.broadcast %cst_4 : f32 to vector<2x3xf32>
    %cst_5 = arith.constant 0.000000e+00 : f32
    %122 = vector.broadcast %cst_5 : f32 to vector<2x3xf32>
    %cst_6 = arith.constant 0.000000e+00 : f32
    %123 = vector.broadcast %cst_6 : f32 to vector<2x3xf32>
    %cst_7 = arith.constant 0.000000e+00 : f32
    %124 = vector.broadcast %cst_7 : f32 to vector<2x3xf32>
    %cst_8 = arith.constant 0.000000e+00 : f32
    %125 = vector.broadcast %cst_8 : f32 to vector<2x3xf32>
    %cst_9 = arith.constant 0.000000e+00 : f32
    %126 = vector.broadcast %cst_9 : f32 to vector<2x3xf32>
    %cst_10 = arith.constant 0.000000e+00 : f32
    %127 = vector.broadcast %cst_10 : f32 to vector<2x3xf32>
    %cst_11 = arith.constant 0.000000e+00 : f32
    %128 = vector.broadcast %cst_11 : f32 to vector<2x3xf32>
    %129 = vector.extract_strided_slice %25 {offsets = [0, 0], sizes = [2, 12], strides = [1, 1]} : vector<16x12xf32> to vector<2x12xf32>
    %130 = vector.extract_strided_slice %119 {offsets = [0, 0], sizes = [2, 1], strides = [1, 1]} : vector<2x3xf32> to vector<2x1xf32>
    %131 = vector.broadcast %130 : vector<2x1xf32> to vector<2x12xf32>
    %132 = arith.mulf %131, %28 : vector<2x12xf32>
    %133 = arith.addf %129, %132 : vector<2x12xf32>
    %134 = vector.extract_strided_slice %119 {offsets = [0, 1], sizes = [2, 1], strides = [1, 1]} : vector<2x3xf32> to vector<2x1xf32>
    %135 = vector.broadcast %134 : vector<2x1xf32> to vector<2x12xf32>
    %136 = arith.mulf %135, %31 : vector<2x12xf32>
    %137 = arith.addf %133, %136 : vector<2x12xf32>
    %138 = vector.extract_strided_slice %119 {offsets = [0, 2], sizes = [2, 1], strides = [1, 1]} : vector<2x3xf32> to vector<2x1xf32>
    %139 = vector.broadcast %138 : vector<2x1xf32> to vector<2x12xf32>
    %140 = arith.mulf %139, %34 : vector<2x12xf32>
    %141 = arith.addf %137, %140 : vector<2x12xf32>
    %cst_12 = arith.constant 5.000000e-01 : f32
    %142 = vector.broadcast %cst_12 : f32 to vector<2x12xf32>
    %143 = arith.mulf %142, %141 : vector<2x12xf32>
    %144 = math.tanh %143 : vector<2x12xf32>
    %cst_13 = arith.constant 1.000000e+00 : f32
    %145 = vector.broadcast %cst_13 : f32 to vector<2x12xf32>
    %146 = arith.addf %145, %144 : vector<2x12xf32>
    %cst_14 = arith.constant 5.000000e-01 : f32
    %147 = vector.broadcast %cst_14 : f32 to vector<2x12xf32>
    %148 = arith.mulf %147, %146 : vector<2x12xf32>
    %149 = math.tanh %141 : vector<2x12xf32>
    %150 = vector.extract_strided_slice %148 {offsets = [0, 0], sizes = [2, 3], strides = [1, 1]} : vector<2x12xf32> to vector<2x3xf32>
    %151 = vector.extract_strided_slice %148 {offsets = [0, 3], sizes = [2, 3], strides = [1, 1]} : vector<2x12xf32> to vector<2x3xf32>
    %152 = vector.extract_strided_slice %149 {offsets = [0, 6], sizes = [2, 3], strides = [1, 1]} : vector<2x12xf32> to vector<2x3xf32>
    %153 = vector.extract_strided_slice %148 {offsets = [0, 9], sizes = [2, 3], strides = [1, 1]} : vector<2x12xf32> to vector<2x3xf32>
    %154 = arith.mulf %151, %124 : vector<2x3xf32>
    %155 = arith.mulf %150, %152 : vector<2x3xf32>
    %156 = arith.addf %154, %155 : vector<2x3xf32>
    %157 = math.tanh %156 : vector<2x3xf32>
    %158 = arith.mulf %153, %157 : vector<2x3xf32>
    %159 = vector.extract_strided_slice %25 {offsets = [2, 0], sizes = [2, 12], strides = [1, 1]} : vector<16x12xf32> to vector<2x12xf32>
    %160 = vector.extract_strided_slice %158 {offsets = [0, 0], sizes = [2, 1], strides = [1, 1]} : vector<2x3xf32> to vector<2x1xf32>
    %161 = vector.broadcast %160 : vector<2x1xf32> to vector<2x12xf32>
    %162 = arith.mulf %161, %28 : vector<2x12xf32>
    %163 = arith.addf %159, %162 : vector<2x12xf32>
    %164 = vector.extract_strided_slice %158 {offsets = [0, 1], sizes = [2, 1], strides = [1, 1]} : vector<2x3xf32> to vector<2x1xf32>
    %165 = vector.broadcast %164 : vector<2x1xf32> to vector<2x12xf32>
    %166 = arith.mulf %165, %31 : vector<2x12xf32>
    %167 = arith.addf %163, %166 : vector<2x12xf32>
    %168 = vector.extract_strided_slice %158 {offsets = [0, 2], sizes = [2, 1], strides = [1, 1]} : vector<2x3xf32> to vector<2x1xf32>
    %169 = vector.broadcast %168 : vector<2x1xf32> to vector<2x12xf32>
    %170 = arith.mulf %169, %34 : vector<2x12xf32>
    %171 = arith.addf %167, %170 : vector<2x12xf32>
    %cst_15 = arith.constant 5.000000e-01 : f32
    %172 = vector.broadcast %cst_15 : f32 to vector<2x12xf32>
    %173 = arith.mulf %172, %171 : vector<2x12xf32>
    %174 = math.tanh %173 : vector<2x12xf32>
    %cst_16 = arith.constant 1.000000e+00 : f32
    %175 = vector.broadcast %cst_16 : f32 to vector<2x12xf32>
    %176 = arith.addf %175, %174 : vector<2x12xf32>
    %cst_17 = arith.constant 5.000000e-01 : f32
    %177 = vector.broadcast %cst_17 : f32 to vector<2x12xf32>
    %178 = arith.mulf %177, %176 : vector<2x12xf32>
    %179 = math.tanh %171 : vector<2x12xf32>
    %180 = vector.extract_strided_slice %178 {offsets = [0, 0], sizes = [2, 3], strides = [1, 1]} : vector<2x12xf32> to vector<2x3xf32>
    %181 = vector.extract_strided_slice %178 {offsets = [0, 3], sizes = [2, 3], strides = [1, 1]} : vector<2x12xf32> to vector<2x3xf32>
    %182 = vector.extract_strided_slice %179 {offsets = [0, 6], sizes = [2, 3], strides = [1, 1]} : vector<2x12xf32> to vector<2x3xf32>
    %183 = vector.extract_strided_slice %178 {offsets = [0, 9], sizes = [2, 3], strides = [1, 1]} : vector<2x12xf32> to vector<2x3xf32>
    %184 = arith.mulf %181, %156 : vector<2x3xf32>
    %185 = arith.mulf %180, %182 : vector<2x3xf32>
    %186 = arith.addf %184, %185 : vector<2x3xf32>
    %187 = math.tanh %186 : vector<2x3xf32>
    %188 = arith.mulf %183, %187 : vector<2x3xf32>
    %189 = vector.extract_strided_slice %158 {offsets = [0, 0], sizes = [2, 1], strides = [1, 1]} : vector<2x3xf32> to vector<2x1xf32>
    %190 = vector.broadcast %189 : vector<2x1xf32> to vector<2x12xf32>
    %191 = arith.mulf %190, %73 : vector<2x12xf32>
    %192 = arith.addf %109, %191 : vector<2x12xf32>
    %193 = vector.extract_strided_slice %158 {offsets = [0, 1], sizes = [2, 1], strides = [1, 1]} : vector<2x3xf32> to vector<2x1xf32>
    %194 = vector.broadcast %193 : vector<2x1xf32> to vector<2x12xf32>
    %195 = arith.mulf %194, %76 : vector<2x12xf32>
    %196 = arith.addf %192, %195 : vector<2x12xf32>
    %197 = vector.extract_strided_slice %158 {offsets = [0, 2], sizes = [2, 1], strides = [1, 1]} : vector<2x3xf32> to vector<2x1xf32>
    %198 = vector.broadcast %197 : vector<2x1xf32> to vector<2x12xf32>
    %199 = arith.mulf %198, %79 : vector<2x12xf32>
    %200 = arith.addf %196, %199 : vector<2x12xf32>
    %201 = vector.extract_strided_slice %120 {offsets = [0, 0], sizes = [2, 1], strides = [1, 1]} : vector<2x3xf32> to vector<2x1xf32>
    %202 = vector.broadcast %201 : vector<2x1xf32> to vector<2x12xf32>
    %203 = arith.mulf %202, %37 : vector<2x12xf32>
    %204 = arith.addf %200, %203 : vector<2x12xf32>
    %205 = vector.extract_strided_slice %120 {offsets = [0, 1], sizes = [2, 1], strides = [1, 1]} : vector<2x3xf32> to vector<2x1xf32>
    %206 = vector.broadcast %205 : vector<2x1xf32> to vector<2x12xf32>
    %207 = arith.mulf %206, %40 : vector<2x12xf32>
    %208 = arith.addf %204, %207 : vector<2x12xf32>
    %209 = vector.extract_strided_slice %120 {offsets = [0, 2], sizes = [2, 1], strides = [1, 1]} : vector<2x3xf32> to vector<2x1xf32>
    %210 = vector.broadcast %209 : vector<2x1xf32> to vector<2x12xf32>
    %211 = arith.mulf %210, %43 : vector<2x12xf32>
    %212 = arith.addf %208, %211 : vector<2x12xf32>
    %cst_18 = arith.constant 5.000000e-01 : f32
    %213 = vector.broadcast %cst_18 : f32 to vector<2x12xf32>
    %214 = arith.mulf %213, %212 : vector<2x12xf32>
    %215 = math.tanh %214 : vector<2x12xf32>
    %cst_19 = arith.constant 1.000000e+00 : f32
    %216 = vector.broadcast %cst_19 : f32 to vector<2x12xf32>
    %217 = arith.addf %216, %215 : vector<2x12xf32>
    %cst_20 = arith.constant 5.000000e-01 : f32
    %218 = vector.broadcast %cst_20 : f32 to vector<2x12xf32>
    %219 = arith.mulf %218, %217 : vector<2x12xf32>
    %220 = math.tanh %212 : vector<2x12xf32>
    %221 = vector.extract_strided_slice %219 {offsets = [0, 0], sizes = [2, 3], strides = [1, 1]} : vector<2x12xf32> to vector<2x3xf32>
    %222 = vector.extract_strided_slice %219 {offsets = [0, 3], sizes = [2, 3], strides = [1, 1]} : vector<2x12xf32> to vector<2x3xf32>
    %223 = vector.extract_strided_slice %220 {offsets = [0, 6], sizes = [2, 3], strides = [1, 1]} : vector<2x12xf32> to vector<2x3xf32>
    %224 = vector.extract_strided_slice %219 {offsets = [0, 9], sizes = [2, 3], strides = [1, 1]} : vector<2x12xf32> to vector<2x3xf32>
    %225 = arith.mulf %222, %125 : vector<2x3xf32>
    %226 = arith.mulf %221, %223 : vector<2x3xf32>
    %227 = arith.addf %225, %226 : vector<2x3xf32>
    %228 = math.tanh %227 : vector<2x3xf32>
    %229 = arith.mulf %224, %228 : vector<2x3xf32>
    %230 = vector.extract_strided_slice %25 {offsets = [4, 0], sizes = [2, 12], strides = [1, 1]} : vector<16x12xf32> to vector<2x12xf32>
    %231 = vector.extract_strided_slice %188 {offsets = [0, 0], sizes = [2, 1], strides = [1, 1]} : vector<2x3xf32> to vector<2x1xf32>
    %232 = vector.broadcast %231 : vector<2x1xf32> to vector<2x12xf32>
    %233 = arith.mulf %232, %28 : vector<2x12xf32>
    %234 = arith.addf %230, %233 : vector<2x12xf32>
    %235 = vector.extract_strided_slice %188 {offsets = [0, 1], sizes = [2, 1], strides = [1, 1]} : vector<2x3xf32> to vector<2x1xf32>
    %236 = vector.broadcast %235 : vector<2x1xf32> to vector<2x12xf32>
    %237 = arith.mulf %236, %31 : vector<2x12xf32>
    %238 = arith.addf %234, %237 : vector<2x12xf32>
    %239 = vector.extract_strided_slice %188 {offsets = [0, 2], sizes = [2, 1], strides = [1, 1]} : vector<2x3xf32> to vector<2x1xf32>
    %240 = vector.broadcast %239 : vector<2x1xf32> to vector<2x12xf32>
    %241 = arith.mulf %240, %34 : vector<2x12xf32>
    %242 = arith.addf %238, %241 : vector<2x12xf32>
    %cst_21 = arith.constant 5.000000e-01 : f32
    %243 = vector.broadcast %cst_21 : f32 to vector<2x12xf32>
    %244 = arith.mulf %243, %242 : vector<2x12xf32>
    %245 = math.tanh %244 : vector<2x12xf32>
    %cst_22 = arith.constant 1.000000e+00 : f32
    %246 = vector.broadcast %cst_22 : f32 to vector<2x12xf32>
    %247 = arith.addf %246, %245 : vector<2x12xf32>
    %cst_23 = arith.constant 5.000000e-01 : f32
    %248 = vector.broadcast %cst_23 : f32 to vector<2x12xf32>
    %249 = arith.mulf %248, %247 : vector<2x12xf32>
    %250 = math.tanh %242 : vector<2x12xf32>
    %251 = vector.extract_strided_slice %249 {offsets = [0, 0], sizes = [2, 3], strides = [1, 1]} : vector<2x12xf32> to vector<2x3xf32>
    %252 = vector.extract_strided_slice %249 {offsets = [0, 3], sizes = [2, 3], strides = [1, 1]} : vector<2x12xf32> to vector<2x3xf32>
    %253 = vector.extract_strided_slice %250 {offsets = [0, 6], sizes = [2, 3], strides = [1, 1]} : vector<2x12xf32> to vector<2x3xf32>
    %254 = vector.extract_strided_slice %249 {offsets = [0, 9], sizes = [2, 3], strides = [1, 1]} : vector<2x12xf32> to vector<2x3xf32>
    %255 = arith.mulf %252, %186 : vector<2x3xf32>
    %256 = arith.mulf %251, %253 : vector<2x3xf32>
    %257 = arith.addf %255, %256 : vector<2x3xf32>
    %258 = math.tanh %257 : vector<2x3xf32>
    %259 = arith.mulf %254, %258 : vector<2x3xf32>
    %260 = vector.extract_strided_slice %188 {offsets = [0, 0], sizes = [2, 1], strides = [1, 1]} : vector<2x3xf32> to vector<2x1xf32>
    %261 = vector.broadcast %260 : vector<2x1xf32> to vector<2x12xf32>
    %262 = arith.mulf %261, %73 : vector<2x12xf32>
    %263 = arith.addf %109, %262 : vector<2x12xf32>
    %264 = vector.extract_strided_slice %188 {offsets = [0, 1], sizes = [2, 1], strides = [1, 1]} : vector<2x3xf32> to vector<2x1xf32>
    %265 = vector.broadcast %264 : vector<2x1xf32> to vector<2x12xf32>
    %266 = arith.mulf %265, %76 : vector<2x12xf32>
    %267 = arith.addf %263, %266 : vector<2x12xf32>
    %268 = vector.extract_strided_slice %188 {offsets = [0, 2], sizes = [2, 1], strides = [1, 1]} : vector<2x3xf32> to vector<2x1xf32>
    %269 = vector.broadcast %268 : vector<2x1xf32> to vector<2x12xf32>
    %270 = arith.mulf %269, %79 : vector<2x12xf32>
    %271 = arith.addf %267, %270 : vector<2x12xf32>
    %272 = vector.extract_strided_slice %229 {offsets = [0, 0], sizes = [2, 1], strides = [1, 1]} : vector<2x3xf32> to vector<2x1xf32>
    %273 = vector.broadcast %272 : vector<2x1xf32> to vector<2x12xf32>
    %274 = arith.mulf %273, %37 : vector<2x12xf32>
    %275 = arith.addf %271, %274 : vector<2x12xf32>
    %276 = vector.extract_strided_slice %229 {offsets = [0, 1], sizes = [2, 1], strides = [1, 1]} : vector<2x3xf32> to vector<2x1xf32>
    %277 = vector.broadcast %276 : vector<2x1xf32> to vector<2x12xf32>
    %278 = arith.mulf %277, %40 : vector<2x12xf32>
    %279 = arith.addf %275, %278 : vector<2x12xf32>
    %280 = vector.extract_strided_slice %229 {offsets = [0, 2], sizes = [2, 1], strides = [1, 1]} : vector<2x3xf32> to vector<2x1xf32>
    %281 = vector.broadcast %280 : vector<2x1xf32> to vector<2x12xf32>
    %282 = arith.mulf %281, %43 : vector<2x12xf32>
    %283 = arith.addf %279, %282 : vector<2x12xf32>
    %cst_24 = arith.constant 5.000000e-01 : f32
    %284 = vector.broadcast %cst_24 : f32 to vector<2x12xf32>
    %285 = arith.mulf %284, %283 : vector<2x12xf32>
    %286 = math.tanh %285 : vector<2x12xf32>
    %cst_25 = arith.constant 1.000000e+00 : f32
    %287 = vector.broadcast %cst_25 : f32 to vector<2x12xf32>
    %288 = arith.addf %287, %286 : vector<2x12xf32>
    %cst_26 = arith.constant 5.000000e-01 : f32
    %289 = vector.broadcast %cst_26 : f32 to vector<2x12xf32>
    %290 = arith.mulf %289, %288 : vector<2x12xf32>
    %291 = math.tanh %283 : vector<2x12xf32>
    %292 = vector.extract_strided_slice %290 {offsets = [0, 0], sizes = [2, 3], strides = [1, 1]} : vector<2x12xf32> to vector<2x3xf32>
    %293 = vector.extract_strided_slice %290 {offsets = [0, 3], sizes = [2, 3], strides = [1, 1]} : vector<2x12xf32> to vector<2x3xf32>
    %294 = vector.extract_strided_slice %291 {offsets = [0, 6], sizes = [2, 3], strides = [1, 1]} : vector<2x12xf32> to vector<2x3xf32>
    %295 = vector.extract_strided_slice %290 {offsets = [0, 9], sizes = [2, 3], strides = [1, 1]} : vector<2x12xf32> to vector<2x3xf32>
    %296 = arith.mulf %293, %227 : vector<2x3xf32>
    %297 = arith.mulf %292, %294 : vector<2x3xf32>
    %298 = arith.addf %296, %297 : vector<2x3xf32>
    %299 = math.tanh %298 : vector<2x3xf32>
    %300 = arith.mulf %295, %299 : vector<2x3xf32>
    %301 = vector.extract_strided_slice %229 {offsets = [0, 0], sizes = [2, 1], strides = [1, 1]} : vector<2x3xf32> to vector<2x1xf32>
    %302 = vector.broadcast %301 : vector<2x1xf32> to vector<2x12xf32>
    %303 = arith.mulf %302, %82 : vector<2x12xf32>
    %304 = arith.addf %112, %303 : vector<2x12xf32>
    %305 = vector.extract_strided_slice %229 {offsets = [0, 1], sizes = [2, 1], strides = [1, 1]} : vector<2x3xf32> to vector<2x1xf32>
    %306 = vector.broadcast %305 : vector<2x1xf32> to vector<2x12xf32>
    %307 = arith.mulf %306, %85 : vector<2x12xf32>
    %308 = arith.addf %304, %307 : vector<2x12xf32>
    %309 = vector.extract_strided_slice %229 {offsets = [0, 2], sizes = [2, 1], strides = [1, 1]} : vector<2x3xf32> to vector<2x1xf32>
    %310 = vector.broadcast %309 : vector<2x1xf32> to vector<2x12xf32>
    %311 = arith.mulf %310, %88 : vector<2x12xf32>
    %312 = arith.addf %308, %311 : vector<2x12xf32>
    %313 = vector.extract_strided_slice %121 {offsets = [0, 0], sizes = [2, 1], strides = [1, 1]} : vector<2x3xf32> to vector<2x1xf32>
    %314 = vector.broadcast %313 : vector<2x1xf32> to vector<2x12xf32>
    %315 = arith.mulf %314, %46 : vector<2x12xf32>
    %316 = arith.addf %312, %315 : vector<2x12xf32>
    %317 = vector.extract_strided_slice %121 {offsets = [0, 1], sizes = [2, 1], strides = [1, 1]} : vector<2x3xf32> to vector<2x1xf32>
    %318 = vector.broadcast %317 : vector<2x1xf32> to vector<2x12xf32>
    %319 = arith.mulf %318, %49 : vector<2x12xf32>
    %320 = arith.addf %316, %319 : vector<2x12xf32>
    %321 = vector.extract_strided_slice %121 {offsets = [0, 2], sizes = [2, 1], strides = [1, 1]} : vector<2x3xf32> to vector<2x1xf32>
    %322 = vector.broadcast %321 : vector<2x1xf32> to vector<2x12xf32>
    %323 = arith.mulf %322, %52 : vector<2x12xf32>
    %324 = arith.addf %320, %323 : vector<2x12xf32>
    %cst_27 = arith.constant 5.000000e-01 : f32
    %325 = vector.broadcast %cst_27 : f32 to vector<2x12xf32>
    %326 = arith.mulf %325, %324 : vector<2x12xf32>
    %327 = math.tanh %326 : vector<2x12xf32>
    %cst_28 = arith.constant 1.000000e+00 : f32
    %328 = vector.broadcast %cst_28 : f32 to vector<2x12xf32>
    %329 = arith.addf %328, %327 : vector<2x12xf32>
    %cst_29 = arith.constant 5.000000e-01 : f32
    %330 = vector.broadcast %cst_29 : f32 to vector<2x12xf32>
    %331 = arith.mulf %330, %329 : vector<2x12xf32>
    %332 = math.tanh %324 : vector<2x12xf32>
    %333 = vector.extract_strided_slice %331 {offsets = [0, 0], sizes = [2, 3], strides = [1, 1]} : vector<2x12xf32> to vector<2x3xf32>
    %334 = vector.extract_strided_slice %331 {offsets = [0, 3], sizes = [2, 3], strides = [1, 1]} : vector<2x12xf32> to vector<2x3xf32>
    %335 = vector.extract_strided_slice %332 {offsets = [0, 6], sizes = [2, 3], strides = [1, 1]} : vector<2x12xf32> to vector<2x3xf32>
    %336 = vector.extract_strided_slice %331 {offsets = [0, 9], sizes = [2, 3], strides = [1, 1]} : vector<2x12xf32> to vector<2x3xf32>
    %337 = arith.mulf %334, %126 : vector<2x3xf32>
    %338 = arith.mulf %333, %335 : vector<2x3xf32>
    %339 = arith.addf %337, %338 : vector<2x3xf32>
    %340 = math.tanh %339 : vector<2x3xf32>
    %341 = arith.mulf %336, %340 : vector<2x3xf32>
    %342 = vector.extract_strided_slice %25 {offsets = [6, 0], sizes = [2, 12], strides = [1, 1]} : vector<16x12xf32> to vector<2x12xf32>
    %343 = vector.extract_strided_slice %259 {offsets = [0, 0], sizes = [2, 1], strides = [1, 1]} : vector<2x3xf32> to vector<2x1xf32>
    %344 = vector.broadcast %343 : vector<2x1xf32> to vector<2x12xf32>
    %345 = arith.mulf %344, %28 : vector<2x12xf32>
    %346 = arith.addf %342, %345 : vector<2x12xf32>
    %347 = vector.extract_strided_slice %259 {offsets = [0, 1], sizes = [2, 1], strides = [1, 1]} : vector<2x3xf32> to vector<2x1xf32>
    %348 = vector.broadcast %347 : vector<2x1xf32> to vector<2x12xf32>
    %349 = arith.mulf %348, %31 : vector<2x12xf32>
    %350 = arith.addf %346, %349 : vector<2x12xf32>
    %351 = vector.extract_strided_slice %259 {offsets = [0, 2], sizes = [2, 1], strides = [1, 1]} : vector<2x3xf32> to vector<2x1xf32>
    %352 = vector.broadcast %351 : vector<2x1xf32> to vector<2x12xf32>
    %353 = arith.mulf %352, %34 : vector<2x12xf32>
    %354 = arith.addf %350, %353 : vector<2x12xf32>
    %cst_30 = arith.constant 5.000000e-01 : f32
    %355 = vector.broadcast %cst_30 : f32 to vector<2x12xf32>
    %356 = arith.mulf %355, %354 : vector<2x12xf32>
    %357 = math.tanh %356 : vector<2x12xf32>
    %cst_31 = arith.constant 1.000000e+00 : f32
    %358 = vector.broadcast %cst_31 : f32 to vector<2x12xf32>
    %359 = arith.addf %358, %357 : vector<2x12xf32>
    %cst_32 = arith.constant 5.000000e-01 : f32
    %360 = vector.broadcast %cst_32 : f32 to vector<2x12xf32>
    %361 = arith.mulf %360, %359 : vector<2x12xf32>
    %362 = math.tanh %354 : vector<2x12xf32>
    %363 = vector.extract_strided_slice %361 {offsets = [0, 0], sizes = [2, 3], strides = [1, 1]} : vector<2x12xf32> to vector<2x3xf32>
    %364 = vector.extract_strided_slice %361 {offsets = [0, 3], sizes = [2, 3], strides = [1, 1]} : vector<2x12xf32> to vector<2x3xf32>
    %365 = vector.extract_strided_slice %362 {offsets = [0, 6], sizes = [2, 3], strides = [1, 1]} : vector<2x12xf32> to vector<2x3xf32>
    %366 = vector.extract_strided_slice %361 {offsets = [0, 9], sizes = [2, 3], strides = [1, 1]} : vector<2x12xf32> to vector<2x3xf32>
    %367 = arith.mulf %364, %257 : vector<2x3xf32>
    %368 = arith.mulf %363, %365 : vector<2x3xf32>
    %369 = arith.addf %367, %368 : vector<2x3xf32>
    %370 = math.tanh %369 : vector<2x3xf32>
    %371 = arith.mulf %366, %370 : vector<2x3xf32>
    %372 = vector.extract_strided_slice %259 {offsets = [0, 0], sizes = [2, 1], strides = [1, 1]} : vector<2x3xf32> to vector<2x1xf32>
    %373 = vector.broadcast %372 : vector<2x1xf32> to vector<2x12xf32>
    %374 = arith.mulf %373, %73 : vector<2x12xf32>
    %375 = arith.addf %109, %374 : vector<2x12xf32>
    %376 = vector.extract_strided_slice %259 {offsets = [0, 1], sizes = [2, 1], strides = [1, 1]} : vector<2x3xf32> to vector<2x1xf32>
    %377 = vector.broadcast %376 : vector<2x1xf32> to vector<2x12xf32>
    %378 = arith.mulf %377, %76 : vector<2x12xf32>
    %379 = arith.addf %375, %378 : vector<2x12xf32>
    %380 = vector.extract_strided_slice %259 {offsets = [0, 2], sizes = [2, 1], strides = [1, 1]} : vector<2x3xf32> to vector<2x1xf32>
    %381 = vector.broadcast %380 : vector<2x1xf32> to vector<2x12xf32>
    %382 = arith.mulf %381, %79 : vector<2x12xf32>
    %383 = arith.addf %379, %382 : vector<2x12xf32>
    %384 = vector.extract_strided_slice %300 {offsets = [0, 0], sizes = [2, 1], strides = [1, 1]} : vector<2x3xf32> to vector<2x1xf32>
    %385 = vector.broadcast %384 : vector<2x1xf32> to vector<2x12xf32>
    %386 = arith.mulf %385, %37 : vector<2x12xf32>
    %387 = arith.addf %383, %386 : vector<2x12xf32>
    %388 = vector.extract_strided_slice %300 {offsets = [0, 1], sizes = [2, 1], strides = [1, 1]} : vector<2x3xf32> to vector<2x1xf32>
    %389 = vector.broadcast %388 : vector<2x1xf32> to vector<2x12xf32>
    %390 = arith.mulf %389, %40 : vector<2x12xf32>
    %391 = arith.addf %387, %390 : vector<2x12xf32>
    %392 = vector.extract_strided_slice %300 {offsets = [0, 2], sizes = [2, 1], strides = [1, 1]} : vector<2x3xf32> to vector<2x1xf32>
    %393 = vector.broadcast %392 : vector<2x1xf32> to vector<2x12xf32>
    %394 = arith.mulf %393, %43 : vector<2x12xf32>
    %395 = arith.addf %391, %394 : vector<2x12xf32>
    %cst_33 = arith.constant 5.000000e-01 : f32
    %396 = vector.broadcast %cst_33 : f32 to vector<2x12xf32>
    %397 = arith.mulf %396, %395 : vector<2x12xf32>
    %398 = math.tanh %397 : vector<2x12xf32>
    %cst_34 = arith.constant 1.000000e+00 : f32
    %399 = vector.broadcast %cst_34 : f32 to vector<2x12xf32>
    %400 = arith.addf %399, %398 : vector<2x12xf32>
    %cst_35 = arith.constant 5.000000e-01 : f32
    %401 = vector.broadcast %cst_35 : f32 to vector<2x12xf32>
    %402 = arith.mulf %401, %400 : vector<2x12xf32>
    %403 = math.tanh %395 : vector<2x12xf32>
    %404 = vector.extract_strided_slice %402 {offsets = [0, 0], sizes = [2, 3], strides = [1, 1]} : vector<2x12xf32> to vector<2x3xf32>
    %405 = vector.extract_strided_slice %402 {offsets = [0, 3], sizes = [2, 3], strides = [1, 1]} : vector<2x12xf32> to vector<2x3xf32>
    %406 = vector.extract_strided_slice %403 {offsets = [0, 6], sizes = [2, 3], strides = [1, 1]} : vector<2x12xf32> to vector<2x3xf32>
    %407 = vector.extract_strided_slice %402 {offsets = [0, 9], sizes = [2, 3], strides = [1, 1]} : vector<2x12xf32> to vector<2x3xf32>
    %408 = arith.mulf %405, %298 : vector<2x3xf32>
    %409 = arith.mulf %404, %406 : vector<2x3xf32>
    %410 = arith.addf %408, %409 : vector<2x3xf32>
    %411 = math.tanh %410 : vector<2x3xf32>
    %412 = arith.mulf %407, %411 : vector<2x3xf32>
    %413 = vector.extract_strided_slice %300 {offsets = [0, 0], sizes = [2, 1], strides = [1, 1]} : vector<2x3xf32> to vector<2x1xf32>
    %414 = vector.broadcast %413 : vector<2x1xf32> to vector<2x12xf32>
    %415 = arith.mulf %414, %82 : vector<2x12xf32>
    %416 = arith.addf %112, %415 : vector<2x12xf32>
    %417 = vector.extract_strided_slice %300 {offsets = [0, 1], sizes = [2, 1], strides = [1, 1]} : vector<2x3xf32> to vector<2x1xf32>
    %418 = vector.broadcast %417 : vector<2x1xf32> to vector<2x12xf32>
    %419 = arith.mulf %418, %85 : vector<2x12xf32>
    %420 = arith.addf %416, %419 : vector<2x12xf32>
    %421 = vector.extract_strided_slice %300 {offsets = [0, 2], sizes = [2, 1], strides = [1, 1]} : vector<2x3xf32> to vector<2x1xf32>
    %422 = vector.broadcast %421 : vector<2x1xf32> to vector<2x12xf32>
    %423 = arith.mulf %422, %88 : vector<2x12xf32>
    %424 = arith.addf %420, %423 : vector<2x12xf32>
    %425 = vector.extract_strided_slice %341 {offsets = [0, 0], sizes = [2, 1], strides = [1, 1]} : vector<2x3xf32> to vector<2x1xf32>
    %426 = vector.broadcast %425 : vector<2x1xf32> to vector<2x12xf32>
    %427 = arith.mulf %426, %46 : vector<2x12xf32>
    %428 = arith.addf %424, %427 : vector<2x12xf32>
    %429 = vector.extract_strided_slice %341 {offsets = [0, 1], sizes = [2, 1], strides = [1, 1]} : vector<2x3xf32> to vector<2x1xf32>
    %430 = vector.broadcast %429 : vector<2x1xf32> to vector<2x12xf32>
    %431 = arith.mulf %430, %49 : vector<2x12xf32>
    %432 = arith.addf %428, %431 : vector<2x12xf32>
    %433 = vector.extract_strided_slice %341 {offsets = [0, 2], sizes = [2, 1], strides = [1, 1]} : vector<2x3xf32> to vector<2x1xf32>
    %434 = vector.broadcast %433 : vector<2x1xf32> to vector<2x12xf32>
    %435 = arith.mulf %434, %52 : vector<2x12xf32>
    %436 = arith.addf %432, %435 : vector<2x12xf32>
    %cst_36 = arith.constant 5.000000e-01 : f32
    %437 = vector.broadcast %cst_36 : f32 to vector<2x12xf32>
    %438 = arith.mulf %437, %436 : vector<2x12xf32>
    %439 = math.tanh %438 : vector<2x12xf32>
    %cst_37 = arith.constant 1.000000e+00 : f32
    %440 = vector.broadcast %cst_37 : f32 to vector<2x12xf32>
    %441 = arith.addf %440, %439 : vector<2x12xf32>
    %cst_38 = arith.constant 5.000000e-01 : f32
    %442 = vector.broadcast %cst_38 : f32 to vector<2x12xf32>
    %443 = arith.mulf %442, %441 : vector<2x12xf32>
    %444 = math.tanh %436 : vector<2x12xf32>
    %445 = vector.extract_strided_slice %443 {offsets = [0, 0], sizes = [2, 3], strides = [1, 1]} : vector<2x12xf32> to vector<2x3xf32>
    %446 = vector.extract_strided_slice %443 {offsets = [0, 3], sizes = [2, 3], strides = [1, 1]} : vector<2x12xf32> to vector<2x3xf32>
    %447 = vector.extract_strided_slice %444 {offsets = [0, 6], sizes = [2, 3], strides = [1, 1]} : vector<2x12xf32> to vector<2x3xf32>
    %448 = vector.extract_strided_slice %443 {offsets = [0, 9], sizes = [2, 3], strides = [1, 1]} : vector<2x12xf32> to vector<2x3xf32>
    %449 = arith.mulf %446, %339 : vector<2x3xf32>
    %450 = arith.mulf %445, %447 : vector<2x3xf32>
    %451 = arith.addf %449, %450 : vector<2x3xf32>
    %452 = math.tanh %451 : vector<2x3xf32>
    %453 = arith.mulf %448, %452 : vector<2x3xf32>
    %454 = vector.extract_strided_slice %341 {offsets = [0, 0], sizes = [2, 1], strides = [1, 1]} : vector<2x3xf32> to vector<2x1xf32>
    %455 = vector.broadcast %454 : vector<2x1xf32> to vector<2x12xf32>
    %456 = arith.mulf %455, %91 : vector<2x12xf32>
    %457 = arith.addf %115, %456 : vector<2x12xf32>
    %458 = vector.extract_strided_slice %341 {offsets = [0, 1], sizes = [2, 1], strides = [1, 1]} : vector<2x3xf32> to vector<2x1xf32>
    %459 = vector.broadcast %458 : vector<2x1xf32> to vector<2x12xf32>
    %460 = arith.mulf %459, %94 : vector<2x12xf32>
    %461 = arith.addf %457, %460 : vector<2x12xf32>
    %462 = vector.extract_strided_slice %341 {offsets = [0, 2], sizes = [2, 1], strides = [1, 1]} : vector<2x3xf32> to vector<2x1xf32>
    %463 = vector.broadcast %462 : vector<2x1xf32> to vector<2x12xf32>
    %464 = arith.mulf %463, %97 : vector<2x12xf32>
    %465 = arith.addf %461, %464 : vector<2x12xf32>
    %466 = vector.extract_strided_slice %122 {offsets = [0, 0], sizes = [2, 1], strides = [1, 1]} : vector<2x3xf32> to vector<2x1xf32>
    %467 = vector.broadcast %466 : vector<2x1xf32> to vector<2x12xf32>
    %468 = arith.mulf %467, %55 : vector<2x12xf32>
    %469 = arith.addf %465, %468 : vector<2x12xf32>
    %470 = vector.extract_strided_slice %122 {offsets = [0, 1], sizes = [2, 1], strides = [1, 1]} : vector<2x3xf32> to vector<2x1xf32>
    %471 = vector.broadcast %470 : vector<2x1xf32> to vector<2x12xf32>
    %472 = arith.mulf %471, %58 : vector<2x12xf32>
    %473 = arith.addf %469, %472 : vector<2x12xf32>
    %474 = vector.extract_strided_slice %122 {offsets = [0, 2], sizes = [2, 1], strides = [1, 1]} : vector<2x3xf32> to vector<2x1xf32>
    %475 = vector.broadcast %474 : vector<2x1xf32> to vector<2x12xf32>
    %476 = arith.mulf %475, %61 : vector<2x12xf32>
    %477 = arith.addf %473, %476 : vector<2x12xf32>
    %cst_39 = arith.constant 5.000000e-01 : f32
    %478 = vector.broadcast %cst_39 : f32 to vector<2x12xf32>
    %479 = arith.mulf %478, %477 : vector<2x12xf32>
    %480 = math.tanh %479 : vector<2x12xf32>
    %cst_40 = arith.constant 1.000000e+00 : f32
    %481 = vector.broadcast %cst_40 : f32 to vector<2x12xf32>
    %482 = arith.addf %481, %480 : vector<2x12xf32>
    %cst_41 = arith.constant 5.000000e-01 : f32
    %483 = vector.broadcast %cst_41 : f32 to vector<2x12xf32>
    %484 = arith.mulf %483, %482 : vector<2x12xf32>
    %485 = math.tanh %477 : vector<2x12xf32>
    %486 = vector.extract_strided_slice %484 {offsets = [0, 0], sizes = [2, 3], strides = [1, 1]} : vector<2x12xf32> to vector<2x3xf32>
    %487 = vector.extract_strided_slice %484 {offsets = [0, 3], sizes = [2, 3], strides = [1, 1]} : vector<2x12xf32> to vector<2x3xf32>
    %488 = vector.extract_strided_slice %485 {offsets = [0, 6], sizes = [2, 3], strides = [1, 1]} : vector<2x12xf32> to vector<2x3xf32>
    %489 = vector.extract_strided_slice %484 {offsets = [0, 9], sizes = [2, 3], strides = [1, 1]} : vector<2x12xf32> to vector<2x3xf32>
    %490 = arith.mulf %487, %127 : vector<2x3xf32>
    %491 = arith.mulf %486, %488 : vector<2x3xf32>
    %492 = arith.addf %490, %491 : vector<2x3xf32>
    %493 = math.tanh %492 : vector<2x3xf32>
    %494 = arith.mulf %489, %493 : vector<2x3xf32>
    %495 = vector.extract_strided_slice %25 {offsets = [8, 0], sizes = [2, 12], strides = [1, 1]} : vector<16x12xf32> to vector<2x12xf32>
    %496 = vector.extract_strided_slice %371 {offsets = [0, 0], sizes = [2, 1], strides = [1, 1]} : vector<2x3xf32> to vector<2x1xf32>
    %497 = vector.broadcast %496 : vector<2x1xf32> to vector<2x12xf32>
    %498 = arith.mulf %497, %28 : vector<2x12xf32>
    %499 = arith.addf %495, %498 : vector<2x12xf32>
    %500 = vector.extract_strided_slice %371 {offsets = [0, 1], sizes = [2, 1], strides = [1, 1]} : vector<2x3xf32> to vector<2x1xf32>
    %501 = vector.broadcast %500 : vector<2x1xf32> to vector<2x12xf32>
    %502 = arith.mulf %501, %31 : vector<2x12xf32>
    %503 = arith.addf %499, %502 : vector<2x12xf32>
    %504 = vector.extract_strided_slice %371 {offsets = [0, 2], sizes = [2, 1], strides = [1, 1]} : vector<2x3xf32> to vector<2x1xf32>
    %505 = vector.broadcast %504 : vector<2x1xf32> to vector<2x12xf32>
    %506 = arith.mulf %505, %34 : vector<2x12xf32>
    %507 = arith.addf %503, %506 : vector<2x12xf32>
    %cst_42 = arith.constant 5.000000e-01 : f32
    %508 = vector.broadcast %cst_42 : f32 to vector<2x12xf32>
    %509 = arith.mulf %508, %507 : vector<2x12xf32>
    %510 = math.tanh %509 : vector<2x12xf32>
    %cst_43 = arith.constant 1.000000e+00 : f32
    %511 = vector.broadcast %cst_43 : f32 to vector<2x12xf32>
    %512 = arith.addf %511, %510 : vector<2x12xf32>
    %cst_44 = arith.constant 5.000000e-01 : f32
    %513 = vector.broadcast %cst_44 : f32 to vector<2x12xf32>
    %514 = arith.mulf %513, %512 : vector<2x12xf32>
    %515 = math.tanh %507 : vector<2x12xf32>
    %516 = vector.extract_strided_slice %514 {offsets = [0, 0], sizes = [2, 3], strides = [1, 1]} : vector<2x12xf32> to vector<2x3xf32>
    %517 = vector.extract_strided_slice %514 {offsets = [0, 3], sizes = [2, 3], strides = [1, 1]} : vector<2x12xf32> to vector<2x3xf32>
    %518 = vector.extract_strided_slice %515 {offsets = [0, 6], sizes = [2, 3], strides = [1, 1]} : vector<2x12xf32> to vector<2x3xf32>
    %519 = vector.extract_strided_slice %514 {offsets = [0, 9], sizes = [2, 3], strides = [1, 1]} : vector<2x12xf32> to vector<2x3xf32>
    %520 = arith.mulf %517, %369 : vector<2x3xf32>
    %521 = arith.mulf %516, %518 : vector<2x3xf32>
    %522 = arith.addf %520, %521 : vector<2x3xf32>
    %523 = math.tanh %522 : vector<2x3xf32>
    %524 = arith.mulf %519, %523 : vector<2x3xf32>
    %525 = vector.extract_strided_slice %371 {offsets = [0, 0], sizes = [2, 1], strides = [1, 1]} : vector<2x3xf32> to vector<2x1xf32>
    %526 = vector.broadcast %525 : vector<2x1xf32> to vector<2x12xf32>
    %527 = arith.mulf %526, %73 : vector<2x12xf32>
    %528 = arith.addf %109, %527 : vector<2x12xf32>
    %529 = vector.extract_strided_slice %371 {offsets = [0, 1], sizes = [2, 1], strides = [1, 1]} : vector<2x3xf32> to vector<2x1xf32>
    %530 = vector.broadcast %529 : vector<2x1xf32> to vector<2x12xf32>
    %531 = arith.mulf %530, %76 : vector<2x12xf32>
    %532 = arith.addf %528, %531 : vector<2x12xf32>
    %533 = vector.extract_strided_slice %371 {offsets = [0, 2], sizes = [2, 1], strides = [1, 1]} : vector<2x3xf32> to vector<2x1xf32>
    %534 = vector.broadcast %533 : vector<2x1xf32> to vector<2x12xf32>
    %535 = arith.mulf %534, %79 : vector<2x12xf32>
    %536 = arith.addf %532, %535 : vector<2x12xf32>
    %537 = vector.extract_strided_slice %412 {offsets = [0, 0], sizes = [2, 1], strides = [1, 1]} : vector<2x3xf32> to vector<2x1xf32>
    %538 = vector.broadcast %537 : vector<2x1xf32> to vector<2x12xf32>
    %539 = arith.mulf %538, %37 : vector<2x12xf32>
    %540 = arith.addf %536, %539 : vector<2x12xf32>
    %541 = vector.extract_strided_slice %412 {offsets = [0, 1], sizes = [2, 1], strides = [1, 1]} : vector<2x3xf32> to vector<2x1xf32>
    %542 = vector.broadcast %541 : vector<2x1xf32> to vector<2x12xf32>
    %543 = arith.mulf %542, %40 : vector<2x12xf32>
    %544 = arith.addf %540, %543 : vector<2x12xf32>
    %545 = vector.extract_strided_slice %412 {offsets = [0, 2], sizes = [2, 1], strides = [1, 1]} : vector<2x3xf32> to vector<2x1xf32>
    %546 = vector.broadcast %545 : vector<2x1xf32> to vector<2x12xf32>
    %547 = arith.mulf %546, %43 : vector<2x12xf32>
    %548 = arith.addf %544, %547 : vector<2x12xf32>
    %cst_45 = arith.constant 5.000000e-01 : f32
    %549 = vector.broadcast %cst_45 : f32 to vector<2x12xf32>
    %550 = arith.mulf %549, %548 : vector<2x12xf32>
    %551 = math.tanh %550 : vector<2x12xf32>
    %cst_46 = arith.constant 1.000000e+00 : f32
    %552 = vector.broadcast %cst_46 : f32 to vector<2x12xf32>
    %553 = arith.addf %552, %551 : vector<2x12xf32>
    %cst_47 = arith.constant 5.000000e-01 : f32
    %554 = vector.broadcast %cst_47 : f32 to vector<2x12xf32>
    %555 = arith.mulf %554, %553 : vector<2x12xf32>
    %556 = math.tanh %548 : vector<2x12xf32>
    %557 = vector.extract_strided_slice %555 {offsets = [0, 0], sizes = [2, 3], strides = [1, 1]} : vector<2x12xf32> to vector<2x3xf32>
    %558 = vector.extract_strided_slice %555 {offsets = [0, 3], sizes = [2, 3], strides = [1, 1]} : vector<2x12xf32> to vector<2x3xf32>
    %559 = vector.extract_strided_slice %556 {offsets = [0, 6], sizes = [2, 3], strides = [1, 1]} : vector<2x12xf32> to vector<2x3xf32>
    %560 = vector.extract_strided_slice %555 {offsets = [0, 9], sizes = [2, 3], strides = [1, 1]} : vector<2x12xf32> to vector<2x3xf32>
    %561 = arith.mulf %558, %410 : vector<2x3xf32>
    %562 = arith.mulf %557, %559 : vector<2x3xf32>
    %563 = arith.addf %561, %562 : vector<2x3xf32>
    %564 = math.tanh %563 : vector<2x3xf32>
    %565 = arith.mulf %560, %564 : vector<2x3xf32>
    %566 = vector.extract_strided_slice %412 {offsets = [0, 0], sizes = [2, 1], strides = [1, 1]} : vector<2x3xf32> to vector<2x1xf32>
    %567 = vector.broadcast %566 : vector<2x1xf32> to vector<2x12xf32>
    %568 = arith.mulf %567, %82 : vector<2x12xf32>
    %569 = arith.addf %112, %568 : vector<2x12xf32>
    %570 = vector.extract_strided_slice %412 {offsets = [0, 1], sizes = [2, 1], strides = [1, 1]} : vector<2x3xf32> to vector<2x1xf32>
    %571 = vector.broadcast %570 : vector<2x1xf32> to vector<2x12xf32>
    %572 = arith.mulf %571, %85 : vector<2x12xf32>
    %573 = arith.addf %569, %572 : vector<2x12xf32>
    %574 = vector.extract_strided_slice %412 {offsets = [0, 2], sizes = [2, 1], strides = [1, 1]} : vector<2x3xf32> to vector<2x1xf32>
    %575 = vector.broadcast %574 : vector<2x1xf32> to vector<2x12xf32>
    %576 = arith.mulf %575, %88 : vector<2x12xf32>
    %577 = arith.addf %573, %576 : vector<2x12xf32>
    %578 = vector.extract_strided_slice %453 {offsets = [0, 0], sizes = [2, 1], strides = [1, 1]} : vector<2x3xf32> to vector<2x1xf32>
    %579 = vector.broadcast %578 : vector<2x1xf32> to vector<2x12xf32>
    %580 = arith.mulf %579, %46 : vector<2x12xf32>
    %581 = arith.addf %577, %580 : vector<2x12xf32>
    %582 = vector.extract_strided_slice %453 {offsets = [0, 1], sizes = [2, 1], strides = [1, 1]} : vector<2x3xf32> to vector<2x1xf32>
    %583 = vector.broadcast %582 : vector<2x1xf32> to vector<2x12xf32>
    %584 = arith.mulf %583, %49 : vector<2x12xf32>
    %585 = arith.addf %581, %584 : vector<2x12xf32>
    %586 = vector.extract_strided_slice %453 {offsets = [0, 2], sizes = [2, 1], strides = [1, 1]} : vector<2x3xf32> to vector<2x1xf32>
    %587 = vector.broadcast %586 : vector<2x1xf32> to vector<2x12xf32>
    %588 = arith.mulf %587, %52 : vector<2x12xf32>
    %589 = arith.addf %585, %588 : vector<2x12xf32>
    %cst_48 = arith.constant 5.000000e-01 : f32
    %590 = vector.broadcast %cst_48 : f32 to vector<2x12xf32>
    %591 = arith.mulf %590, %589 : vector<2x12xf32>
    %592 = math.tanh %591 : vector<2x12xf32>
    %cst_49 = arith.constant 1.000000e+00 : f32
    %593 = vector.broadcast %cst_49 : f32 to vector<2x12xf32>
    %594 = arith.addf %593, %592 : vector<2x12xf32>
    %cst_50 = arith.constant 5.000000e-01 : f32
    %595 = vector.broadcast %cst_50 : f32 to vector<2x12xf32>
    %596 = arith.mulf %595, %594 : vector<2x12xf32>
    %597 = math.tanh %589 : vector<2x12xf32>
    %598 = vector.extract_strided_slice %596 {offsets = [0, 0], sizes = [2, 3], strides = [1, 1]} : vector<2x12xf32> to vector<2x3xf32>
    %599 = vector.extract_strided_slice %596 {offsets = [0, 3], sizes = [2, 3], strides = [1, 1]} : vector<2x12xf32> to vector<2x3xf32>
    %600 = vector.extract_strided_slice %597 {offsets = [0, 6], sizes = [2, 3], strides = [1, 1]} : vector<2x12xf32> to vector<2x3xf32>
    %601 = vector.extract_strided_slice %596 {offsets = [0, 9], sizes = [2, 3], strides = [1, 1]} : vector<2x12xf32> to vector<2x3xf32>
    %602 = arith.mulf %599, %451 : vector<2x3xf32>
    %603 = arith.mulf %598, %600 : vector<2x3xf32>
    %604 = arith.addf %602, %603 : vector<2x3xf32>
    %605 = math.tanh %604 : vector<2x3xf32>
    %606 = arith.mulf %601, %605 : vector<2x3xf32>
    %607 = vector.extract_strided_slice %453 {offsets = [0, 0], sizes = [2, 1], strides = [1, 1]} : vector<2x3xf32> to vector<2x1xf32>
    %608 = vector.broadcast %607 : vector<2x1xf32> to vector<2x12xf32>
    %609 = arith.mulf %608, %91 : vector<2x12xf32>
    %610 = arith.addf %115, %609 : vector<2x12xf32>
    %611 = vector.extract_strided_slice %453 {offsets = [0, 1], sizes = [2, 1], strides = [1, 1]} : vector<2x3xf32> to vector<2x1xf32>
    %612 = vector.broadcast %611 : vector<2x1xf32> to vector<2x12xf32>
    %613 = arith.mulf %612, %94 : vector<2x12xf32>
    %614 = arith.addf %610, %613 : vector<2x12xf32>
    %615 = vector.extract_strided_slice %453 {offsets = [0, 2], sizes = [2, 1], strides = [1, 1]} : vector<2x3xf32> to vector<2x1xf32>
    %616 = vector.broadcast %615 : vector<2x1xf32> to vector<2x12xf32>
    %617 = arith.mulf %616, %97 : vector<2x12xf32>
    %618 = arith.addf %614, %617 : vector<2x12xf32>
    %619 = vector.extract_strided_slice %494 {offsets = [0, 0], sizes = [2, 1], strides = [1, 1]} : vector<2x3xf32> to vector<2x1xf32>
    %620 = vector.broadcast %619 : vector<2x1xf32> to vector<2x12xf32>
    %621 = arith.mulf %620, %55 : vector<2x12xf32>
    %622 = arith.addf %618, %621 : vector<2x12xf32>
    %623 = vector.extract_strided_slice %494 {offsets = [0, 1], sizes = [2, 1], strides = [1, 1]} : vector<2x3xf32> to vector<2x1xf32>
    %624 = vector.broadcast %623 : vector<2x1xf32> to vector<2x12xf32>
    %625 = arith.mulf %624, %58 : vector<2x12xf32>
    %626 = arith.addf %622, %625 : vector<2x12xf32>
    %627 = vector.extract_strided_slice %494 {offsets = [0, 2], sizes = [2, 1], strides = [1, 1]} : vector<2x3xf32> to vector<2x1xf32>
    %628 = vector.broadcast %627 : vector<2x1xf32> to vector<2x12xf32>
    %629 = arith.mulf %628, %61 : vector<2x12xf32>
    %630 = arith.addf %626, %629 : vector<2x12xf32>
    %cst_51 = arith.constant 5.000000e-01 : f32
    %631 = vector.broadcast %cst_51 : f32 to vector<2x12xf32>
    %632 = arith.mulf %631, %630 : vector<2x12xf32>
    %633 = math.tanh %632 : vector<2x12xf32>
    %cst_52 = arith.constant 1.000000e+00 : f32
    %634 = vector.broadcast %cst_52 : f32 to vector<2x12xf32>
    %635 = arith.addf %634, %633 : vector<2x12xf32>
    %cst_53 = arith.constant 5.000000e-01 : f32
    %636 = vector.broadcast %cst_53 : f32 to vector<2x12xf32>
    %637 = arith.mulf %636, %635 : vector<2x12xf32>
    %638 = math.tanh %630 : vector<2x12xf32>
    %639 = vector.extract_strided_slice %637 {offsets = [0, 0], sizes = [2, 3], strides = [1, 1]} : vector<2x12xf32> to vector<2x3xf32>
    %640 = vector.extract_strided_slice %637 {offsets = [0, 3], sizes = [2, 3], strides = [1, 1]} : vector<2x12xf32> to vector<2x3xf32>
    %641 = vector.extract_strided_slice %638 {offsets = [0, 6], sizes = [2, 3], strides = [1, 1]} : vector<2x12xf32> to vector<2x3xf32>
    %642 = vector.extract_strided_slice %637 {offsets = [0, 9], sizes = [2, 3], strides = [1, 1]} : vector<2x12xf32> to vector<2x3xf32>
    %643 = arith.mulf %640, %492 : vector<2x3xf32>
    %644 = arith.mulf %639, %641 : vector<2x3xf32>
    %645 = arith.addf %643, %644 : vector<2x3xf32>
    %646 = math.tanh %645 : vector<2x3xf32>
    %647 = arith.mulf %642, %646 : vector<2x3xf32>
    %648 = vector.extract_strided_slice %494 {offsets = [0, 0], sizes = [2, 1], strides = [1, 1]} : vector<2x3xf32> to vector<2x1xf32>
    %649 = vector.broadcast %648 : vector<2x1xf32> to vector<2x12xf32>
    %650 = arith.mulf %649, %100 : vector<2x12xf32>
    %651 = arith.addf %118, %650 : vector<2x12xf32>
    %652 = vector.extract_strided_slice %494 {offsets = [0, 1], sizes = [2, 1], strides = [1, 1]} : vector<2x3xf32> to vector<2x1xf32>
    %653 = vector.broadcast %652 : vector<2x1xf32> to vector<2x12xf32>
    %654 = arith.mulf %653, %103 : vector<2x12xf32>
    %655 = arith.addf %651, %654 : vector<2x12xf32>
    %656 = vector.extract_strided_slice %494 {offsets = [0, 2], sizes = [2, 1], strides = [1, 1]} : vector<2x3xf32> to vector<2x1xf32>
    %657 = vector.broadcast %656 : vector<2x1xf32> to vector<2x12xf32>
    %658 = arith.mulf %657, %106 : vector<2x12xf32>
    %659 = arith.addf %655, %658 : vector<2x12xf32>
    %660 = vector.extract_strided_slice %123 {offsets = [0, 0], sizes = [2, 1], strides = [1, 1]} : vector<2x3xf32> to vector<2x1xf32>
    %661 = vector.broadcast %660 : vector<2x1xf32> to vector<2x12xf32>
    %662 = arith.mulf %661, %64 : vector<2x12xf32>
    %663 = arith.addf %659, %662 : vector<2x12xf32>
    %664 = vector.extract_strided_slice %123 {offsets = [0, 1], sizes = [2, 1], strides = [1, 1]} : vector<2x3xf32> to vector<2x1xf32>
    %665 = vector.broadcast %664 : vector<2x1xf32> to vector<2x12xf32>
    %666 = arith.mulf %665, %67 : vector<2x12xf32>
    %667 = arith.addf %663, %666 : vector<2x12xf32>
    %668 = vector.extract_strided_slice %123 {offsets = [0, 2], sizes = [2, 1], strides = [1, 1]} : vector<2x3xf32> to vector<2x1xf32>
    %669 = vector.broadcast %668 : vector<2x1xf32> to vector<2x12xf32>
    %670 = arith.mulf %669, %70 : vector<2x12xf32>
    %671 = arith.addf %667, %670 : vector<2x12xf32>
    %cst_54 = arith.constant 5.000000e-01 : f32
    %672 = vector.broadcast %cst_54 : f32 to vector<2x12xf32>
    %673 = arith.mulf %672, %671 : vector<2x12xf32>
    %674 = math.tanh %673 : vector<2x12xf32>
    %cst_55 = arith.constant 1.000000e+00 : f32
    %675 = vector.broadcast %cst_55 : f32 to vector<2x12xf32>
    %676 = arith.addf %675, %674 : vector<2x12xf32>
    %cst_56 = arith.constant 5.000000e-01 : f32
    %677 = vector.broadcast %cst_56 : f32 to vector<2x12xf32>
    %678 = arith.mulf %677, %676 : vector<2x12xf32>
    %679 = math.tanh %671 : vector<2x12xf32>
    %680 = vector.extract_strided_slice %678 {offsets = [0, 0], sizes = [2, 3], strides = [1, 1]} : vector<2x12xf32> to vector<2x3xf32>
    %681 = vector.extract_strided_slice %678 {offsets = [0, 3], sizes = [2, 3], strides = [1, 1]} : vector<2x12xf32> to vector<2x3xf32>
    %682 = vector.extract_strided_slice %679 {offsets = [0, 6], sizes = [2, 3], strides = [1, 1]} : vector<2x12xf32> to vector<2x3xf32>
    %683 = vector.extract_strided_slice %678 {offsets = [0, 9], sizes = [2, 3], strides = [1, 1]} : vector<2x12xf32> to vector<2x3xf32>
    %684 = arith.mulf %681, %128 : vector<2x3xf32>
    %685 = arith.mulf %680, %682 : vector<2x3xf32>
    %686 = arith.addf %684, %685 : vector<2x3xf32>
    %687 = math.tanh %686 : vector<2x3xf32>
    %688 = arith.mulf %683, %687 : vector<2x3xf32>
    %689 = vector.extract_strided_slice %25 {offsets = [10, 0], sizes = [2, 12], strides = [1, 1]} : vector<16x12xf32> to vector<2x12xf32>
    %690 = vector.extract_strided_slice %524 {offsets = [0, 0], sizes = [2, 1], strides = [1, 1]} : vector<2x3xf32> to vector<2x1xf32>
    %691 = vector.broadcast %690 : vector<2x1xf32> to vector<2x12xf32>
    %692 = arith.mulf %691, %28 : vector<2x12xf32>
    %693 = arith.addf %689, %692 : vector<2x12xf32>
    %694 = vector.extract_strided_slice %524 {offsets = [0, 1], sizes = [2, 1], strides = [1, 1]} : vector<2x3xf32> to vector<2x1xf32>
    %695 = vector.broadcast %694 : vector<2x1xf32> to vector<2x12xf32>
    %696 = arith.mulf %695, %31 : vector<2x12xf32>
    %697 = arith.addf %693, %696 : vector<2x12xf32>
    %698 = vector.extract_strided_slice %524 {offsets = [0, 2], sizes = [2, 1], strides = [1, 1]} : vector<2x3xf32> to vector<2x1xf32>
    %699 = vector.broadcast %698 : vector<2x1xf32> to vector<2x12xf32>
    %700 = arith.mulf %699, %34 : vector<2x12xf32>
    %701 = arith.addf %697, %700 : vector<2x12xf32>
    %cst_57 = arith.constant 5.000000e-01 : f32
    %702 = vector.broadcast %cst_57 : f32 to vector<2x12xf32>
    %703 = arith.mulf %702, %701 : vector<2x12xf32>
    %704 = math.tanh %703 : vector<2x12xf32>
    %cst_58 = arith.constant 1.000000e+00 : f32
    %705 = vector.broadcast %cst_58 : f32 to vector<2x12xf32>
    %706 = arith.addf %705, %704 : vector<2x12xf32>
    %cst_59 = arith.constant 5.000000e-01 : f32
    %707 = vector.broadcast %cst_59 : f32 to vector<2x12xf32>
    %708 = arith.mulf %707, %706 : vector<2x12xf32>
    %709 = math.tanh %701 : vector<2x12xf32>
    %710 = vector.extract_strided_slice %708 {offsets = [0, 0], sizes = [2, 3], strides = [1, 1]} : vector<2x12xf32> to vector<2x3xf32>
    %711 = vector.extract_strided_slice %708 {offsets = [0, 3], sizes = [2, 3], strides = [1, 1]} : vector<2x12xf32> to vector<2x3xf32>
    %712 = vector.extract_strided_slice %709 {offsets = [0, 6], sizes = [2, 3], strides = [1, 1]} : vector<2x12xf32> to vector<2x3xf32>
    %713 = vector.extract_strided_slice %708 {offsets = [0, 9], sizes = [2, 3], strides = [1, 1]} : vector<2x12xf32> to vector<2x3xf32>
    %714 = arith.mulf %711, %522 : vector<2x3xf32>
    %715 = arith.mulf %710, %712 : vector<2x3xf32>
    %716 = arith.addf %714, %715 : vector<2x3xf32>
    %717 = math.tanh %716 : vector<2x3xf32>
    %718 = arith.mulf %713, %717 : vector<2x3xf32>
    %719 = vector.extract_strided_slice %524 {offsets = [0, 0], sizes = [2, 1], strides = [1, 1]} : vector<2x3xf32> to vector<2x1xf32>
    %720 = vector.broadcast %719 : vector<2x1xf32> to vector<2x12xf32>
    %721 = arith.mulf %720, %73 : vector<2x12xf32>
    %722 = arith.addf %109, %721 : vector<2x12xf32>
    %723 = vector.extract_strided_slice %524 {offsets = [0, 1], sizes = [2, 1], strides = [1, 1]} : vector<2x3xf32> to vector<2x1xf32>
    %724 = vector.broadcast %723 : vector<2x1xf32> to vector<2x12xf32>
    %725 = arith.mulf %724, %76 : vector<2x12xf32>
    %726 = arith.addf %722, %725 : vector<2x12xf32>
    %727 = vector.extract_strided_slice %524 {offsets = [0, 2], sizes = [2, 1], strides = [1, 1]} : vector<2x3xf32> to vector<2x1xf32>
    %728 = vector.broadcast %727 : vector<2x1xf32> to vector<2x12xf32>
    %729 = arith.mulf %728, %79 : vector<2x12xf32>
    %730 = arith.addf %726, %729 : vector<2x12xf32>
    %731 = vector.extract_strided_slice %565 {offsets = [0, 0], sizes = [2, 1], strides = [1, 1]} : vector<2x3xf32> to vector<2x1xf32>
    %732 = vector.broadcast %731 : vector<2x1xf32> to vector<2x12xf32>
    %733 = arith.mulf %732, %37 : vector<2x12xf32>
    %734 = arith.addf %730, %733 : vector<2x12xf32>
    %735 = vector.extract_strided_slice %565 {offsets = [0, 1], sizes = [2, 1], strides = [1, 1]} : vector<2x3xf32> to vector<2x1xf32>
    %736 = vector.broadcast %735 : vector<2x1xf32> to vector<2x12xf32>
    %737 = arith.mulf %736, %40 : vector<2x12xf32>
    %738 = arith.addf %734, %737 : vector<2x12xf32>
    %739 = vector.extract_strided_slice %565 {offsets = [0, 2], sizes = [2, 1], strides = [1, 1]} : vector<2x3xf32> to vector<2x1xf32>
    %740 = vector.broadcast %739 : vector<2x1xf32> to vector<2x12xf32>
    %741 = arith.mulf %740, %43 : vector<2x12xf32>
    %742 = arith.addf %738, %741 : vector<2x12xf32>
    %cst_60 = arith.constant 5.000000e-01 : f32
    %743 = vector.broadcast %cst_60 : f32 to vector<2x12xf32>
    %744 = arith.mulf %743, %742 : vector<2x12xf32>
    %745 = math.tanh %744 : vector<2x12xf32>
    %cst_61 = arith.constant 1.000000e+00 : f32
    %746 = vector.broadcast %cst_61 : f32 to vector<2x12xf32>
    %747 = arith.addf %746, %745 : vector<2x12xf32>
    %cst_62 = arith.constant 5.000000e-01 : f32
    %748 = vector.broadcast %cst_62 : f32 to vector<2x12xf32>
    %749 = arith.mulf %748, %747 : vector<2x12xf32>
    %750 = math.tanh %742 : vector<2x12xf32>
    %751 = vector.extract_strided_slice %749 {offsets = [0, 0], sizes = [2, 3], strides = [1, 1]} : vector<2x12xf32> to vector<2x3xf32>
    %752 = vector.extract_strided_slice %749 {offsets = [0, 3], sizes = [2, 3], strides = [1, 1]} : vector<2x12xf32> to vector<2x3xf32>
    %753 = vector.extract_strided_slice %750 {offsets = [0, 6], sizes = [2, 3], strides = [1, 1]} : vector<2x12xf32> to vector<2x3xf32>
    %754 = vector.extract_strided_slice %749 {offsets = [0, 9], sizes = [2, 3], strides = [1, 1]} : vector<2x12xf32> to vector<2x3xf32>
    %755 = arith.mulf %752, %563 : vector<2x3xf32>
    %756 = arith.mulf %751, %753 : vector<2x3xf32>
    %757 = arith.addf %755, %756 : vector<2x3xf32>
    %758 = math.tanh %757 : vector<2x3xf32>
    %759 = arith.mulf %754, %758 : vector<2x3xf32>
    %760 = vector.extract_strided_slice %565 {offsets = [0, 0], sizes = [2, 1], strides = [1, 1]} : vector<2x3xf32> to vector<2x1xf32>
    %761 = vector.broadcast %760 : vector<2x1xf32> to vector<2x12xf32>
    %762 = arith.mulf %761, %82 : vector<2x12xf32>
    %763 = arith.addf %112, %762 : vector<2x12xf32>
    %764 = vector.extract_strided_slice %565 {offsets = [0, 1], sizes = [2, 1], strides = [1, 1]} : vector<2x3xf32> to vector<2x1xf32>
    %765 = vector.broadcast %764 : vector<2x1xf32> to vector<2x12xf32>
    %766 = arith.mulf %765, %85 : vector<2x12xf32>
    %767 = arith.addf %763, %766 : vector<2x12xf32>
    %768 = vector.extract_strided_slice %565 {offsets = [0, 2], sizes = [2, 1], strides = [1, 1]} : vector<2x3xf32> to vector<2x1xf32>
    %769 = vector.broadcast %768 : vector<2x1xf32> to vector<2x12xf32>
    %770 = arith.mulf %769, %88 : vector<2x12xf32>
    %771 = arith.addf %767, %770 : vector<2x12xf32>
    %772 = vector.extract_strided_slice %606 {offsets = [0, 0], sizes = [2, 1], strides = [1, 1]} : vector<2x3xf32> to vector<2x1xf32>
    %773 = vector.broadcast %772 : vector<2x1xf32> to vector<2x12xf32>
    %774 = arith.mulf %773, %46 : vector<2x12xf32>
    %775 = arith.addf %771, %774 : vector<2x12xf32>
    %776 = vector.extract_strided_slice %606 {offsets = [0, 1], sizes = [2, 1], strides = [1, 1]} : vector<2x3xf32> to vector<2x1xf32>
    %777 = vector.broadcast %776 : vector<2x1xf32> to vector<2x12xf32>
    %778 = arith.mulf %777, %49 : vector<2x12xf32>
    %779 = arith.addf %775, %778 : vector<2x12xf32>
    %780 = vector.extract_strided_slice %606 {offsets = [0, 2], sizes = [2, 1], strides = [1, 1]} : vector<2x3xf32> to vector<2x1xf32>
    %781 = vector.broadcast %780 : vector<2x1xf32> to vector<2x12xf32>
    %782 = arith.mulf %781, %52 : vector<2x12xf32>
    %783 = arith.addf %779, %782 : vector<2x12xf32>
    %cst_63 = arith.constant 5.000000e-01 : f32
    %784 = vector.broadcast %cst_63 : f32 to vector<2x12xf32>
    %785 = arith.mulf %784, %783 : vector<2x12xf32>
    %786 = math.tanh %785 : vector<2x12xf32>
    %cst_64 = arith.constant 1.000000e+00 : f32
    %787 = vector.broadcast %cst_64 : f32 to vector<2x12xf32>
    %788 = arith.addf %787, %786 : vector<2x12xf32>
    %cst_65 = arith.constant 5.000000e-01 : f32
    %789 = vector.broadcast %cst_65 : f32 to vector<2x12xf32>
    %790 = arith.mulf %789, %788 : vector<2x12xf32>
    %791 = math.tanh %783 : vector<2x12xf32>
    %792 = vector.extract_strided_slice %790 {offsets = [0, 0], sizes = [2, 3], strides = [1, 1]} : vector<2x12xf32> to vector<2x3xf32>
    %793 = vector.extract_strided_slice %790 {offsets = [0, 3], sizes = [2, 3], strides = [1, 1]} : vector<2x12xf32> to vector<2x3xf32>
    %794 = vector.extract_strided_slice %791 {offsets = [0, 6], sizes = [2, 3], strides = [1, 1]} : vector<2x12xf32> to vector<2x3xf32>
    %795 = vector.extract_strided_slice %790 {offsets = [0, 9], sizes = [2, 3], strides = [1, 1]} : vector<2x12xf32> to vector<2x3xf32>
    %796 = arith.mulf %793, %604 : vector<2x3xf32>
    %797 = arith.mulf %792, %794 : vector<2x3xf32>
    %798 = arith.addf %796, %797 : vector<2x3xf32>
    %799 = math.tanh %798 : vector<2x3xf32>
    %800 = arith.mulf %795, %799 : vector<2x3xf32>
    %801 = vector.extract_strided_slice %606 {offsets = [0, 0], sizes = [2, 1], strides = [1, 1]} : vector<2x3xf32> to vector<2x1xf32>
    %802 = vector.broadcast %801 : vector<2x1xf32> to vector<2x12xf32>
    %803 = arith.mulf %802, %91 : vector<2x12xf32>
    %804 = arith.addf %115, %803 : vector<2x12xf32>
    %805 = vector.extract_strided_slice %606 {offsets = [0, 1], sizes = [2, 1], strides = [1, 1]} : vector<2x3xf32> to vector<2x1xf32>
    %806 = vector.broadcast %805 : vector<2x1xf32> to vector<2x12xf32>
    %807 = arith.mulf %806, %94 : vector<2x12xf32>
    %808 = arith.addf %804, %807 : vector<2x12xf32>
    %809 = vector.extract_strided_slice %606 {offsets = [0, 2], sizes = [2, 1], strides = [1, 1]} : vector<2x3xf32> to vector<2x1xf32>
    %810 = vector.broadcast %809 : vector<2x1xf32> to vector<2x12xf32>
    %811 = arith.mulf %810, %97 : vector<2x12xf32>
    %812 = arith.addf %808, %811 : vector<2x12xf32>
    %813 = vector.extract_strided_slice %647 {offsets = [0, 0], sizes = [2, 1], strides = [1, 1]} : vector<2x3xf32> to vector<2x1xf32>
    %814 = vector.broadcast %813 : vector<2x1xf32> to vector<2x12xf32>
    %815 = arith.mulf %814, %55 : vector<2x12xf32>
    %816 = arith.addf %812, %815 : vector<2x12xf32>
    %817 = vector.extract_strided_slice %647 {offsets = [0, 1], sizes = [2, 1], strides = [1, 1]} : vector<2x3xf32> to vector<2x1xf32>
    %818 = vector.broadcast %817 : vector<2x1xf32> to vector<2x12xf32>
    %819 = arith.mulf %818, %58 : vector<2x12xf32>
    %820 = arith.addf %816, %819 : vector<2x12xf32>
    %821 = vector.extract_strided_slice %647 {offsets = [0, 2], sizes = [2, 1], strides = [1, 1]} : vector<2x3xf32> to vector<2x1xf32>
    %822 = vector.broadcast %821 : vector<2x1xf32> to vector<2x12xf32>
    %823 = arith.mulf %822, %61 : vector<2x12xf32>
    %824 = arith.addf %820, %823 : vector<2x12xf32>
    %cst_66 = arith.constant 5.000000e-01 : f32
    %825 = vector.broadcast %cst_66 : f32 to vector<2x12xf32>
    %826 = arith.mulf %825, %824 : vector<2x12xf32>
    %827 = math.tanh %826 : vector<2x12xf32>
    %cst_67 = arith.constant 1.000000e+00 : f32
    %828 = vector.broadcast %cst_67 : f32 to vector<2x12xf32>
    %829 = arith.addf %828, %827 : vector<2x12xf32>
    %cst_68 = arith.constant 5.000000e-01 : f32
    %830 = vector.broadcast %cst_68 : f32 to vector<2x12xf32>
    %831 = arith.mulf %830, %829 : vector<2x12xf32>
    %832 = math.tanh %824 : vector<2x12xf32>
    %833 = vector.extract_strided_slice %831 {offsets = [0, 0], sizes = [2, 3], strides = [1, 1]} : vector<2x12xf32> to vector<2x3xf32>
    %834 = vector.extract_strided_slice %831 {offsets = [0, 3], sizes = [2, 3], strides = [1, 1]} : vector<2x12xf32> to vector<2x3xf32>
    %835 = vector.extract_strided_slice %832 {offsets = [0, 6], sizes = [2, 3], strides = [1, 1]} : vector<2x12xf32> to vector<2x3xf32>
    %836 = vector.extract_strided_slice %831 {offsets = [0, 9], sizes = [2, 3], strides = [1, 1]} : vector<2x12xf32> to vector<2x3xf32>
    %837 = arith.mulf %834, %645 : vector<2x3xf32>
    %838 = arith.mulf %833, %835 : vector<2x3xf32>
    %839 = arith.addf %837, %838 : vector<2x3xf32>
    %840 = math.tanh %839 : vector<2x3xf32>
    %841 = arith.mulf %836, %840 : vector<2x3xf32>
    %842 = vector.extract_strided_slice %647 {offsets = [0, 0], sizes = [2, 1], strides = [1, 1]} : vector<2x3xf32> to vector<2x1xf32>
    %843 = vector.broadcast %842 : vector<2x1xf32> to vector<2x12xf32>
    %844 = arith.mulf %843, %100 : vector<2x12xf32>
    %845 = arith.addf %118, %844 : vector<2x12xf32>
    %846 = vector.extract_strided_slice %647 {offsets = [0, 1], sizes = [2, 1], strides = [1, 1]} : vector<2x3xf32> to vector<2x1xf32>
    %847 = vector.broadcast %846 : vector<2x1xf32> to vector<2x12xf32>
    %848 = arith.mulf %847, %103 : vector<2x12xf32>
    %849 = arith.addf %845, %848 : vector<2x12xf32>
    %850 = vector.extract_strided_slice %647 {offsets = [0, 2], sizes = [2, 1], strides = [1, 1]} : vector<2x3xf32> to vector<2x1xf32>
    %851 = vector.broadcast %850 : vector<2x1xf32> to vector<2x12xf32>
    %852 = arith.mulf %851, %106 : vector<2x12xf32>
    %853 = arith.addf %849, %852 : vector<2x12xf32>
    %854 = vector.extract_strided_slice %688 {offsets = [0, 0], sizes = [2, 1], strides = [1, 1]} : vector<2x3xf32> to vector<2x1xf32>
    %855 = vector.broadcast %854 : vector<2x1xf32> to vector<2x12xf32>
    %856 = arith.mulf %855, %64 : vector<2x12xf32>
    %857 = arith.addf %853, %856 : vector<2x12xf32>
    %858 = vector.extract_strided_slice %688 {offsets = [0, 1], sizes = [2, 1], strides = [1, 1]} : vector<2x3xf32> to vector<2x1xf32>
    %859 = vector.broadcast %858 : vector<2x1xf32> to vector<2x12xf32>
    %860 = arith.mulf %859, %67 : vector<2x12xf32>
    %861 = arith.addf %857, %860 : vector<2x12xf32>
    %862 = vector.extract_strided_slice %688 {offsets = [0, 2], sizes = [2, 1], strides = [1, 1]} : vector<2x3xf32> to vector<2x1xf32>
    %863 = vector.broadcast %862 : vector<2x1xf32> to vector<2x12xf32>
    %864 = arith.mulf %863, %70 : vector<2x12xf32>
    %865 = arith.addf %861, %864 : vector<2x12xf32>
    %cst_69 = arith.constant 5.000000e-01 : f32
    %866 = vector.broadcast %cst_69 : f32 to vector<2x12xf32>
    %867 = arith.mulf %866, %865 : vector<2x12xf32>
    %868 = math.tanh %867 : vector<2x12xf32>
    %cst_70 = arith.constant 1.000000e+00 : f32
    %869 = vector.broadcast %cst_70 : f32 to vector<2x12xf32>
    %870 = arith.addf %869, %868 : vector<2x12xf32>
    %cst_71 = arith.constant 5.000000e-01 : f32
    %871 = vector.broadcast %cst_71 : f32 to vector<2x12xf32>
    %872 = arith.mulf %871, %870 : vector<2x12xf32>
    %873 = math.tanh %865 : vector<2x12xf32>
    %874 = vector.extract_strided_slice %872 {offsets = [0, 0], sizes = [2, 3], strides = [1, 1]} : vector<2x12xf32> to vector<2x3xf32>
    %875 = vector.extract_strided_slice %872 {offsets = [0, 3], sizes = [2, 3], strides = [1, 1]} : vector<2x12xf32> to vector<2x3xf32>
    %876 = vector.extract_strided_slice %873 {offsets = [0, 6], sizes = [2, 3], strides = [1, 1]} : vector<2x12xf32> to vector<2x3xf32>
    %877 = vector.extract_strided_slice %872 {offsets = [0, 9], sizes = [2, 3], strides = [1, 1]} : vector<2x12xf32> to vector<2x3xf32>
    %878 = arith.mulf %875, %686 : vector<2x3xf32>
    %879 = arith.mulf %874, %876 : vector<2x3xf32>
    %880 = arith.addf %878, %879 : vector<2x3xf32>
    %881 = math.tanh %880 : vector<2x3xf32>
    %882 = arith.mulf %877, %881 : vector<2x3xf32>
    %883 = vector.extract_strided_slice %25 {offsets = [12, 0], sizes = [2, 12], strides = [1, 1]} : vector<16x12xf32> to vector<2x12xf32>
    %884 = vector.extract_strided_slice %718 {offsets = [0, 0], sizes = [2, 1], strides = [1, 1]} : vector<2x3xf32> to vector<2x1xf32>
    %885 = vector.broadcast %884 : vector<2x1xf32> to vector<2x12xf32>
    %886 = arith.mulf %885, %28 : vector<2x12xf32>
    %887 = arith.addf %883, %886 : vector<2x12xf32>
    %888 = vector.extract_strided_slice %718 {offsets = [0, 1], sizes = [2, 1], strides = [1, 1]} : vector<2x3xf32> to vector<2x1xf32>
    %889 = vector.broadcast %888 : vector<2x1xf32> to vector<2x12xf32>
    %890 = arith.mulf %889, %31 : vector<2x12xf32>
    %891 = arith.addf %887, %890 : vector<2x12xf32>
    %892 = vector.extract_strided_slice %718 {offsets = [0, 2], sizes = [2, 1], strides = [1, 1]} : vector<2x3xf32> to vector<2x1xf32>
    %893 = vector.broadcast %892 : vector<2x1xf32> to vector<2x12xf32>
    %894 = arith.mulf %893, %34 : vector<2x12xf32>
    %895 = arith.addf %891, %894 : vector<2x12xf32>
    %cst_72 = arith.constant 5.000000e-01 : f32
    %896 = vector.broadcast %cst_72 : f32 to vector<2x12xf32>
    %897 = arith.mulf %896, %895 : vector<2x12xf32>
    %898 = math.tanh %897 : vector<2x12xf32>
    %cst_73 = arith.constant 1.000000e+00 : f32
    %899 = vector.broadcast %cst_73 : f32 to vector<2x12xf32>
    %900 = arith.addf %899, %898 : vector<2x12xf32>
    %cst_74 = arith.constant 5.000000e-01 : f32
    %901 = vector.broadcast %cst_74 : f32 to vector<2x12xf32>
    %902 = arith.mulf %901, %900 : vector<2x12xf32>
    %903 = math.tanh %895 : vector<2x12xf32>
    %904 = vector.extract_strided_slice %902 {offsets = [0, 0], sizes = [2, 3], strides = [1, 1]} : vector<2x12xf32> to vector<2x3xf32>
    %905 = vector.extract_strided_slice %902 {offsets = [0, 3], sizes = [2, 3], strides = [1, 1]} : vector<2x12xf32> to vector<2x3xf32>
    %906 = vector.extract_strided_slice %903 {offsets = [0, 6], sizes = [2, 3], strides = [1, 1]} : vector<2x12xf32> to vector<2x3xf32>
    %907 = vector.extract_strided_slice %902 {offsets = [0, 9], sizes = [2, 3], strides = [1, 1]} : vector<2x12xf32> to vector<2x3xf32>
    %908 = arith.mulf %905, %716 : vector<2x3xf32>
    %909 = arith.mulf %904, %906 : vector<2x3xf32>
    %910 = arith.addf %908, %909 : vector<2x3xf32>
    %911 = math.tanh %910 : vector<2x3xf32>
    %912 = arith.mulf %907, %911 : vector<2x3xf32>
    %913 = vector.extract_strided_slice %718 {offsets = [0, 0], sizes = [2, 1], strides = [1, 1]} : vector<2x3xf32> to vector<2x1xf32>
    %914 = vector.broadcast %913 : vector<2x1xf32> to vector<2x12xf32>
    %915 = arith.mulf %914, %73 : vector<2x12xf32>
    %916 = arith.addf %109, %915 : vector<2x12xf32>
    %917 = vector.extract_strided_slice %718 {offsets = [0, 1], sizes = [2, 1], strides = [1, 1]} : vector<2x3xf32> to vector<2x1xf32>
    %918 = vector.broadcast %917 : vector<2x1xf32> to vector<2x12xf32>
    %919 = arith.mulf %918, %76 : vector<2x12xf32>
    %920 = arith.addf %916, %919 : vector<2x12xf32>
    %921 = vector.extract_strided_slice %718 {offsets = [0, 2], sizes = [2, 1], strides = [1, 1]} : vector<2x3xf32> to vector<2x1xf32>
    %922 = vector.broadcast %921 : vector<2x1xf32> to vector<2x12xf32>
    %923 = arith.mulf %922, %79 : vector<2x12xf32>
    %924 = arith.addf %920, %923 : vector<2x12xf32>
    %925 = vector.extract_strided_slice %759 {offsets = [0, 0], sizes = [2, 1], strides = [1, 1]} : vector<2x3xf32> to vector<2x1xf32>
    %926 = vector.broadcast %925 : vector<2x1xf32> to vector<2x12xf32>
    %927 = arith.mulf %926, %37 : vector<2x12xf32>
    %928 = arith.addf %924, %927 : vector<2x12xf32>
    %929 = vector.extract_strided_slice %759 {offsets = [0, 1], sizes = [2, 1], strides = [1, 1]} : vector<2x3xf32> to vector<2x1xf32>
    %930 = vector.broadcast %929 : vector<2x1xf32> to vector<2x12xf32>
    %931 = arith.mulf %930, %40 : vector<2x12xf32>
    %932 = arith.addf %928, %931 : vector<2x12xf32>
    %933 = vector.extract_strided_slice %759 {offsets = [0, 2], sizes = [2, 1], strides = [1, 1]} : vector<2x3xf32> to vector<2x1xf32>
    %934 = vector.broadcast %933 : vector<2x1xf32> to vector<2x12xf32>
    %935 = arith.mulf %934, %43 : vector<2x12xf32>
    %936 = arith.addf %932, %935 : vector<2x12xf32>
    %cst_75 = arith.constant 5.000000e-01 : f32
    %937 = vector.broadcast %cst_75 : f32 to vector<2x12xf32>
    %938 = arith.mulf %937, %936 : vector<2x12xf32>
    %939 = math.tanh %938 : vector<2x12xf32>
    %cst_76 = arith.constant 1.000000e+00 : f32
    %940 = vector.broadcast %cst_76 : f32 to vector<2x12xf32>
    %941 = arith.addf %940, %939 : vector<2x12xf32>
    %cst_77 = arith.constant 5.000000e-01 : f32
    %942 = vector.broadcast %cst_77 : f32 to vector<2x12xf32>
    %943 = arith.mulf %942, %941 : vector<2x12xf32>
    %944 = math.tanh %936 : vector<2x12xf32>
    %945 = vector.extract_strided_slice %943 {offsets = [0, 0], sizes = [2, 3], strides = [1, 1]} : vector<2x12xf32> to vector<2x3xf32>
    %946 = vector.extract_strided_slice %943 {offsets = [0, 3], sizes = [2, 3], strides = [1, 1]} : vector<2x12xf32> to vector<2x3xf32>
    %947 = vector.extract_strided_slice %944 {offsets = [0, 6], sizes = [2, 3], strides = [1, 1]} : vector<2x12xf32> to vector<2x3xf32>
    %948 = vector.extract_strided_slice %943 {offsets = [0, 9], sizes = [2, 3], strides = [1, 1]} : vector<2x12xf32> to vector<2x3xf32>
    %949 = arith.mulf %946, %757 : vector<2x3xf32>
    %950 = arith.mulf %945, %947 : vector<2x3xf32>
    %951 = arith.addf %949, %950 : vector<2x3xf32>
    %952 = math.tanh %951 : vector<2x3xf32>
    %953 = arith.mulf %948, %952 : vector<2x3xf32>
    %954 = vector.extract_strided_slice %759 {offsets = [0, 0], sizes = [2, 1], strides = [1, 1]} : vector<2x3xf32> to vector<2x1xf32>
    %955 = vector.broadcast %954 : vector<2x1xf32> to vector<2x12xf32>
    %956 = arith.mulf %955, %82 : vector<2x12xf32>
    %957 = arith.addf %112, %956 : vector<2x12xf32>
    %958 = vector.extract_strided_slice %759 {offsets = [0, 1], sizes = [2, 1], strides = [1, 1]} : vector<2x3xf32> to vector<2x1xf32>
    %959 = vector.broadcast %958 : vector<2x1xf32> to vector<2x12xf32>
    %960 = arith.mulf %959, %85 : vector<2x12xf32>
    %961 = arith.addf %957, %960 : vector<2x12xf32>
    %962 = vector.extract_strided_slice %759 {offsets = [0, 2], sizes = [2, 1], strides = [1, 1]} : vector<2x3xf32> to vector<2x1xf32>
    %963 = vector.broadcast %962 : vector<2x1xf32> to vector<2x12xf32>
    %964 = arith.mulf %963, %88 : vector<2x12xf32>
    %965 = arith.addf %961, %964 : vector<2x12xf32>
    %966 = vector.extract_strided_slice %800 {offsets = [0, 0], sizes = [2, 1], strides = [1, 1]} : vector<2x3xf32> to vector<2x1xf32>
    %967 = vector.broadcast %966 : vector<2x1xf32> to vector<2x12xf32>
    %968 = arith.mulf %967, %46 : vector<2x12xf32>
    %969 = arith.addf %965, %968 : vector<2x12xf32>
    %970 = vector.extract_strided_slice %800 {offsets = [0, 1], sizes = [2, 1], strides = [1, 1]} : vector<2x3xf32> to vector<2x1xf32>
    %971 = vector.broadcast %970 : vector<2x1xf32> to vector<2x12xf32>
    %972 = arith.mulf %971, %49 : vector<2x12xf32>
    %973 = arith.addf %969, %972 : vector<2x12xf32>
    %974 = vector.extract_strided_slice %800 {offsets = [0, 2], sizes = [2, 1], strides = [1, 1]} : vector<2x3xf32> to vector<2x1xf32>
    %975 = vector.broadcast %974 : vector<2x1xf32> to vector<2x12xf32>
    %976 = arith.mulf %975, %52 : vector<2x12xf32>
    %977 = arith.addf %973, %976 : vector<2x12xf32>
    %cst_78 = arith.constant 5.000000e-01 : f32
    %978 = vector.broadcast %cst_78 : f32 to vector<2x12xf32>
    %979 = arith.mulf %978, %977 : vector<2x12xf32>
    %980 = math.tanh %979 : vector<2x12xf32>
    %cst_79 = arith.constant 1.000000e+00 : f32
    %981 = vector.broadcast %cst_79 : f32 to vector<2x12xf32>
    %982 = arith.addf %981, %980 : vector<2x12xf32>
    %cst_80 = arith.constant 5.000000e-01 : f32
    %983 = vector.broadcast %cst_80 : f32 to vector<2x12xf32>
    %984 = arith.mulf %983, %982 : vector<2x12xf32>
    %985 = math.tanh %977 : vector<2x12xf32>
    %986 = vector.extract_strided_slice %984 {offsets = [0, 0], sizes = [2, 3], strides = [1, 1]} : vector<2x12xf32> to vector<2x3xf32>
    %987 = vector.extract_strided_slice %984 {offsets = [0, 3], sizes = [2, 3], strides = [1, 1]} : vector<2x12xf32> to vector<2x3xf32>
    %988 = vector.extract_strided_slice %985 {offsets = [0, 6], sizes = [2, 3], strides = [1, 1]} : vector<2x12xf32> to vector<2x3xf32>
    %989 = vector.extract_strided_slice %984 {offsets = [0, 9], sizes = [2, 3], strides = [1, 1]} : vector<2x12xf32> to vector<2x3xf32>
    %990 = arith.mulf %987, %798 : vector<2x3xf32>
    %991 = arith.mulf %986, %988 : vector<2x3xf32>
    %992 = arith.addf %990, %991 : vector<2x3xf32>
    %993 = math.tanh %992 : vector<2x3xf32>
    %994 = arith.mulf %989, %993 : vector<2x3xf32>
    %995 = vector.extract_strided_slice %800 {offsets = [0, 0], sizes = [2, 1], strides = [1, 1]} : vector<2x3xf32> to vector<2x1xf32>
    %996 = vector.broadcast %995 : vector<2x1xf32> to vector<2x12xf32>
    %997 = arith.mulf %996, %91 : vector<2x12xf32>
    %998 = arith.addf %115, %997 : vector<2x12xf32>
    %999 = vector.extract_strided_slice %800 {offsets = [0, 1], sizes = [2, 1], strides = [1, 1]} : vector<2x3xf32> to vector<2x1xf32>
    %1000 = vector.broadcast %999 : vector<2x1xf32> to vector<2x12xf32>
    %1001 = arith.mulf %1000, %94 : vector<2x12xf32>
    %1002 = arith.addf %998, %1001 : vector<2x12xf32>
    %1003 = vector.extract_strided_slice %800 {offsets = [0, 2], sizes = [2, 1], strides = [1, 1]} : vector<2x3xf32> to vector<2x1xf32>
    %1004 = vector.broadcast %1003 : vector<2x1xf32> to vector<2x12xf32>
    %1005 = arith.mulf %1004, %97 : vector<2x12xf32>
    %1006 = arith.addf %1002, %1005 : vector<2x12xf32>
    %1007 = vector.extract_strided_slice %841 {offsets = [0, 0], sizes = [2, 1], strides = [1, 1]} : vector<2x3xf32> to vector<2x1xf32>
    %1008 = vector.broadcast %1007 : vector<2x1xf32> to vector<2x12xf32>
    %1009 = arith.mulf %1008, %55 : vector<2x12xf32>
    %1010 = arith.addf %1006, %1009 : vector<2x12xf32>
    %1011 = vector.extract_strided_slice %841 {offsets = [0, 1], sizes = [2, 1], strides = [1, 1]} : vector<2x3xf32> to vector<2x1xf32>
    %1012 = vector.broadcast %1011 : vector<2x1xf32> to vector<2x12xf32>
    %1013 = arith.mulf %1012, %58 : vector<2x12xf32>
    %1014 = arith.addf %1010, %1013 : vector<2x12xf32>
    %1015 = vector.extract_strided_slice %841 {offsets = [0, 2], sizes = [2, 1], strides = [1, 1]} : vector<2x3xf32> to vector<2x1xf32>
    %1016 = vector.broadcast %1015 : vector<2x1xf32> to vector<2x12xf32>
    %1017 = arith.mulf %1016, %61 : vector<2x12xf32>
    %1018 = arith.addf %1014, %1017 : vector<2x12xf32>
    %cst_81 = arith.constant 5.000000e-01 : f32
    %1019 = vector.broadcast %cst_81 : f32 to vector<2x12xf32>
    %1020 = arith.mulf %1019, %1018 : vector<2x12xf32>
    %1021 = math.tanh %1020 : vector<2x12xf32>
    %cst_82 = arith.constant 1.000000e+00 : f32
    %1022 = vector.broadcast %cst_82 : f32 to vector<2x12xf32>
    %1023 = arith.addf %1022, %1021 : vector<2x12xf32>
    %cst_83 = arith.constant 5.000000e-01 : f32
    %1024 = vector.broadcast %cst_83 : f32 to vector<2x12xf32>
    %1025 = arith.mulf %1024, %1023 : vector<2x12xf32>
    %1026 = math.tanh %1018 : vector<2x12xf32>
    %1027 = vector.extract_strided_slice %1025 {offsets = [0, 0], sizes = [2, 3], strides = [1, 1]} : vector<2x12xf32> to vector<2x3xf32>
    %1028 = vector.extract_strided_slice %1025 {offsets = [0, 3], sizes = [2, 3], strides = [1, 1]} : vector<2x12xf32> to vector<2x3xf32>
    %1029 = vector.extract_strided_slice %1026 {offsets = [0, 6], sizes = [2, 3], strides = [1, 1]} : vector<2x12xf32> to vector<2x3xf32>
    %1030 = vector.extract_strided_slice %1025 {offsets = [0, 9], sizes = [2, 3], strides = [1, 1]} : vector<2x12xf32> to vector<2x3xf32>
    %1031 = arith.mulf %1028, %839 : vector<2x3xf32>
    %1032 = arith.mulf %1027, %1029 : vector<2x3xf32>
    %1033 = arith.addf %1031, %1032 : vector<2x3xf32>
    %1034 = math.tanh %1033 : vector<2x3xf32>
    %1035 = arith.mulf %1030, %1034 : vector<2x3xf32>
    %1036 = vector.extract_strided_slice %841 {offsets = [0, 0], sizes = [2, 1], strides = [1, 1]} : vector<2x3xf32> to vector<2x1xf32>
    %1037 = vector.broadcast %1036 : vector<2x1xf32> to vector<2x12xf32>
    %1038 = arith.mulf %1037, %100 : vector<2x12xf32>
    %1039 = arith.addf %118, %1038 : vector<2x12xf32>
    %1040 = vector.extract_strided_slice %841 {offsets = [0, 1], sizes = [2, 1], strides = [1, 1]} : vector<2x3xf32> to vector<2x1xf32>
    %1041 = vector.broadcast %1040 : vector<2x1xf32> to vector<2x12xf32>
    %1042 = arith.mulf %1041, %103 : vector<2x12xf32>
    %1043 = arith.addf %1039, %1042 : vector<2x12xf32>
    %1044 = vector.extract_strided_slice %841 {offsets = [0, 2], sizes = [2, 1], strides = [1, 1]} : vector<2x3xf32> to vector<2x1xf32>
    %1045 = vector.broadcast %1044 : vector<2x1xf32> to vector<2x12xf32>
    %1046 = arith.mulf %1045, %106 : vector<2x12xf32>
    %1047 = arith.addf %1043, %1046 : vector<2x12xf32>
    %1048 = vector.extract_strided_slice %882 {offsets = [0, 0], sizes = [2, 1], strides = [1, 1]} : vector<2x3xf32> to vector<2x1xf32>
    %1049 = vector.broadcast %1048 : vector<2x1xf32> to vector<2x12xf32>
    %1050 = arith.mulf %1049, %64 : vector<2x12xf32>
    %1051 = arith.addf %1047, %1050 : vector<2x12xf32>
    %1052 = vector.extract_strided_slice %882 {offsets = [0, 1], sizes = [2, 1], strides = [1, 1]} : vector<2x3xf32> to vector<2x1xf32>
    %1053 = vector.broadcast %1052 : vector<2x1xf32> to vector<2x12xf32>
    %1054 = arith.mulf %1053, %67 : vector<2x12xf32>
    %1055 = arith.addf %1051, %1054 : vector<2x12xf32>
    %1056 = vector.extract_strided_slice %882 {offsets = [0, 2], sizes = [2, 1], strides = [1, 1]} : vector<2x3xf32> to vector<2x1xf32>
    %1057 = vector.broadcast %1056 : vector<2x1xf32> to vector<2x12xf32>
    %1058 = arith.mulf %1057, %70 : vector<2x12xf32>
    %1059 = arith.addf %1055, %1058 : vector<2x12xf32>
    %cst_84 = arith.constant 5.000000e-01 : f32
    %1060 = vector.broadcast %cst_84 : f32 to vector<2x12xf32>
    %1061 = arith.mulf %1060, %1059 : vector<2x12xf32>
    %1062 = math.tanh %1061 : vector<2x12xf32>
    %cst_85 = arith.constant 1.000000e+00 : f32
    %1063 = vector.broadcast %cst_85 : f32 to vector<2x12xf32>
    %1064 = arith.addf %1063, %1062 : vector<2x12xf32>
    %cst_86 = arith.constant 5.000000e-01 : f32
    %1065 = vector.broadcast %cst_86 : f32 to vector<2x12xf32>
    %1066 = arith.mulf %1065, %1064 : vector<2x12xf32>
    %1067 = math.tanh %1059 : vector<2x12xf32>
    %1068 = vector.extract_strided_slice %1066 {offsets = [0, 0], sizes = [2, 3], strides = [1, 1]} : vector<2x12xf32> to vector<2x3xf32>
    %1069 = vector.extract_strided_slice %1066 {offsets = [0, 3], sizes = [2, 3], strides = [1, 1]} : vector<2x12xf32> to vector<2x3xf32>
    %1070 = vector.extract_strided_slice %1067 {offsets = [0, 6], sizes = [2, 3], strides = [1, 1]} : vector<2x12xf32> to vector<2x3xf32>
    %1071 = vector.extract_strided_slice %1066 {offsets = [0, 9], sizes = [2, 3], strides = [1, 1]} : vector<2x12xf32> to vector<2x3xf32>
    %1072 = arith.mulf %1069, %880 : vector<2x3xf32>
    %1073 = arith.mulf %1068, %1070 : vector<2x3xf32>
    %1074 = arith.addf %1072, %1073 : vector<2x3xf32>
    %1075 = math.tanh %1074 : vector<2x3xf32>
    %1076 = arith.mulf %1071, %1075 : vector<2x3xf32>
    %1077 = vector.extract_strided_slice %25 {offsets = [14, 0], sizes = [2, 12], strides = [1, 1]} : vector<16x12xf32> to vector<2x12xf32>
    %1078 = vector.extract_strided_slice %912 {offsets = [0, 0], sizes = [2, 1], strides = [1, 1]} : vector<2x3xf32> to vector<2x1xf32>
    %1079 = vector.broadcast %1078 : vector<2x1xf32> to vector<2x12xf32>
    %1080 = arith.mulf %1079, %28 : vector<2x12xf32>
    %1081 = arith.addf %1077, %1080 : vector<2x12xf32>
    %1082 = vector.extract_strided_slice %912 {offsets = [0, 1], sizes = [2, 1], strides = [1, 1]} : vector<2x3xf32> to vector<2x1xf32>
    %1083 = vector.broadcast %1082 : vector<2x1xf32> to vector<2x12xf32>
    %1084 = arith.mulf %1083, %31 : vector<2x12xf32>
    %1085 = arith.addf %1081, %1084 : vector<2x12xf32>
    %1086 = vector.extract_strided_slice %912 {offsets = [0, 2], sizes = [2, 1], strides = [1, 1]} : vector<2x3xf32> to vector<2x1xf32>
    %1087 = vector.broadcast %1086 : vector<2x1xf32> to vector<2x12xf32>
    %1088 = arith.mulf %1087, %34 : vector<2x12xf32>
    %1089 = arith.addf %1085, %1088 : vector<2x12xf32>
    %cst_87 = arith.constant 5.000000e-01 : f32
    %1090 = vector.broadcast %cst_87 : f32 to vector<2x12xf32>
    %1091 = arith.mulf %1090, %1089 : vector<2x12xf32>
    %1092 = math.tanh %1091 : vector<2x12xf32>
    %cst_88 = arith.constant 1.000000e+00 : f32
    %1093 = vector.broadcast %cst_88 : f32 to vector<2x12xf32>
    %1094 = arith.addf %1093, %1092 : vector<2x12xf32>
    %cst_89 = arith.constant 5.000000e-01 : f32
    %1095 = vector.broadcast %cst_89 : f32 to vector<2x12xf32>
    %1096 = arith.mulf %1095, %1094 : vector<2x12xf32>
    %1097 = math.tanh %1089 : vector<2x12xf32>
    %1098 = vector.extract_strided_slice %1096 {offsets = [0, 0], sizes = [2, 3], strides = [1, 1]} : vector<2x12xf32> to vector<2x3xf32>
    %1099 = vector.extract_strided_slice %1096 {offsets = [0, 3], sizes = [2, 3], strides = [1, 1]} : vector<2x12xf32> to vector<2x3xf32>
    %1100 = vector.extract_strided_slice %1097 {offsets = [0, 6], sizes = [2, 3], strides = [1, 1]} : vector<2x12xf32> to vector<2x3xf32>
    %1101 = vector.extract_strided_slice %1096 {offsets = [0, 9], sizes = [2, 3], strides = [1, 1]} : vector<2x12xf32> to vector<2x3xf32>
    %1102 = arith.mulf %1099, %910 : vector<2x3xf32>
    %1103 = arith.mulf %1098, %1100 : vector<2x3xf32>
    %1104 = arith.addf %1102, %1103 : vector<2x3xf32>
    %1105 = math.tanh %1104 : vector<2x3xf32>
    %1106 = arith.mulf %1101, %1105 : vector<2x3xf32>
    %1107 = vector.extract_strided_slice %912 {offsets = [0, 0], sizes = [2, 1], strides = [1, 1]} : vector<2x3xf32> to vector<2x1xf32>
    %1108 = vector.broadcast %1107 : vector<2x1xf32> to vector<2x12xf32>
    %1109 = arith.mulf %1108, %73 : vector<2x12xf32>
    %1110 = arith.addf %109, %1109 : vector<2x12xf32>
    %1111 = vector.extract_strided_slice %912 {offsets = [0, 1], sizes = [2, 1], strides = [1, 1]} : vector<2x3xf32> to vector<2x1xf32>
    %1112 = vector.broadcast %1111 : vector<2x1xf32> to vector<2x12xf32>
    %1113 = arith.mulf %1112, %76 : vector<2x12xf32>
    %1114 = arith.addf %1110, %1113 : vector<2x12xf32>
    %1115 = vector.extract_strided_slice %912 {offsets = [0, 2], sizes = [2, 1], strides = [1, 1]} : vector<2x3xf32> to vector<2x1xf32>
    %1116 = vector.broadcast %1115 : vector<2x1xf32> to vector<2x12xf32>
    %1117 = arith.mulf %1116, %79 : vector<2x12xf32>
    %1118 = arith.addf %1114, %1117 : vector<2x12xf32>
    %1119 = vector.extract_strided_slice %953 {offsets = [0, 0], sizes = [2, 1], strides = [1, 1]} : vector<2x3xf32> to vector<2x1xf32>
    %1120 = vector.broadcast %1119 : vector<2x1xf32> to vector<2x12xf32>
    %1121 = arith.mulf %1120, %37 : vector<2x12xf32>
    %1122 = arith.addf %1118, %1121 : vector<2x12xf32>
    %1123 = vector.extract_strided_slice %953 {offsets = [0, 1], sizes = [2, 1], strides = [1, 1]} : vector<2x3xf32> to vector<2x1xf32>
    %1124 = vector.broadcast %1123 : vector<2x1xf32> to vector<2x12xf32>
    %1125 = arith.mulf %1124, %40 : vector<2x12xf32>
    %1126 = arith.addf %1122, %1125 : vector<2x12xf32>
    %1127 = vector.extract_strided_slice %953 {offsets = [0, 2], sizes = [2, 1], strides = [1, 1]} : vector<2x3xf32> to vector<2x1xf32>
    %1128 = vector.broadcast %1127 : vector<2x1xf32> to vector<2x12xf32>
    %1129 = arith.mulf %1128, %43 : vector<2x12xf32>
    %1130 = arith.addf %1126, %1129 : vector<2x12xf32>
    %cst_90 = arith.constant 5.000000e-01 : f32
    %1131 = vector.broadcast %cst_90 : f32 to vector<2x12xf32>
    %1132 = arith.mulf %1131, %1130 : vector<2x12xf32>
    %1133 = math.tanh %1132 : vector<2x12xf32>
    %cst_91 = arith.constant 1.000000e+00 : f32
    %1134 = vector.broadcast %cst_91 : f32 to vector<2x12xf32>
    %1135 = arith.addf %1134, %1133 : vector<2x12xf32>
    %cst_92 = arith.constant 5.000000e-01 : f32
    %1136 = vector.broadcast %cst_92 : f32 to vector<2x12xf32>
    %1137 = arith.mulf %1136, %1135 : vector<2x12xf32>
    %1138 = math.tanh %1130 : vector<2x12xf32>
    %1139 = vector.extract_strided_slice %1137 {offsets = [0, 0], sizes = [2, 3], strides = [1, 1]} : vector<2x12xf32> to vector<2x3xf32>
    %1140 = vector.extract_strided_slice %1137 {offsets = [0, 3], sizes = [2, 3], strides = [1, 1]} : vector<2x12xf32> to vector<2x3xf32>
    %1141 = vector.extract_strided_slice %1138 {offsets = [0, 6], sizes = [2, 3], strides = [1, 1]} : vector<2x12xf32> to vector<2x3xf32>
    %1142 = vector.extract_strided_slice %1137 {offsets = [0, 9], sizes = [2, 3], strides = [1, 1]} : vector<2x12xf32> to vector<2x3xf32>
    %1143 = arith.mulf %1140, %951 : vector<2x3xf32>
    %1144 = arith.mulf %1139, %1141 : vector<2x3xf32>
    %1145 = arith.addf %1143, %1144 : vector<2x3xf32>
    %1146 = math.tanh %1145 : vector<2x3xf32>
    %1147 = arith.mulf %1142, %1146 : vector<2x3xf32>
    %1148 = vector.extract_strided_slice %953 {offsets = [0, 0], sizes = [2, 1], strides = [1, 1]} : vector<2x3xf32> to vector<2x1xf32>
    %1149 = vector.broadcast %1148 : vector<2x1xf32> to vector<2x12xf32>
    %1150 = arith.mulf %1149, %82 : vector<2x12xf32>
    %1151 = arith.addf %112, %1150 : vector<2x12xf32>
    %1152 = vector.extract_strided_slice %953 {offsets = [0, 1], sizes = [2, 1], strides = [1, 1]} : vector<2x3xf32> to vector<2x1xf32>
    %1153 = vector.broadcast %1152 : vector<2x1xf32> to vector<2x12xf32>
    %1154 = arith.mulf %1153, %85 : vector<2x12xf32>
    %1155 = arith.addf %1151, %1154 : vector<2x12xf32>
    %1156 = vector.extract_strided_slice %953 {offsets = [0, 2], sizes = [2, 1], strides = [1, 1]} : vector<2x3xf32> to vector<2x1xf32>
    %1157 = vector.broadcast %1156 : vector<2x1xf32> to vector<2x12xf32>
    %1158 = arith.mulf %1157, %88 : vector<2x12xf32>
    %1159 = arith.addf %1155, %1158 : vector<2x12xf32>
    %1160 = vector.extract_strided_slice %994 {offsets = [0, 0], sizes = [2, 1], strides = [1, 1]} : vector<2x3xf32> to vector<2x1xf32>
    %1161 = vector.broadcast %1160 : vector<2x1xf32> to vector<2x12xf32>
    %1162 = arith.mulf %1161, %46 : vector<2x12xf32>
    %1163 = arith.addf %1159, %1162 : vector<2x12xf32>
    %1164 = vector.extract_strided_slice %994 {offsets = [0, 1], sizes = [2, 1], strides = [1, 1]} : vector<2x3xf32> to vector<2x1xf32>
    %1165 = vector.broadcast %1164 : vector<2x1xf32> to vector<2x12xf32>
    %1166 = arith.mulf %1165, %49 : vector<2x12xf32>
    %1167 = arith.addf %1163, %1166 : vector<2x12xf32>
    %1168 = vector.extract_strided_slice %994 {offsets = [0, 2], sizes = [2, 1], strides = [1, 1]} : vector<2x3xf32> to vector<2x1xf32>
    %1169 = vector.broadcast %1168 : vector<2x1xf32> to vector<2x12xf32>
    %1170 = arith.mulf %1169, %52 : vector<2x12xf32>
    %1171 = arith.addf %1167, %1170 : vector<2x12xf32>
    %cst_93 = arith.constant 5.000000e-01 : f32
    %1172 = vector.broadcast %cst_93 : f32 to vector<2x12xf32>
    %1173 = arith.mulf %1172, %1171 : vector<2x12xf32>
    %1174 = math.tanh %1173 : vector<2x12xf32>
    %cst_94 = arith.constant 1.000000e+00 : f32
    %1175 = vector.broadcast %cst_94 : f32 to vector<2x12xf32>
    %1176 = arith.addf %1175, %1174 : vector<2x12xf32>
    %cst_95 = arith.constant 5.000000e-01 : f32
    %1177 = vector.broadcast %cst_95 : f32 to vector<2x12xf32>
    %1178 = arith.mulf %1177, %1176 : vector<2x12xf32>
    %1179 = math.tanh %1171 : vector<2x12xf32>
    %1180 = vector.extract_strided_slice %1178 {offsets = [0, 0], sizes = [2, 3], strides = [1, 1]} : vector<2x12xf32> to vector<2x3xf32>
    %1181 = vector.extract_strided_slice %1178 {offsets = [0, 3], sizes = [2, 3], strides = [1, 1]} : vector<2x12xf32> to vector<2x3xf32>
    %1182 = vector.extract_strided_slice %1179 {offsets = [0, 6], sizes = [2, 3], strides = [1, 1]} : vector<2x12xf32> to vector<2x3xf32>
    %1183 = vector.extract_strided_slice %1178 {offsets = [0, 9], sizes = [2, 3], strides = [1, 1]} : vector<2x12xf32> to vector<2x3xf32>
    %1184 = arith.mulf %1181, %992 : vector<2x3xf32>
    %1185 = arith.mulf %1180, %1182 : vector<2x3xf32>
    %1186 = arith.addf %1184, %1185 : vector<2x3xf32>
    %1187 = math.tanh %1186 : vector<2x3xf32>
    %1188 = arith.mulf %1183, %1187 : vector<2x3xf32>
    %1189 = vector.extract_strided_slice %994 {offsets = [0, 0], sizes = [2, 1], strides = [1, 1]} : vector<2x3xf32> to vector<2x1xf32>
    %1190 = vector.broadcast %1189 : vector<2x1xf32> to vector<2x12xf32>
    %1191 = arith.mulf %1190, %91 : vector<2x12xf32>
    %1192 = arith.addf %115, %1191 : vector<2x12xf32>
    %1193 = vector.extract_strided_slice %994 {offsets = [0, 1], sizes = [2, 1], strides = [1, 1]} : vector<2x3xf32> to vector<2x1xf32>
    %1194 = vector.broadcast %1193 : vector<2x1xf32> to vector<2x12xf32>
    %1195 = arith.mulf %1194, %94 : vector<2x12xf32>
    %1196 = arith.addf %1192, %1195 : vector<2x12xf32>
    %1197 = vector.extract_strided_slice %994 {offsets = [0, 2], sizes = [2, 1], strides = [1, 1]} : vector<2x3xf32> to vector<2x1xf32>
    %1198 = vector.broadcast %1197 : vector<2x1xf32> to vector<2x12xf32>
    %1199 = arith.mulf %1198, %97 : vector<2x12xf32>
    %1200 = arith.addf %1196, %1199 : vector<2x12xf32>
    %1201 = vector.extract_strided_slice %1035 {offsets = [0, 0], sizes = [2, 1], strides = [1, 1]} : vector<2x3xf32> to vector<2x1xf32>
    %1202 = vector.broadcast %1201 : vector<2x1xf32> to vector<2x12xf32>
    %1203 = arith.mulf %1202, %55 : vector<2x12xf32>
    %1204 = arith.addf %1200, %1203 : vector<2x12xf32>
    %1205 = vector.extract_strided_slice %1035 {offsets = [0, 1], sizes = [2, 1], strides = [1, 1]} : vector<2x3xf32> to vector<2x1xf32>
    %1206 = vector.broadcast %1205 : vector<2x1xf32> to vector<2x12xf32>
    %1207 = arith.mulf %1206, %58 : vector<2x12xf32>
    %1208 = arith.addf %1204, %1207 : vector<2x12xf32>
    %1209 = vector.extract_strided_slice %1035 {offsets = [0, 2], sizes = [2, 1], strides = [1, 1]} : vector<2x3xf32> to vector<2x1xf32>
    %1210 = vector.broadcast %1209 : vector<2x1xf32> to vector<2x12xf32>
    %1211 = arith.mulf %1210, %61 : vector<2x12xf32>
    %1212 = arith.addf %1208, %1211 : vector<2x12xf32>
    %cst_96 = arith.constant 5.000000e-01 : f32
    %1213 = vector.broadcast %cst_96 : f32 to vector<2x12xf32>
    %1214 = arith.mulf %1213, %1212 : vector<2x12xf32>
    %1215 = math.tanh %1214 : vector<2x12xf32>
    %cst_97 = arith.constant 1.000000e+00 : f32
    %1216 = vector.broadcast %cst_97 : f32 to vector<2x12xf32>
    %1217 = arith.addf %1216, %1215 : vector<2x12xf32>
    %cst_98 = arith.constant 5.000000e-01 : f32
    %1218 = vector.broadcast %cst_98 : f32 to vector<2x12xf32>
    %1219 = arith.mulf %1218, %1217 : vector<2x12xf32>
    %1220 = math.tanh %1212 : vector<2x12xf32>
    %1221 = vector.extract_strided_slice %1219 {offsets = [0, 0], sizes = [2, 3], strides = [1, 1]} : vector<2x12xf32> to vector<2x3xf32>
    %1222 = vector.extract_strided_slice %1219 {offsets = [0, 3], sizes = [2, 3], strides = [1, 1]} : vector<2x12xf32> to vector<2x3xf32>
    %1223 = vector.extract_strided_slice %1220 {offsets = [0, 6], sizes = [2, 3], strides = [1, 1]} : vector<2x12xf32> to vector<2x3xf32>
    %1224 = vector.extract_strided_slice %1219 {offsets = [0, 9], sizes = [2, 3], strides = [1, 1]} : vector<2x12xf32> to vector<2x3xf32>
    %1225 = arith.mulf %1222, %1033 : vector<2x3xf32>
    %1226 = arith.mulf %1221, %1223 : vector<2x3xf32>
    %1227 = arith.addf %1225, %1226 : vector<2x3xf32>
    %1228 = math.tanh %1227 : vector<2x3xf32>
    %1229 = arith.mulf %1224, %1228 : vector<2x3xf32>
    %1230 = vector.extract_strided_slice %1035 {offsets = [0, 0], sizes = [2, 1], strides = [1, 1]} : vector<2x3xf32> to vector<2x1xf32>
    %1231 = vector.broadcast %1230 : vector<2x1xf32> to vector<2x12xf32>
    %1232 = arith.mulf %1231, %100 : vector<2x12xf32>
    %1233 = arith.addf %118, %1232 : vector<2x12xf32>
    %1234 = vector.extract_strided_slice %1035 {offsets = [0, 1], sizes = [2, 1], strides = [1, 1]} : vector<2x3xf32> to vector<2x1xf32>
    %1235 = vector.broadcast %1234 : vector<2x1xf32> to vector<2x12xf32>
    %1236 = arith.mulf %1235, %103 : vector<2x12xf32>
    %1237 = arith.addf %1233, %1236 : vector<2x12xf32>
    %1238 = vector.extract_strided_slice %1035 {offsets = [0, 2], sizes = [2, 1], strides = [1, 1]} : vector<2x3xf32> to vector<2x1xf32>
    %1239 = vector.broadcast %1238 : vector<2x1xf32> to vector<2x12xf32>
    %1240 = arith.mulf %1239, %106 : vector<2x12xf32>
    %1241 = arith.addf %1237, %1240 : vector<2x12xf32>
    %1242 = vector.extract_strided_slice %1076 {offsets = [0, 0], sizes = [2, 1], strides = [1, 1]} : vector<2x3xf32> to vector<2x1xf32>
    %1243 = vector.broadcast %1242 : vector<2x1xf32> to vector<2x12xf32>
    %1244 = arith.mulf %1243, %64 : vector<2x12xf32>
    %1245 = arith.addf %1241, %1244 : vector<2x12xf32>
    %1246 = vector.extract_strided_slice %1076 {offsets = [0, 1], sizes = [2, 1], strides = [1, 1]} : vector<2x3xf32> to vector<2x1xf32>
    %1247 = vector.broadcast %1246 : vector<2x1xf32> to vector<2x12xf32>
    %1248 = arith.mulf %1247, %67 : vector<2x12xf32>
    %1249 = arith.addf %1245, %1248 : vector<2x12xf32>
    %1250 = vector.extract_strided_slice %1076 {offsets = [0, 2], sizes = [2, 1], strides = [1, 1]} : vector<2x3xf32> to vector<2x1xf32>
    %1251 = vector.broadcast %1250 : vector<2x1xf32> to vector<2x12xf32>
    %1252 = arith.mulf %1251, %70 : vector<2x12xf32>
    %1253 = arith.addf %1249, %1252 : vector<2x12xf32>
    %cst_99 = arith.constant 5.000000e-01 : f32
    %1254 = vector.broadcast %cst_99 : f32 to vector<2x12xf32>
    %1255 = arith.mulf %1254, %1253 : vector<2x12xf32>
    %1256 = math.tanh %1255 : vector<2x12xf32>
    %cst_100 = arith.constant 1.000000e+00 : f32
    %1257 = vector.broadcast %cst_100 : f32 to vector<2x12xf32>
    %1258 = arith.addf %1257, %1256 : vector<2x12xf32>
    %cst_101 = arith.constant 5.000000e-01 : f32
    %1259 = vector.broadcast %cst_101 : f32 to vector<2x12xf32>
    %1260 = arith.mulf %1259, %1258 : vector<2x12xf32>
    %1261 = math.tanh %1253 : vector<2x12xf32>
    %1262 = vector.extract_strided_slice %1260 {offsets = [0, 0], sizes = [2, 3], strides = [1, 1]} : vector<2x12xf32> to vector<2x3xf32>
    %1263 = vector.extract_strided_slice %1260 {offsets = [0, 3], sizes = [2, 3], strides = [1, 1]} : vector<2x12xf32> to vector<2x3xf32>
    %1264 = vector.extract_strided_slice %1261 {offsets = [0, 6], sizes = [2, 3], strides = [1, 1]} : vector<2x12xf32> to vector<2x3xf32>
    %1265 = vector.extract_strided_slice %1260 {offsets = [0, 9], sizes = [2, 3], strides = [1, 1]} : vector<2x12xf32> to vector<2x3xf32>
    %1266 = arith.mulf %1263, %1074 : vector<2x3xf32>
    %1267 = arith.mulf %1262, %1264 : vector<2x3xf32>
    %1268 = arith.addf %1266, %1267 : vector<2x3xf32>
    %1269 = math.tanh %1268 : vector<2x3xf32>
    %1270 = arith.mulf %1265, %1269 : vector<2x3xf32>
    %1271 = vector.extract_strided_slice %1106 {offsets = [0, 0], sizes = [2, 1], strides = [1, 1]} : vector<2x3xf32> to vector<2x1xf32>
    %1272 = vector.broadcast %1271 : vector<2x1xf32> to vector<2x12xf32>
    %1273 = arith.mulf %1272, %73 : vector<2x12xf32>
    %1274 = arith.addf %109, %1273 : vector<2x12xf32>
    %1275 = vector.extract_strided_slice %1106 {offsets = [0, 1], sizes = [2, 1], strides = [1, 1]} : vector<2x3xf32> to vector<2x1xf32>
    %1276 = vector.broadcast %1275 : vector<2x1xf32> to vector<2x12xf32>
    %1277 = arith.mulf %1276, %76 : vector<2x12xf32>
    %1278 = arith.addf %1274, %1277 : vector<2x12xf32>
    %1279 = vector.extract_strided_slice %1106 {offsets = [0, 2], sizes = [2, 1], strides = [1, 1]} : vector<2x3xf32> to vector<2x1xf32>
    %1280 = vector.broadcast %1279 : vector<2x1xf32> to vector<2x12xf32>
    %1281 = arith.mulf %1280, %79 : vector<2x12xf32>
    %1282 = arith.addf %1278, %1281 : vector<2x12xf32>
    %1283 = vector.extract_strided_slice %1147 {offsets = [0, 0], sizes = [2, 1], strides = [1, 1]} : vector<2x3xf32> to vector<2x1xf32>
    %1284 = vector.broadcast %1283 : vector<2x1xf32> to vector<2x12xf32>
    %1285 = arith.mulf %1284, %37 : vector<2x12xf32>
    %1286 = arith.addf %1282, %1285 : vector<2x12xf32>
    %1287 = vector.extract_strided_slice %1147 {offsets = [0, 1], sizes = [2, 1], strides = [1, 1]} : vector<2x3xf32> to vector<2x1xf32>
    %1288 = vector.broadcast %1287 : vector<2x1xf32> to vector<2x12xf32>
    %1289 = arith.mulf %1288, %40 : vector<2x12xf32>
    %1290 = arith.addf %1286, %1289 : vector<2x12xf32>
    %1291 = vector.extract_strided_slice %1147 {offsets = [0, 2], sizes = [2, 1], strides = [1, 1]} : vector<2x3xf32> to vector<2x1xf32>
    %1292 = vector.broadcast %1291 : vector<2x1xf32> to vector<2x12xf32>
    %1293 = arith.mulf %1292, %43 : vector<2x12xf32>
    %1294 = arith.addf %1290, %1293 : vector<2x12xf32>
    %cst_102 = arith.constant 5.000000e-01 : f32
    %1295 = vector.broadcast %cst_102 : f32 to vector<2x12xf32>
    %1296 = arith.mulf %1295, %1294 : vector<2x12xf32>
    %1297 = math.tanh %1296 : vector<2x12xf32>
    %cst_103 = arith.constant 1.000000e+00 : f32
    %1298 = vector.broadcast %cst_103 : f32 to vector<2x12xf32>
    %1299 = arith.addf %1298, %1297 : vector<2x12xf32>
    %cst_104 = arith.constant 5.000000e-01 : f32
    %1300 = vector.broadcast %cst_104 : f32 to vector<2x12xf32>
    %1301 = arith.mulf %1300, %1299 : vector<2x12xf32>
    %1302 = math.tanh %1294 : vector<2x12xf32>
    %1303 = vector.extract_strided_slice %1301 {offsets = [0, 0], sizes = [2, 3], strides = [1, 1]} : vector<2x12xf32> to vector<2x3xf32>
    %1304 = vector.extract_strided_slice %1301 {offsets = [0, 3], sizes = [2, 3], strides = [1, 1]} : vector<2x12xf32> to vector<2x3xf32>
    %1305 = vector.extract_strided_slice %1302 {offsets = [0, 6], sizes = [2, 3], strides = [1, 1]} : vector<2x12xf32> to vector<2x3xf32>
    %1306 = vector.extract_strided_slice %1301 {offsets = [0, 9], sizes = [2, 3], strides = [1, 1]} : vector<2x12xf32> to vector<2x3xf32>
    %1307 = arith.mulf %1304, %1145 : vector<2x3xf32>
    %1308 = arith.mulf %1303, %1305 : vector<2x3xf32>
    %1309 = arith.addf %1307, %1308 : vector<2x3xf32>
    %1310 = math.tanh %1309 : vector<2x3xf32>
    %1311 = arith.mulf %1306, %1310 : vector<2x3xf32>
    %1312 = vector.extract_strided_slice %1147 {offsets = [0, 0], sizes = [2, 1], strides = [1, 1]} : vector<2x3xf32> to vector<2x1xf32>
    %1313 = vector.broadcast %1312 : vector<2x1xf32> to vector<2x12xf32>
    %1314 = arith.mulf %1313, %82 : vector<2x12xf32>
    %1315 = arith.addf %112, %1314 : vector<2x12xf32>
    %1316 = vector.extract_strided_slice %1147 {offsets = [0, 1], sizes = [2, 1], strides = [1, 1]} : vector<2x3xf32> to vector<2x1xf32>
    %1317 = vector.broadcast %1316 : vector<2x1xf32> to vector<2x12xf32>
    %1318 = arith.mulf %1317, %85 : vector<2x12xf32>
    %1319 = arith.addf %1315, %1318 : vector<2x12xf32>
    %1320 = vector.extract_strided_slice %1147 {offsets = [0, 2], sizes = [2, 1], strides = [1, 1]} : vector<2x3xf32> to vector<2x1xf32>
    %1321 = vector.broadcast %1320 : vector<2x1xf32> to vector<2x12xf32>
    %1322 = arith.mulf %1321, %88 : vector<2x12xf32>
    %1323 = arith.addf %1319, %1322 : vector<2x12xf32>
    %1324 = vector.extract_strided_slice %1188 {offsets = [0, 0], sizes = [2, 1], strides = [1, 1]} : vector<2x3xf32> to vector<2x1xf32>
    %1325 = vector.broadcast %1324 : vector<2x1xf32> to vector<2x12xf32>
    %1326 = arith.mulf %1325, %46 : vector<2x12xf32>
    %1327 = arith.addf %1323, %1326 : vector<2x12xf32>
    %1328 = vector.extract_strided_slice %1188 {offsets = [0, 1], sizes = [2, 1], strides = [1, 1]} : vector<2x3xf32> to vector<2x1xf32>
    %1329 = vector.broadcast %1328 : vector<2x1xf32> to vector<2x12xf32>
    %1330 = arith.mulf %1329, %49 : vector<2x12xf32>
    %1331 = arith.addf %1327, %1330 : vector<2x12xf32>
    %1332 = vector.extract_strided_slice %1188 {offsets = [0, 2], sizes = [2, 1], strides = [1, 1]} : vector<2x3xf32> to vector<2x1xf32>
    %1333 = vector.broadcast %1332 : vector<2x1xf32> to vector<2x12xf32>
    %1334 = arith.mulf %1333, %52 : vector<2x12xf32>
    %1335 = arith.addf %1331, %1334 : vector<2x12xf32>
    %cst_105 = arith.constant 5.000000e-01 : f32
    %1336 = vector.broadcast %cst_105 : f32 to vector<2x12xf32>
    %1337 = arith.mulf %1336, %1335 : vector<2x12xf32>
    %1338 = math.tanh %1337 : vector<2x12xf32>
    %cst_106 = arith.constant 1.000000e+00 : f32
    %1339 = vector.broadcast %cst_106 : f32 to vector<2x12xf32>
    %1340 = arith.addf %1339, %1338 : vector<2x12xf32>
    %cst_107 = arith.constant 5.000000e-01 : f32
    %1341 = vector.broadcast %cst_107 : f32 to vector<2x12xf32>
    %1342 = arith.mulf %1341, %1340 : vector<2x12xf32>
    %1343 = math.tanh %1335 : vector<2x12xf32>
    %1344 = vector.extract_strided_slice %1342 {offsets = [0, 0], sizes = [2, 3], strides = [1, 1]} : vector<2x12xf32> to vector<2x3xf32>
    %1345 = vector.extract_strided_slice %1342 {offsets = [0, 3], sizes = [2, 3], strides = [1, 1]} : vector<2x12xf32> to vector<2x3xf32>
    %1346 = vector.extract_strided_slice %1343 {offsets = [0, 6], sizes = [2, 3], strides = [1, 1]} : vector<2x12xf32> to vector<2x3xf32>
    %1347 = vector.extract_strided_slice %1342 {offsets = [0, 9], sizes = [2, 3], strides = [1, 1]} : vector<2x12xf32> to vector<2x3xf32>
    %1348 = arith.mulf %1345, %1186 : vector<2x3xf32>
    %1349 = arith.mulf %1344, %1346 : vector<2x3xf32>
    %1350 = arith.addf %1348, %1349 : vector<2x3xf32>
    %1351 = math.tanh %1350 : vector<2x3xf32>
    %1352 = arith.mulf %1347, %1351 : vector<2x3xf32>
    %1353 = vector.extract_strided_slice %1188 {offsets = [0, 0], sizes = [2, 1], strides = [1, 1]} : vector<2x3xf32> to vector<2x1xf32>
    %1354 = vector.broadcast %1353 : vector<2x1xf32> to vector<2x12xf32>
    %1355 = arith.mulf %1354, %91 : vector<2x12xf32>
    %1356 = arith.addf %115, %1355 : vector<2x12xf32>
    %1357 = vector.extract_strided_slice %1188 {offsets = [0, 1], sizes = [2, 1], strides = [1, 1]} : vector<2x3xf32> to vector<2x1xf32>
    %1358 = vector.broadcast %1357 : vector<2x1xf32> to vector<2x12xf32>
    %1359 = arith.mulf %1358, %94 : vector<2x12xf32>
    %1360 = arith.addf %1356, %1359 : vector<2x12xf32>
    %1361 = vector.extract_strided_slice %1188 {offsets = [0, 2], sizes = [2, 1], strides = [1, 1]} : vector<2x3xf32> to vector<2x1xf32>
    %1362 = vector.broadcast %1361 : vector<2x1xf32> to vector<2x12xf32>
    %1363 = arith.mulf %1362, %97 : vector<2x12xf32>
    %1364 = arith.addf %1360, %1363 : vector<2x12xf32>
    %1365 = vector.extract_strided_slice %1229 {offsets = [0, 0], sizes = [2, 1], strides = [1, 1]} : vector<2x3xf32> to vector<2x1xf32>
    %1366 = vector.broadcast %1365 : vector<2x1xf32> to vector<2x12xf32>
    %1367 = arith.mulf %1366, %55 : vector<2x12xf32>
    %1368 = arith.addf %1364, %1367 : vector<2x12xf32>
    %1369 = vector.extract_strided_slice %1229 {offsets = [0, 1], sizes = [2, 1], strides = [1, 1]} : vector<2x3xf32> to vector<2x1xf32>
    %1370 = vector.broadcast %1369 : vector<2x1xf32> to vector<2x12xf32>
    %1371 = arith.mulf %1370, %58 : vector<2x12xf32>
    %1372 = arith.addf %1368, %1371 : vector<2x12xf32>
    %1373 = vector.extract_strided_slice %1229 {offsets = [0, 2], sizes = [2, 1], strides = [1, 1]} : vector<2x3xf32> to vector<2x1xf32>
    %1374 = vector.broadcast %1373 : vector<2x1xf32> to vector<2x12xf32>
    %1375 = arith.mulf %1374, %61 : vector<2x12xf32>
    %1376 = arith.addf %1372, %1375 : vector<2x12xf32>
    %cst_108 = arith.constant 5.000000e-01 : f32
    %1377 = vector.broadcast %cst_108 : f32 to vector<2x12xf32>
    %1378 = arith.mulf %1377, %1376 : vector<2x12xf32>
    %1379 = math.tanh %1378 : vector<2x12xf32>
    %cst_109 = arith.constant 1.000000e+00 : f32
    %1380 = vector.broadcast %cst_109 : f32 to vector<2x12xf32>
    %1381 = arith.addf %1380, %1379 : vector<2x12xf32>
    %cst_110 = arith.constant 5.000000e-01 : f32
    %1382 = vector.broadcast %cst_110 : f32 to vector<2x12xf32>
    %1383 = arith.mulf %1382, %1381 : vector<2x12xf32>
    %1384 = math.tanh %1376 : vector<2x12xf32>
    %1385 = vector.extract_strided_slice %1383 {offsets = [0, 0], sizes = [2, 3], strides = [1, 1]} : vector<2x12xf32> to vector<2x3xf32>
    %1386 = vector.extract_strided_slice %1383 {offsets = [0, 3], sizes = [2, 3], strides = [1, 1]} : vector<2x12xf32> to vector<2x3xf32>
    %1387 = vector.extract_strided_slice %1384 {offsets = [0, 6], sizes = [2, 3], strides = [1, 1]} : vector<2x12xf32> to vector<2x3xf32>
    %1388 = vector.extract_strided_slice %1383 {offsets = [0, 9], sizes = [2, 3], strides = [1, 1]} : vector<2x12xf32> to vector<2x3xf32>
    %1389 = arith.mulf %1386, %1227 : vector<2x3xf32>
    %1390 = arith.mulf %1385, %1387 : vector<2x3xf32>
    %1391 = arith.addf %1389, %1390 : vector<2x3xf32>
    %1392 = math.tanh %1391 : vector<2x3xf32>
    %1393 = arith.mulf %1388, %1392 : vector<2x3xf32>
    %1394 = vector.extract_strided_slice %1229 {offsets = [0, 0], sizes = [2, 1], strides = [1, 1]} : vector<2x3xf32> to vector<2x1xf32>
    %1395 = vector.broadcast %1394 : vector<2x1xf32> to vector<2x12xf32>
    %1396 = arith.mulf %1395, %100 : vector<2x12xf32>
    %1397 = arith.addf %118, %1396 : vector<2x12xf32>
    %1398 = vector.extract_strided_slice %1229 {offsets = [0, 1], sizes = [2, 1], strides = [1, 1]} : vector<2x3xf32> to vector<2x1xf32>
    %1399 = vector.broadcast %1398 : vector<2x1xf32> to vector<2x12xf32>
    %1400 = arith.mulf %1399, %103 : vector<2x12xf32>
    %1401 = arith.addf %1397, %1400 : vector<2x12xf32>
    %1402 = vector.extract_strided_slice %1229 {offsets = [0, 2], sizes = [2, 1], strides = [1, 1]} : vector<2x3xf32> to vector<2x1xf32>
    %1403 = vector.broadcast %1402 : vector<2x1xf32> to vector<2x12xf32>
    %1404 = arith.mulf %1403, %106 : vector<2x12xf32>
    %1405 = arith.addf %1401, %1404 : vector<2x12xf32>
    %1406 = vector.extract_strided_slice %1270 {offsets = [0, 0], sizes = [2, 1], strides = [1, 1]} : vector<2x3xf32> to vector<2x1xf32>
    %1407 = vector.broadcast %1406 : vector<2x1xf32> to vector<2x12xf32>
    %1408 = arith.mulf %1407, %64 : vector<2x12xf32>
    %1409 = arith.addf %1405, %1408 : vector<2x12xf32>
    %1410 = vector.extract_strided_slice %1270 {offsets = [0, 1], sizes = [2, 1], strides = [1, 1]} : vector<2x3xf32> to vector<2x1xf32>
    %1411 = vector.broadcast %1410 : vector<2x1xf32> to vector<2x12xf32>
    %1412 = arith.mulf %1411, %67 : vector<2x12xf32>
    %1413 = arith.addf %1409, %1412 : vector<2x12xf32>
    %1414 = vector.extract_strided_slice %1270 {offsets = [0, 2], sizes = [2, 1], strides = [1, 1]} : vector<2x3xf32> to vector<2x1xf32>
    %1415 = vector.broadcast %1414 : vector<2x1xf32> to vector<2x12xf32>
    %1416 = arith.mulf %1415, %70 : vector<2x12xf32>
    %1417 = arith.addf %1413, %1416 : vector<2x12xf32>
    %cst_111 = arith.constant 5.000000e-01 : f32
    %1418 = vector.broadcast %cst_111 : f32 to vector<2x12xf32>
    %1419 = arith.mulf %1418, %1417 : vector<2x12xf32>
    %1420 = math.tanh %1419 : vector<2x12xf32>
    %cst_112 = arith.constant 1.000000e+00 : f32
    %1421 = vector.broadcast %cst_112 : f32 to vector<2x12xf32>
    %1422 = arith.addf %1421, %1420 : vector<2x12xf32>
    %cst_113 = arith.constant 5.000000e-01 : f32
    %1423 = vector.broadcast %cst_113 : f32 to vector<2x12xf32>
    %1424 = arith.mulf %1423, %1422 : vector<2x12xf32>
    %1425 = math.tanh %1417 : vector<2x12xf32>
    %1426 = vector.extract_strided_slice %1424 {offsets = [0, 0], sizes = [2, 3], strides = [1, 1]} : vector<2x12xf32> to vector<2x3xf32>
    %1427 = vector.extract_strided_slice %1424 {offsets = [0, 3], sizes = [2, 3], strides = [1, 1]} : vector<2x12xf32> to vector<2x3xf32>
    %1428 = vector.extract_strided_slice %1425 {offsets = [0, 6], sizes = [2, 3], strides = [1, 1]} : vector<2x12xf32> to vector<2x3xf32>
    %1429 = vector.extract_strided_slice %1424 {offsets = [0, 9], sizes = [2, 3], strides = [1, 1]} : vector<2x12xf32> to vector<2x3xf32>
    %1430 = arith.mulf %1427, %1268 : vector<2x3xf32>
    %1431 = arith.mulf %1426, %1428 : vector<2x3xf32>
    %1432 = arith.addf %1430, %1431 : vector<2x3xf32>
    %1433 = math.tanh %1432 : vector<2x3xf32>
    %1434 = arith.mulf %1429, %1433 : vector<2x3xf32>
    %1435 = vector.extract_strided_slice %1311 {offsets = [0, 0], sizes = [2, 1], strides = [1, 1]} : vector<2x3xf32> to vector<2x1xf32>
    %1436 = vector.broadcast %1435 : vector<2x1xf32> to vector<2x12xf32>
    %1437 = arith.mulf %1436, %82 : vector<2x12xf32>
    %1438 = arith.addf %112, %1437 : vector<2x12xf32>
    %1439 = vector.extract_strided_slice %1311 {offsets = [0, 1], sizes = [2, 1], strides = [1, 1]} : vector<2x3xf32> to vector<2x1xf32>
    %1440 = vector.broadcast %1439 : vector<2x1xf32> to vector<2x12xf32>
    %1441 = arith.mulf %1440, %85 : vector<2x12xf32>
    %1442 = arith.addf %1438, %1441 : vector<2x12xf32>
    %1443 = vector.extract_strided_slice %1311 {offsets = [0, 2], sizes = [2, 1], strides = [1, 1]} : vector<2x3xf32> to vector<2x1xf32>
    %1444 = vector.broadcast %1443 : vector<2x1xf32> to vector<2x12xf32>
    %1445 = arith.mulf %1444, %88 : vector<2x12xf32>
    %1446 = arith.addf %1442, %1445 : vector<2x12xf32>
    %1447 = vector.extract_strided_slice %1352 {offsets = [0, 0], sizes = [2, 1], strides = [1, 1]} : vector<2x3xf32> to vector<2x1xf32>
    %1448 = vector.broadcast %1447 : vector<2x1xf32> to vector<2x12xf32>
    %1449 = arith.mulf %1448, %46 : vector<2x12xf32>
    %1450 = arith.addf %1446, %1449 : vector<2x12xf32>
    %1451 = vector.extract_strided_slice %1352 {offsets = [0, 1], sizes = [2, 1], strides = [1, 1]} : vector<2x3xf32> to vector<2x1xf32>
    %1452 = vector.broadcast %1451 : vector<2x1xf32> to vector<2x12xf32>
    %1453 = arith.mulf %1452, %49 : vector<2x12xf32>
    %1454 = arith.addf %1450, %1453 : vector<2x12xf32>
    %1455 = vector.extract_strided_slice %1352 {offsets = [0, 2], sizes = [2, 1], strides = [1, 1]} : vector<2x3xf32> to vector<2x1xf32>
    %1456 = vector.broadcast %1455 : vector<2x1xf32> to vector<2x12xf32>
    %1457 = arith.mulf %1456, %52 : vector<2x12xf32>
    %1458 = arith.addf %1454, %1457 : vector<2x12xf32>
    %cst_114 = arith.constant 5.000000e-01 : f32
    %1459 = vector.broadcast %cst_114 : f32 to vector<2x12xf32>
    %1460 = arith.mulf %1459, %1458 : vector<2x12xf32>
    %1461 = math.tanh %1460 : vector<2x12xf32>
    %cst_115 = arith.constant 1.000000e+00 : f32
    %1462 = vector.broadcast %cst_115 : f32 to vector<2x12xf32>
    %1463 = arith.addf %1462, %1461 : vector<2x12xf32>
    %cst_116 = arith.constant 5.000000e-01 : f32
    %1464 = vector.broadcast %cst_116 : f32 to vector<2x12xf32>
    %1465 = arith.mulf %1464, %1463 : vector<2x12xf32>
    %1466 = math.tanh %1458 : vector<2x12xf32>
    %1467 = vector.extract_strided_slice %1465 {offsets = [0, 0], sizes = [2, 3], strides = [1, 1]} : vector<2x12xf32> to vector<2x3xf32>
    %1468 = vector.extract_strided_slice %1465 {offsets = [0, 3], sizes = [2, 3], strides = [1, 1]} : vector<2x12xf32> to vector<2x3xf32>
    %1469 = vector.extract_strided_slice %1466 {offsets = [0, 6], sizes = [2, 3], strides = [1, 1]} : vector<2x12xf32> to vector<2x3xf32>
    %1470 = vector.extract_strided_slice %1465 {offsets = [0, 9], sizes = [2, 3], strides = [1, 1]} : vector<2x12xf32> to vector<2x3xf32>
    %1471 = arith.mulf %1468, %1350 : vector<2x3xf32>
    %1472 = arith.mulf %1467, %1469 : vector<2x3xf32>
    %1473 = arith.addf %1471, %1472 : vector<2x3xf32>
    %1474 = math.tanh %1473 : vector<2x3xf32>
    %1475 = arith.mulf %1470, %1474 : vector<2x3xf32>
    %1476 = vector.extract_strided_slice %1352 {offsets = [0, 0], sizes = [2, 1], strides = [1, 1]} : vector<2x3xf32> to vector<2x1xf32>
    %1477 = vector.broadcast %1476 : vector<2x1xf32> to vector<2x12xf32>
    %1478 = arith.mulf %1477, %91 : vector<2x12xf32>
    %1479 = arith.addf %115, %1478 : vector<2x12xf32>
    %1480 = vector.extract_strided_slice %1352 {offsets = [0, 1], sizes = [2, 1], strides = [1, 1]} : vector<2x3xf32> to vector<2x1xf32>
    %1481 = vector.broadcast %1480 : vector<2x1xf32> to vector<2x12xf32>
    %1482 = arith.mulf %1481, %94 : vector<2x12xf32>
    %1483 = arith.addf %1479, %1482 : vector<2x12xf32>
    %1484 = vector.extract_strided_slice %1352 {offsets = [0, 2], sizes = [2, 1], strides = [1, 1]} : vector<2x3xf32> to vector<2x1xf32>
    %1485 = vector.broadcast %1484 : vector<2x1xf32> to vector<2x12xf32>
    %1486 = arith.mulf %1485, %97 : vector<2x12xf32>
    %1487 = arith.addf %1483, %1486 : vector<2x12xf32>
    %1488 = vector.extract_strided_slice %1393 {offsets = [0, 0], sizes = [2, 1], strides = [1, 1]} : vector<2x3xf32> to vector<2x1xf32>
    %1489 = vector.broadcast %1488 : vector<2x1xf32> to vector<2x12xf32>
    %1490 = arith.mulf %1489, %55 : vector<2x12xf32>
    %1491 = arith.addf %1487, %1490 : vector<2x12xf32>
    %1492 = vector.extract_strided_slice %1393 {offsets = [0, 1], sizes = [2, 1], strides = [1, 1]} : vector<2x3xf32> to vector<2x1xf32>
    %1493 = vector.broadcast %1492 : vector<2x1xf32> to vector<2x12xf32>
    %1494 = arith.mulf %1493, %58 : vector<2x12xf32>
    %1495 = arith.addf %1491, %1494 : vector<2x12xf32>
    %1496 = vector.extract_strided_slice %1393 {offsets = [0, 2], sizes = [2, 1], strides = [1, 1]} : vector<2x3xf32> to vector<2x1xf32>
    %1497 = vector.broadcast %1496 : vector<2x1xf32> to vector<2x12xf32>
    %1498 = arith.mulf %1497, %61 : vector<2x12xf32>
    %1499 = arith.addf %1495, %1498 : vector<2x12xf32>
    %cst_117 = arith.constant 5.000000e-01 : f32
    %1500 = vector.broadcast %cst_117 : f32 to vector<2x12xf32>
    %1501 = arith.mulf %1500, %1499 : vector<2x12xf32>
    %1502 = math.tanh %1501 : vector<2x12xf32>
    %cst_118 = arith.constant 1.000000e+00 : f32
    %1503 = vector.broadcast %cst_118 : f32 to vector<2x12xf32>
    %1504 = arith.addf %1503, %1502 : vector<2x12xf32>
    %cst_119 = arith.constant 5.000000e-01 : f32
    %1505 = vector.broadcast %cst_119 : f32 to vector<2x12xf32>
    %1506 = arith.mulf %1505, %1504 : vector<2x12xf32>
    %1507 = math.tanh %1499 : vector<2x12xf32>
    %1508 = vector.extract_strided_slice %1506 {offsets = [0, 0], sizes = [2, 3], strides = [1, 1]} : vector<2x12xf32> to vector<2x3xf32>
    %1509 = vector.extract_strided_slice %1506 {offsets = [0, 3], sizes = [2, 3], strides = [1, 1]} : vector<2x12xf32> to vector<2x3xf32>
    %1510 = vector.extract_strided_slice %1507 {offsets = [0, 6], sizes = [2, 3], strides = [1, 1]} : vector<2x12xf32> to vector<2x3xf32>
    %1511 = vector.extract_strided_slice %1506 {offsets = [0, 9], sizes = [2, 3], strides = [1, 1]} : vector<2x12xf32> to vector<2x3xf32>
    %1512 = arith.mulf %1509, %1391 : vector<2x3xf32>
    %1513 = arith.mulf %1508, %1510 : vector<2x3xf32>
    %1514 = arith.addf %1512, %1513 : vector<2x3xf32>
    %1515 = math.tanh %1514 : vector<2x3xf32>
    %1516 = arith.mulf %1511, %1515 : vector<2x3xf32>
    %1517 = vector.extract_strided_slice %1393 {offsets = [0, 0], sizes = [2, 1], strides = [1, 1]} : vector<2x3xf32> to vector<2x1xf32>
    %1518 = vector.broadcast %1517 : vector<2x1xf32> to vector<2x12xf32>
    %1519 = arith.mulf %1518, %100 : vector<2x12xf32>
    %1520 = arith.addf %118, %1519 : vector<2x12xf32>
    %1521 = vector.extract_strided_slice %1393 {offsets = [0, 1], sizes = [2, 1], strides = [1, 1]} : vector<2x3xf32> to vector<2x1xf32>
    %1522 = vector.broadcast %1521 : vector<2x1xf32> to vector<2x12xf32>
    %1523 = arith.mulf %1522, %103 : vector<2x12xf32>
    %1524 = arith.addf %1520, %1523 : vector<2x12xf32>
    %1525 = vector.extract_strided_slice %1393 {offsets = [0, 2], sizes = [2, 1], strides = [1, 1]} : vector<2x3xf32> to vector<2x1xf32>
    %1526 = vector.broadcast %1525 : vector<2x1xf32> to vector<2x12xf32>
    %1527 = arith.mulf %1526, %106 : vector<2x12xf32>
    %1528 = arith.addf %1524, %1527 : vector<2x12xf32>
    %1529 = vector.extract_strided_slice %1434 {offsets = [0, 0], sizes = [2, 1], strides = [1, 1]} : vector<2x3xf32> to vector<2x1xf32>
    %1530 = vector.broadcast %1529 : vector<2x1xf32> to vector<2x12xf32>
    %1531 = arith.mulf %1530, %64 : vector<2x12xf32>
    %1532 = arith.addf %1528, %1531 : vector<2x12xf32>
    %1533 = vector.extract_strided_slice %1434 {offsets = [0, 1], sizes = [2, 1], strides = [1, 1]} : vector<2x3xf32> to vector<2x1xf32>
    %1534 = vector.broadcast %1533 : vector<2x1xf32> to vector<2x12xf32>
    %1535 = arith.mulf %1534, %67 : vector<2x12xf32>
    %1536 = arith.addf %1532, %1535 : vector<2x12xf32>
    %1537 = vector.extract_strided_slice %1434 {offsets = [0, 2], sizes = [2, 1], strides = [1, 1]} : vector<2x3xf32> to vector<2x1xf32>
    %1538 = vector.broadcast %1537 : vector<2x1xf32> to vector<2x12xf32>
    %1539 = arith.mulf %1538, %70 : vector<2x12xf32>
    %1540 = arith.addf %1536, %1539 : vector<2x12xf32>
    %cst_120 = arith.constant 5.000000e-01 : f32
    %1541 = vector.broadcast %cst_120 : f32 to vector<2x12xf32>
    %1542 = arith.mulf %1541, %1540 : vector<2x12xf32>
    %1543 = math.tanh %1542 : vector<2x12xf32>
    %cst_121 = arith.constant 1.000000e+00 : f32
    %1544 = vector.broadcast %cst_121 : f32 to vector<2x12xf32>
    %1545 = arith.addf %1544, %1543 : vector<2x12xf32>
    %cst_122 = arith.constant 5.000000e-01 : f32
    %1546 = vector.broadcast %cst_122 : f32 to vector<2x12xf32>
    %1547 = arith.mulf %1546, %1545 : vector<2x12xf32>
    %1548 = math.tanh %1540 : vector<2x12xf32>
    %1549 = vector.extract_strided_slice %1547 {offsets = [0, 0], sizes = [2, 3], strides = [1, 1]} : vector<2x12xf32> to vector<2x3xf32>
    %1550 = vector.extract_strided_slice %1547 {offsets = [0, 3], sizes = [2, 3], strides = [1, 1]} : vector<2x12xf32> to vector<2x3xf32>
    %1551 = vector.extract_strided_slice %1548 {offsets = [0, 6], sizes = [2, 3], strides = [1, 1]} : vector<2x12xf32> to vector<2x3xf32>
    %1552 = vector.extract_strided_slice %1547 {offsets = [0, 9], sizes = [2, 3], strides = [1, 1]} : vector<2x12xf32> to vector<2x3xf32>
    %1553 = arith.mulf %1550, %1432 : vector<2x3xf32>
    %1554 = arith.mulf %1549, %1551 : vector<2x3xf32>
    %1555 = arith.addf %1553, %1554 : vector<2x3xf32>
    %1556 = math.tanh %1555 : vector<2x3xf32>
    %1557 = arith.mulf %1552, %1556 : vector<2x3xf32>
    %1558 = vector.extract_strided_slice %1475 {offsets = [0, 0], sizes = [2, 1], strides = [1, 1]} : vector<2x3xf32> to vector<2x1xf32>
    %1559 = vector.broadcast %1558 : vector<2x1xf32> to vector<2x12xf32>
    %1560 = arith.mulf %1559, %91 : vector<2x12xf32>
    %1561 = arith.addf %115, %1560 : vector<2x12xf32>
    %1562 = vector.extract_strided_slice %1475 {offsets = [0, 1], sizes = [2, 1], strides = [1, 1]} : vector<2x3xf32> to vector<2x1xf32>
    %1563 = vector.broadcast %1562 : vector<2x1xf32> to vector<2x12xf32>
    %1564 = arith.mulf %1563, %94 : vector<2x12xf32>
    %1565 = arith.addf %1561, %1564 : vector<2x12xf32>
    %1566 = vector.extract_strided_slice %1475 {offsets = [0, 2], sizes = [2, 1], strides = [1, 1]} : vector<2x3xf32> to vector<2x1xf32>
    %1567 = vector.broadcast %1566 : vector<2x1xf32> to vector<2x12xf32>
    %1568 = arith.mulf %1567, %97 : vector<2x12xf32>
    %1569 = arith.addf %1565, %1568 : vector<2x12xf32>
    %1570 = vector.extract_strided_slice %1516 {offsets = [0, 0], sizes = [2, 1], strides = [1, 1]} : vector<2x3xf32> to vector<2x1xf32>
    %1571 = vector.broadcast %1570 : vector<2x1xf32> to vector<2x12xf32>
    %1572 = arith.mulf %1571, %55 : vector<2x12xf32>
    %1573 = arith.addf %1569, %1572 : vector<2x12xf32>
    %1574 = vector.extract_strided_slice %1516 {offsets = [0, 1], sizes = [2, 1], strides = [1, 1]} : vector<2x3xf32> to vector<2x1xf32>
    %1575 = vector.broadcast %1574 : vector<2x1xf32> to vector<2x12xf32>
    %1576 = arith.mulf %1575, %58 : vector<2x12xf32>
    %1577 = arith.addf %1573, %1576 : vector<2x12xf32>
    %1578 = vector.extract_strided_slice %1516 {offsets = [0, 2], sizes = [2, 1], strides = [1, 1]} : vector<2x3xf32> to vector<2x1xf32>
    %1579 = vector.broadcast %1578 : vector<2x1xf32> to vector<2x12xf32>
    %1580 = arith.mulf %1579, %61 : vector<2x12xf32>
    %1581 = arith.addf %1577, %1580 : vector<2x12xf32>
    %cst_123 = arith.constant 5.000000e-01 : f32
    %1582 = vector.broadcast %cst_123 : f32 to vector<2x12xf32>
    %1583 = arith.mulf %1582, %1581 : vector<2x12xf32>
    %1584 = math.tanh %1583 : vector<2x12xf32>
    %cst_124 = arith.constant 1.000000e+00 : f32
    %1585 = vector.broadcast %cst_124 : f32 to vector<2x12xf32>
    %1586 = arith.addf %1585, %1584 : vector<2x12xf32>
    %cst_125 = arith.constant 5.000000e-01 : f32
    %1587 = vector.broadcast %cst_125 : f32 to vector<2x12xf32>
    %1588 = arith.mulf %1587, %1586 : vector<2x12xf32>
    %1589 = math.tanh %1581 : vector<2x12xf32>
    %1590 = vector.extract_strided_slice %1588 {offsets = [0, 0], sizes = [2, 3], strides = [1, 1]} : vector<2x12xf32> to vector<2x3xf32>
    %1591 = vector.extract_strided_slice %1588 {offsets = [0, 3], sizes = [2, 3], strides = [1, 1]} : vector<2x12xf32> to vector<2x3xf32>
    %1592 = vector.extract_strided_slice %1589 {offsets = [0, 6], sizes = [2, 3], strides = [1, 1]} : vector<2x12xf32> to vector<2x3xf32>
    %1593 = vector.extract_strided_slice %1588 {offsets = [0, 9], sizes = [2, 3], strides = [1, 1]} : vector<2x12xf32> to vector<2x3xf32>
    %1594 = arith.mulf %1591, %1514 : vector<2x3xf32>
    %1595 = arith.mulf %1590, %1592 : vector<2x3xf32>
    %1596 = arith.addf %1594, %1595 : vector<2x3xf32>
    %1597 = math.tanh %1596 : vector<2x3xf32>
    %1598 = arith.mulf %1593, %1597 : vector<2x3xf32>
    %1599 = vector.extract_strided_slice %1516 {offsets = [0, 0], sizes = [2, 1], strides = [1, 1]} : vector<2x3xf32> to vector<2x1xf32>
    %1600 = vector.broadcast %1599 : vector<2x1xf32> to vector<2x12xf32>
    %1601 = arith.mulf %1600, %100 : vector<2x12xf32>
    %1602 = arith.addf %118, %1601 : vector<2x12xf32>
    %1603 = vector.extract_strided_slice %1516 {offsets = [0, 1], sizes = [2, 1], strides = [1, 1]} : vector<2x3xf32> to vector<2x1xf32>
    %1604 = vector.broadcast %1603 : vector<2x1xf32> to vector<2x12xf32>
    %1605 = arith.mulf %1604, %103 : vector<2x12xf32>
    %1606 = arith.addf %1602, %1605 : vector<2x12xf32>
    %1607 = vector.extract_strided_slice %1516 {offsets = [0, 2], sizes = [2, 1], strides = [1, 1]} : vector<2x3xf32> to vector<2x1xf32>
    %1608 = vector.broadcast %1607 : vector<2x1xf32> to vector<2x12xf32>
    %1609 = arith.mulf %1608, %106 : vector<2x12xf32>
    %1610 = arith.addf %1606, %1609 : vector<2x12xf32>
    %1611 = vector.extract_strided_slice %1557 {offsets = [0, 0], sizes = [2, 1], strides = [1, 1]} : vector<2x3xf32> to vector<2x1xf32>
    %1612 = vector.broadcast %1611 : vector<2x1xf32> to vector<2x12xf32>
    %1613 = arith.mulf %1612, %64 : vector<2x12xf32>
    %1614 = arith.addf %1610, %1613 : vector<2x12xf32>
    %1615 = vector.extract_strided_slice %1557 {offsets = [0, 1], sizes = [2, 1], strides = [1, 1]} : vector<2x3xf32> to vector<2x1xf32>
    %1616 = vector.broadcast %1615 : vector<2x1xf32> to vector<2x12xf32>
    %1617 = arith.mulf %1616, %67 : vector<2x12xf32>
    %1618 = arith.addf %1614, %1617 : vector<2x12xf32>
    %1619 = vector.extract_strided_slice %1557 {offsets = [0, 2], sizes = [2, 1], strides = [1, 1]} : vector<2x3xf32> to vector<2x1xf32>
    %1620 = vector.broadcast %1619 : vector<2x1xf32> to vector<2x12xf32>
    %1621 = arith.mulf %1620, %70 : vector<2x12xf32>
    %1622 = arith.addf %1618, %1621 : vector<2x12xf32>
    %cst_126 = arith.constant 5.000000e-01 : f32
    %1623 = vector.broadcast %cst_126 : f32 to vector<2x12xf32>
    %1624 = arith.mulf %1623, %1622 : vector<2x12xf32>
    %1625 = math.tanh %1624 : vector<2x12xf32>
    %cst_127 = arith.constant 1.000000e+00 : f32
    %1626 = vector.broadcast %cst_127 : f32 to vector<2x12xf32>
    %1627 = arith.addf %1626, %1625 : vector<2x12xf32>
    %cst_128 = arith.constant 5.000000e-01 : f32
    %1628 = vector.broadcast %cst_128 : f32 to vector<2x12xf32>
    %1629 = arith.mulf %1628, %1627 : vector<2x12xf32>
    %1630 = math.tanh %1622 : vector<2x12xf32>
    %1631 = vector.extract_strided_slice %1629 {offsets = [0, 0], sizes = [2, 3], strides = [1, 1]} : vector<2x12xf32> to vector<2x3xf32>
    %1632 = vector.extract_strided_slice %1629 {offsets = [0, 3], sizes = [2, 3], strides = [1, 1]} : vector<2x12xf32> to vector<2x3xf32>
    %1633 = vector.extract_strided_slice %1630 {offsets = [0, 6], sizes = [2, 3], strides = [1, 1]} : vector<2x12xf32> to vector<2x3xf32>
    %1634 = vector.extract_strided_slice %1629 {offsets = [0, 9], sizes = [2, 3], strides = [1, 1]} : vector<2x12xf32> to vector<2x3xf32>
    %1635 = arith.mulf %1632, %1555 : vector<2x3xf32>
    %1636 = arith.mulf %1631, %1633 : vector<2x3xf32>
    %1637 = arith.addf %1635, %1636 : vector<2x3xf32>
    %1638 = math.tanh %1637 : vector<2x3xf32>
    %1639 = arith.mulf %1634, %1638 : vector<2x3xf32>
    %1640 = vector.extract_strided_slice %1598 {offsets = [0, 0], sizes = [2, 1], strides = [1, 1]} : vector<2x3xf32> to vector<2x1xf32>
    %1641 = vector.broadcast %1640 : vector<2x1xf32> to vector<2x12xf32>
    %1642 = arith.mulf %1641, %100 : vector<2x12xf32>
    %1643 = arith.addf %118, %1642 : vector<2x12xf32>
    %1644 = vector.extract_strided_slice %1598 {offsets = [0, 1], sizes = [2, 1], strides = [1, 1]} : vector<2x3xf32> to vector<2x1xf32>
    %1645 = vector.broadcast %1644 : vector<2x1xf32> to vector<2x12xf32>
    %1646 = arith.mulf %1645, %103 : vector<2x12xf32>
    %1647 = arith.addf %1643, %1646 : vector<2x12xf32>
    %1648 = vector.extract_strided_slice %1598 {offsets = [0, 2], sizes = [2, 1], strides = [1, 1]} : vector<2x3xf32> to vector<2x1xf32>
    %1649 = vector.broadcast %1648 : vector<2x1xf32> to vector<2x12xf32>
    %1650 = arith.mulf %1649, %106 : vector<2x12xf32>
    %1651 = arith.addf %1647, %1650 : vector<2x12xf32>
    %1652 = vector.extract_strided_slice %1639 {offsets = [0, 0], sizes = [2, 1], strides = [1, 1]} : vector<2x3xf32> to vector<2x1xf32>
    %1653 = vector.broadcast %1652 : vector<2x1xf32> to vector<2x12xf32>
    %1654 = arith.mulf %1653, %64 : vector<2x12xf32>
    %1655 = arith.addf %1651, %1654 : vector<2x12xf32>
    %1656 = vector.extract_strided_slice %1639 {offsets = [0, 1], sizes = [2, 1], strides = [1, 1]} : vector<2x3xf32> to vector<2x1xf32>
    %1657 = vector.broadcast %1656 : vector<2x1xf32> to vector<2x12xf32>
    %1658 = arith.mulf %1657, %67 : vector<2x12xf32>
    %1659 = arith.addf %1655, %1658 : vector<2x12xf32>
    %1660 = vector.extract_strided_slice %1639 {offsets = [0, 2], sizes = [2, 1], strides = [1, 1]} : vector<2x3xf32> to vector<2x1xf32>
    %1661 = vector.broadcast %1660 : vector<2x1xf32> to vector<2x12xf32>
    %1662 = arith.mulf %1661, %70 : vector<2x12xf32>
    %1663 = arith.addf %1659, %1662 : vector<2x12xf32>
    %cst_129 = arith.constant 5.000000e-01 : f32
    %1664 = vector.broadcast %cst_129 : f32 to vector<2x12xf32>
    %1665 = arith.mulf %1664, %1663 : vector<2x12xf32>
    %1666 = math.tanh %1665 : vector<2x12xf32>
    %cst_130 = arith.constant 1.000000e+00 : f32
    %1667 = vector.broadcast %cst_130 : f32 to vector<2x12xf32>
    %1668 = arith.addf %1667, %1666 : vector<2x12xf32>
    %cst_131 = arith.constant 5.000000e-01 : f32
    %1669 = vector.broadcast %cst_131 : f32 to vector<2x12xf32>
    %1670 = arith.mulf %1669, %1668 : vector<2x12xf32>
    %1671 = math.tanh %1663 : vector<2x12xf32>
    %1672 = vector.extract_strided_slice %1670 {offsets = [0, 0], sizes = [2, 3], strides = [1, 1]} : vector<2x12xf32> to vector<2x3xf32>
    %1673 = vector.extract_strided_slice %1670 {offsets = [0, 3], sizes = [2, 3], strides = [1, 1]} : vector<2x12xf32> to vector<2x3xf32>
    %1674 = vector.extract_strided_slice %1671 {offsets = [0, 6], sizes = [2, 3], strides = [1, 1]} : vector<2x12xf32> to vector<2x3xf32>
    %1675 = vector.extract_strided_slice %1670 {offsets = [0, 9], sizes = [2, 3], strides = [1, 1]} : vector<2x12xf32> to vector<2x3xf32>
    %1676 = arith.mulf %1673, %1637 : vector<2x3xf32>
    %1677 = arith.mulf %1672, %1674 : vector<2x3xf32>
    %1678 = arith.addf %1676, %1677 : vector<2x3xf32>
    %1679 = math.tanh %1678 : vector<2x3xf32>
    %1680 = arith.mulf %1675, %1679 : vector<2x3xf32>
    %1681 = vector.extract_strided_slice %1 {offsets = [38, 0], sizes = [1, 3], strides = [1, 1]} : vector<39x12xf32> to vector<1x3xf32>
    %1682 = vector.shape_cast %1681 : vector<1x3xf32> to vector<1x3xf32>
    %1683 = vector.broadcast %1682 : vector<1x3xf32> to vector<2x3xf32>
    %1684 = vector.extract_strided_slice %1680 {offsets = [0, 0], sizes = [2, 1], strides = [1, 1]} : vector<2x3xf32> to vector<2x1xf32>
    %1685 = vector.extract_strided_slice %1 {offsets = [35, 0], sizes = [1, 3], strides = [1, 1]} : vector<39x12xf32> to vector<1x3xf32>
    %1686 = vector.shape_cast %1685 : vector<1x3xf32> to vector<1x3xf32>
    %1687 = vector.broadcast %1686 : vector<1x3xf32> to vector<2x3xf32>
    %1688 = vector.broadcast %1684 : vector<2x1xf32> to vector<2x3xf32>
    %1689 = arith.mulf %1688, %1687 : vector<2x3xf32>
    %1690 = arith.addf %1683, %1689 : vector<2x3xf32>
    %1691 = vector.extract_strided_slice %1680 {offsets = [0, 1], sizes = [2, 1], strides = [1, 1]} : vector<2x3xf32> to vector<2x1xf32>
    %1692 = vector.extract_strided_slice %1 {offsets = [36, 0], sizes = [1, 3], strides = [1, 1]} : vector<39x12xf32> to vector<1x3xf32>
    %1693 = vector.shape_cast %1692 : vector<1x3xf32> to vector<1x3xf32>
    %1694 = vector.broadcast %1693 : vector<1x3xf32> to vector<2x3xf32>
    %1695 = vector.broadcast %1691 : vector<2x1xf32> to vector<2x3xf32>
    %1696 = arith.mulf %1695, %1694 : vector<2x3xf32>
    %1697 = arith.addf %1690, %1696 : vector<2x3xf32>
    %1698 = vector.extract_strided_slice %1680 {offsets = [0, 2], sizes = [2, 1], strides = [1, 1]} : vector<2x3xf32> to vector<2x1xf32>
    %1699 = vector.extract_strided_slice %1 {offsets = [37, 0], sizes = [1, 3], strides = [1, 1]} : vector<39x12xf32> to vector<1x3xf32>
    %1700 = vector.shape_cast %1699 : vector<1x3xf32> to vector<1x3xf32>
    %1701 = vector.broadcast %1700 : vector<1x3xf32> to vector<2x3xf32>
    %1702 = vector.broadcast %1698 : vector<2x1xf32> to vector<2x3xf32>
    %1703 = arith.mulf %1702, %1701 : vector<2x3xf32>
    %1704 = arith.addf %1697, %1703 : vector<2x3xf32>
    %1705 = vector.extract_strided_slice %0 {offsets = [14, 0], sizes = [2, 3], strides = [1, 1]} : vector<16x3xf32> to vector<2x3xf32>
    %cst_132 = arith.constant 1.000000e+00 : f32
    %1706 = vector.broadcast %cst_132 : f32 to vector<2x3xf32>
    %1707 = arith.addf %1706, %1704 : vector<2x3xf32>
    %1708 = arith.mulf %1707, %1705 : vector<2x3xf32>
    %cst_133 = arith.constant 0.000000e+00 : f32
    %1709 = vector.broadcast %cst_133 : f32 to vector<2x3xf32>
    %1710 = arith.maximumf %1708, %1709 : vector<2x3xf32>
    %c0_134 = arith.constant 0 : index
    %c0_135 = arith.constant 0 : index
    %1711 = vector.load %arg2[%c0_134, %c0_135] : memref<2x3xf32, #tpu.memory_space<vmem>>, vector<2x3xf32>
    tpu.vector_store %arg2[%c0_134, %c0_135], %1710 {strides = array<i32>} : memref<2x3xf32, #tpu.memory_space<vmem>>, vector<2x3xf32>,
    return
  }
}

</mosaic_0001>

<llo_original>
// kernel: net_forward.1
$region0: #{net_forward.1}
  #allocation0 [shape = 'u32[]', space=smem, size = 0x4, offset = 0x4, fixed_abs, tag = 'smem constant byte address 0x4 - core index']
  #allocation1 [shape = 'u32[144,128]{1,0:T(1,128)}', space=vmem, size = 0x12000, scoped, tag = 'internal scratch']
  %s0 = inlined_call_operand.vmem [shape: f32[16,3], index: 0, kind: input, shape index: {}]
  %s1 = inlined_call_operand.vmem [shape: f32[39,12], index: 1, kind: input, shape index: {}]
  %s2 = inlined_call_operand.hbm [shape: f32[2,3], index: 2, kind: output, shape index: {}]
  %s3 = sld [smem:[#allocation0]]
  $region18: #{net_forward.1} parent=0
    _
  %s5 = ssub.s32 1, %s3
  %s6 = scalar_select 0, %s5, %s3
  $region1: #{net_forward.1} parent=0
    #allocation2 [shape = 'u8[1024]{0}', space=vmem, size = 0x400, scoped, tag = 'output window, operand 0, single buffered']
    #allocation3 [shape = 's32[1]{0}', space=sflag, size = 0x4, scoped, tag = 'scoped memory for net_forward.1']
    %7 = vsyncpa [#allocation3], 0
    // Predicated region
    $region2: #{net_forward.1} parent=1 // pred_check
      _
    $region3: #{net_forward.1} parent=1 // pred_check_branch
      %9 = sbr.rel (0) target = $region5
    $region4: #{net_forward.1} parent=1 // pred_region
      _
    $region5: #{net_forward.1} parent=1 // pred_fallthru
      _
    // Predicated region
    $region6: #{net_forward.1} parent=1 // pred_check
      _
    $region7: #{net_forward.1} parent=1 // pred_check_branch
      %11 = sbr.rel (0) target = $region9
    $region8: #{net_forward.1} parent=1 // pred_region
      _
    $region9: #{net_forward.1} parent=1 // pred_fallthru
      _
    %v12 = vld [vmem:[%s0] sm:$0xff]
    %v13 = vld [vmem:[%s0 + $0x8] sm:$0xff]
    %v14 = vld [vmem:[%s1] sm:$0xff]
    %v15 = vld [vmem:[%s1 + $0x8] sm:$0xff]
    %v16 = vld [vmem:[%s1 + $0x10] sm:$0xff]
    %v17 = vld [vmem:[%s1 + $0x18] sm:$0xff]
    %v18 = vld [vmem:[%s1 + $0x20] sm:$0x7f]
    %v19 = vlaneseq
    %v20 = vshrl.u32 %v19, 7
    %v21 = vsub.s32 6, %v20
    %v22 = vrot.slane %v17, %v21
    %v23 = vlaneseq
    %v24 = vshrl.u32 %v23, 7
    %v25 = vsub.s32 0, %v24
    %v26 = vrot.slane %v14, %v25
    %28 = vset.pattern.permute.xlu0 0
    %29 = vperm.xlu0 %28, %v12
    %v30 = vpop.permute.xlu0 %29
    %33 = vset.pattern.permute.xlu0 0
    %34 = vperm.xlu0 %33, %v13
    %v35 = vpop.permute.xlu0 %34
    %v37 = vmul.f32 %v30, %v26
    %v38 = vmul.f32 %v35, %v26
    %v39 = vadd.f32 %v22, %v37
    %v40 = vadd.f32 %v22, %v38
    %v41 = vlaneseq
    %v42 = vshrl.u32 %v41, 7
    %v43 = vsub.s32 1, %v42
    %v44 = vrot.slane %v14, %v43
    %45 = vset.pattern.permute.xlu0 1
    %46 = vperm.xlu0 %45, %v12
    %v47 = vpop.permute.xlu0 %46
    %49 = vset.pattern.permute.xlu0 1
    %50 = vperm.xlu0 %49, %v13
    %v51 = vpop.permute.xlu0 %50
    %v53 = vmul.f32 %v47, %v44
    %v54 = vmul.f32 %v51, %v44
    %v55 = vadd.f32 %v39, %v53
    %v56 = vadd.f32 %v40, %v54
    %v57 = vlaneseq
    %v58 = vshrl.u32 %v57, 7
    %v59 = vsub.s32 2, %v58
    %v60 = vrot.slane %v14, %v59
    %61 = vset.pattern.permute.xlu0 2
    %62 = vperm.xlu0 %61, %v12
    %v63 = vpop.permute.xlu0 %62
    %65 = vset.pattern.permute.xlu0 2
    %66 = vperm.xlu0 %65, %v13
    %v67 = vpop.permute.xlu0 %66
    %v69 = vmul.f32 %v63, %v60
    %v70 = vmul.f32 %v67, %v60
    %v71 = vadd.f32 %v55, %v69
    %v72 = vadd.f32 %v56, %v70
    %v73 = vlaneseq
    %v74 = vshrl.u32 %v73, 7
    %v75 = vsub.s32 7, %v74
    %v76 = vrot.slane %v15, %v75
    %v77 = vlaneseq
    %v78 = vshrl.u32 %v77, 7
    %v79 = vsub.s32 0, %v78
    %v80 = vrot.slane %v16, %v79
    %v81 = vlaneseq
    %v82 = vshrl.u32 %v81, 7
    %v83 = vsub.s32 1, %v82
    %v84 = vrot.slane %v16, %v83
    %v85 = vlaneseq
    %v86 = vshrl.u32 %v85, 7
    %v87 = vsub.s32 2, %v86
    %v88 = vrot.slane %v16, %v87
    %v89 = vlaneseq
    %v90 = vshrl.u32 %v89, 7
    %v91 = vsub.s32 3, %v90
    %v92 = vrot.slane %v16, %v91
    %v93 = vlaneseq
    %v94 = vshrl.u32 %v93, 7
    %v95 = vsub.s32 4, %v94
    %v96 = vrot.slane %v16, %v95
    %v97 = vlaneseq
    %v98 = vshrl.u32 %v97, 7
    %v99 = vsub.s32 5, %v98
    %v100 = vrot.slane %v16, %v99
    %v101 = vlaneseq
    %v102 = vshrl.u32 %v101, 7
    %v103 = vsub.s32 6, %v102
    %v104 = vrot.slane %v16, %v103
    %v105 = vlaneseq
    %v106 = vshrl.u32 %v105, 7
    %v107 = vsub.s32 7, %v106
    %v108 = vrot.slane %v16, %v107
    %v109 = vlaneseq
    %v110 = vshrl.u32 %v109, 7
    %v111 = vsub.s32 0, %v110
    %v112 = vrot.slane %v17, %v111
    %v113 = vlaneseq
    %v114 = vshrl.u32 %v113, 7
    %v115 = vsub.s32 1, %v114
    %v116 = vrot.slane %v17, %v115
    %v117 = vlaneseq
    %v118 = vshrl.u32 %v117, 7
    %v119 = vsub.s32 2, %v118
    %v120 = vrot.slane %v17, %v119
    %v121 = vlaneseq
    %v122 = vshrl.u32 %v121, 7
    %v123 = vsub.s32 3, %v122
    %v124 = vrot.slane %v17, %v123
    %v125 = vlaneseq
    %v126 = vshrl.u32 %v125, 7
    %v127 = vsub.s32 4, %v126
    %v128 = vrot.slane %v17, %v127
    %v129 = vlaneseq
    %v130 = vshrl.u32 %v129, 7
    %v131 = vsub.s32 5, %v130
    %v132 = vrot.slane %v17, %v131
    %v133 = vlaneseq
    %v134 = vshrl.u32 %v133, 7
    %v135 = vsub.s32 3, %v134
    %v136 = vrot.slane %v14, %v135
    %v137 = vlaneseq
    %v138 = vshrl.u32 %v137, 7
    %v139 = vsub.s32 4, %v138
    %v140 = vrot.slane %v14, %v139
    %v141 = vlaneseq
    %v142 = vshrl.u32 %v141, 7
    %v143 = vsub.s32 5, %v142
    %v144 = vrot.slane %v14, %v143
    %v145 = vlaneseq
    %v146 = vshrl.u32 %v145, 7
    %v147 = vsub.s32 6, %v146
    %v148 = vrot.slane %v14, %v147
    %v149 = vlaneseq
    %v150 = vshrl.u32 %v149, 7
    %v151 = vsub.s32 7, %v150
    %v152 = vrot.slane %v14, %v151
    %v153 = vlaneseq
    %v154 = vshrl.u32 %v153, 7
    %v155 = vsub.s32 0, %v154
    %v156 = vrot.slane %v15, %v155
    %v157 = vlaneseq
    %v158 = vshrl.u32 %v157, 7
    %v159 = vsub.s32 1, %v158
    %v160 = vrot.slane %v15, %v159
    %v161 = vlaneseq
    %v162 = vshrl.u32 %v161, 7
    %v163 = vsub.s32 2, %v162
    %v164 = vrot.slane %v15, %v163
    %v165 = vlaneseq
    %v166 = vshrl.u32 %v165, 7
    %v167 = vsub.s32 3, %v166
    %v168 = vrot.slane %v15, %v167
    %v169 = vlaneseq
    %v170 = vshrl.u32 %v169, 7
    %v171 = vsub.s32 4, %v170
    %v172 = vrot.slane %v15, %v171
    %v173 = vlaneseq
    %v174 = vshrl.u32 %v173, 7
    %v175 = vsub.s32 5, %v174
    %v176 = vrot.slane %v15, %v175
    %v177 = vlaneseq
    %v178 = vshrl.u32 %v177, 7
    %v179 = vsub.s32 6, %v178
    %v180 = vrot.slane %v15, %v179
    %v181 = vlaneseq
    %v182 = vshrl.u32 %v181, 7
    %v183 = vsub.s32 7, %v182
    %v184 = vrot.slane %v17, %v183
    %v185 = vlaneseq
    %v186 = vshrl.u32 %v185, 7
    %v187 = vsub.s32 0, %v186
    %v188 = vrot.slane %v18, %v187
    %v189 = vlaneseq
    %v190 = vshrl.u32 %v189, 7
    %v191 = vsub.s32 1, %v190
    %v192 = vrot.slane %v18, %v191
    %v193 = vlaneseq
    %v194 = vshrl.u32 %v193, 7
    %v195 = vsub.s32 2, %v194
    %v196 = vrot.slane %v18, %v195
    %v197 = vmul.f32 %v76, 0.0
    %v198 = vadd.f32 %v71, %v197
    %v199 = vmul.f32 %v80, 0.0
    %v200 = vadd.f32 %v198, %v199
    %v201 = vmul.f32 %v84, 0.0
    %v202 = vadd.f32 %v200, %v201
    %v203 = vmul.f32 %v202, 0.5
    %v204 = vtanh.pop %v203
    %v205 = vadd.f32 %v204, 1.0
    %v206 = vmul.f32 %v205, 0.5
    %v207 = vtanh.pop %v202
    %v208 = vmul.f32 %v206, 0.0
    %210 = vrot.lane.b32.xlu0 %v207, 122
    %v211 = vpop.permute.xlu0 %210
    %v213 = vmul.f32 %v206, %v211
    %215 = vrot.lane.b32.xlu0 %v213, 3
    %v216 = vpop.permute.xlu0 %215
    %v218 = vadd.f32 %v208, %v216
    %v219 = vtanh.pop %v218
    %221 = vrot.lane.b32.xlu0 %v219, 6
    %v222 = vpop.permute.xlu0 %221
    %v224 = vmul.f32 %v206, %v222
    %226 = vset.pattern.permute.xlu0 9
    %227 = vperm.xlu0 %226, %v224
    %v228 = vpop.permute.xlu0 %227
    %v230 = vmul.f32 %v228, %v76
    %v232 = vrot.slane %v230, 6
    %v234 = vadd.f32 %v71, %v232
    %235 = vset.pattern.permute.xlu0 10
    %236 = vperm.xlu0 %235, %v224
    %v237 = vpop.permute.xlu0 %236
    %v239 = vmul.f32 %v237, %v80
    %v241 = vrot.slane %v239, 6
    %v243 = vadd.f32 %v234, %v241
    %244 = vset.pattern.permute.xlu0 11
    %245 = vperm.xlu0 %244, %v224
    %v246 = vpop.permute.xlu0 %245
    %v248 = vmul.f32 %v246, %v84
    %v250 = vrot.slane %v248, 6
    %v252 = vadd.f32 %v243, %v250
    %v253 = vmul.f32 %v252, 0.5
    %v254 = vtanh.pop %v253
    %v255 = vadd.f32 %v254, 1.0
    %v256 = vmul.f32 %v255, 0.5
    %v257 = vtanh.pop %v252
    %v259 = vrot.slane %v218, 6
    %v261 = vmul.f32 %v256, %v259
    %263 = vrot.lane.b32.xlu0 %v257, 122
    %v264 = vpop.permute.xlu0 %263
    %v266 = vmul.f32 %v256, %v264
    %268 = vrot.lane.b32.xlu0 %v266, 3
    %v269 = vpop.permute.xlu0 %268
    %v271 = vadd.f32 %v261, %v269
    %v272 = vtanh.pop %v271
    %274 = vrot.lane.b32.xlu0 %v272, 6
    %v275 = vpop.permute.xlu0 %274
    %v277 = vmul.f32 %v256, %v275
    %v278 = vmul.f32 %v228, %v136
    %v279 = vadd.f32 %v184, %v278
    %v280 = vmul.f32 %v237, %v140
    %v281 = vadd.f32 %v279, %v280
    %v282 = vmul.f32 %v246, %v144
    %v283 = vadd.f32 %v281, %v282
    %v284 = vmul.f32 %v88, 0.0
    %v285 = vadd.f32 %v283, %v284
    %v286 = vmul.f32 %v92, 0.0
    %v287 = vadd.f32 %v285, %v286
    %v288 = vmul.f32 %v96, 0.0
    %v289 = vadd.f32 %v287, %v288
    %v290 = vmul.f32 %v289, 0.5
    %v291 = vtanh.pop %v290
    %v292 = vadd.f32 %v291, 1.0
    %v293 = vmul.f32 %v292, 0.5
    %v294 = vtanh.pop %v289
    %v295 = vmul.f32 %v293, 0.0
    %297 = vrot.lane.b32.xlu0 %v294, 122
    %v298 = vpop.permute.xlu0 %297
    %v300 = vmul.f32 %v293, %v298
    %302 = vrot.lane.b32.xlu0 %v300, 3
    %v303 = vpop.permute.xlu0 %302
    %v305 = vadd.f32 %v295, %v303
    %v306 = vtanh.pop %v305
    %308 = vrot.lane.b32.xlu0 %v306, 6
    %v309 = vpop.permute.xlu0 %308
    %v311 = vmul.f32 %v293, %v309
    %313 = vset.pattern.permute.xlu0 9
    %314 = vperm.xlu0 %313, %v277
    %v315 = vpop.permute.xlu0 %314
    %v317 = vmul.f32 %v315, %v76
    %v319 = vrot.slane %v317, 6
    %v321 = vadd.f32 %v71, %v319
    %322 = vset.pattern.permute.xlu0 10
    %323 = vperm.xlu0 %322, %v277
    %v324 = vpop.permute.xlu0 %323
    %v326 = vmul.f32 %v324, %v80
    %v328 = vrot.slane %v326, 6
    %v330 = vadd.f32 %v321, %v328
    %331 = vset.pattern.permute.xlu0 11
    %332 = vperm.xlu0 %331, %v277
    %v333 = vpop.permute.xlu0 %332
    %v335 = vmul.f32 %v333, %v84
    %v337 = vrot.slane %v335, 6
    %v339 = vadd.f32 %v330, %v337
    %v340 = vmul.f32 %v339, 0.5
    %v341 = vtanh.pop %v340
    %v342 = vadd.f32 %v341, 1.0
    %v343 = vmul.f32 %v342, 0.5
    %v344 = vtanh.pop %v339
    %v346 = vrot.slane %v271, 6
    %v348 = vmul.f32 %v343, %v346
    %350 = vrot.lane.b32.xlu0 %v344, 122
    %v351 = vpop.permute.xlu0 %350
    %v353 = vmul.f32 %v343, %v351
    %355 = vrot.lane.b32.xlu0 %v353, 3
    %v356 = vpop.permute.xlu0 %355
    %v358 = vadd.f32 %v348, %v356
    %v359 = vtanh.pop %v358
    %361 = vrot.lane.b32.xlu0 %v359, 6
    %v362 = vpop.permute.xlu0 %361
    %v364 = vmul.f32 %v343, %v362
    %v365 = vmul.f32 %v315, %v136
    %v366 = vadd.f32 %v184, %v365
    %v367 = vmul.f32 %v324, %v140
    %v368 = vadd.f32 %v366, %v367
    %v369 = vmul.f32 %v333, %v144
    %v370 = vadd.f32 %v368, %v369
    %372 = vset.pattern.permute.xlu0 9
    %373 = vperm.xlu0 %372, %v311
    %v374 = vpop.permute.xlu0 %373
    %v376 = vmul.f32 %v374, %v88
    %v378 = vrot.slane %v376, 6
    %v380 = vadd.f32 %v370, %v378
    %381 = vset.pattern.permute.xlu0 10
    %382 = vperm.xlu0 %381, %v311
    %v383 = vpop.permute.xlu0 %382
    %v385 = vmul.f32 %v383, %v92
    %v387 = vrot.slane %v385, 6
    %v389 = vadd.f32 %v380, %v387
    %390 = vset.pattern.permute.xlu0 11
    %391 = vperm.xlu0 %390, %v311
    %v392 = vpop.permute.xlu0 %391
    %v394 = vmul.f32 %v392, %v96
    %v396 = vrot.slane %v394, 6
    %v398 = vadd.f32 %v389, %v396
    %v399 = vmul.f32 %v398, 0.5
    %v400 = vtanh.pop %v399
    %v401 = vadd.f32 %v400, 1.0
    %v402 = vmul.f32 %v401, 0.5
    %v403 = vtanh.pop %v398
    %v405 = vrot.slane %v305, 6
    %v407 = vmul.f32 %v402, %v405
    %409 = vrot.lane.b32.xlu0 %v403, 122
    %v410 = vpop.permute.xlu0 %409
    %v412 = vmul.f32 %v402, %v410
    %414 = vrot.lane.b32.xlu0 %v412, 3
    %v415 = vpop.permute.xlu0 %414
    %v417 = vadd.f32 %v407, %v415
    %v418 = vtanh.pop %v417
    %420 = vrot.lane.b32.xlu0 %v418, 6
    %v421 = vpop.permute.xlu0 %420
    %v423 = vmul.f32 %v402, %v421
    %v424 = vmul.f32 %v374, %v148
    %v425 = vadd.f32 %v188, %v424
    %v426 = vmul.f32 %v383, %v152
    %v427 = vadd.f32 %v425, %v426
    %v428 = vmul.f32 %v392, %v156
    %v429 = vadd.f32 %v427, %v428
    %v430 = vmul.f32 %v100, 0.0
    %v431 = vadd.f32 %v429, %v430
    %v432 = vmul.f32 %v104, 0.0
    %v433 = vadd.f32 %v431, %v432
    %v434 = vmul.f32 %v108, 0.0
    %v435 = vadd.f32 %v433, %v434
    %v436 = vmul.f32 %v435, 0.5
    %v437 = vtanh.pop %v436
    %v438 = vadd.f32 %v437, 1.0
    %v439 = vmul.f32 %v438, 0.5
    %v440 = vtanh.pop %v435
    %v441 = vmul.f32 %v439, 0.0
    %443 = vrot.lane.b32.xlu0 %v440, 122
    %v444 = vpop.permute.xlu0 %443
    %v446 = vmul.f32 %v439, %v444
    %448 = vrot.lane.b32.xlu0 %v446, 3
    %v449 = vpop.permute.xlu0 %448
    %v451 = vadd.f32 %v441, %v449
    %v452 = vtanh.pop %v451
    %454 = vrot.lane.b32.xlu0 %v452, 6
    %v455 = vpop.permute.xlu0 %454
    %v457 = vmul.f32 %v439, %v455
    %459 = vset.pattern.permute.xlu0 9
    %460 = vperm.xlu0 %459, %v364
    %v461 = vpop.permute.xlu0 %460
    %v463 = vmul.f32 %v461, %v76
    %v465 = vrot.slane %v463, 6
    %v467 = vadd.f32 %v71, %v465
    %468 = vset.pattern.permute.xlu0 10
    %469 = vperm.xlu0 %468, %v364
    %v470 = vpop.permute.xlu0 %469
    %v472 = vmul.f32 %v470, %v80
    %v474 = vrot.slane %v472, 6
    %v476 = vadd.f32 %v467, %v474
    %477 = vset.pattern.permute.xlu0 11
    %478 = vperm.xlu0 %477, %v364
    %v479 = vpop.permute.xlu0 %478
    %v481 = vmul.f32 %v479, %v84
    %v483 = vrot.slane %v481, 6
    %v485 = vadd.f32 %v476, %v483
    %v486 = vmul.f32 %v485, 0.5
    %v487 = vtanh.pop %v486
    %v488 = vadd.f32 %v487, 1.0
    %v489 = vmul.f32 %v488, 0.5
    %v490 = vtanh.pop %v485
    %v492 = vrot.slane %v358, 6
    %v494 = vmul.f32 %v489, %v492
    %496 = vrot.lane.b32.xlu0 %v490, 122
    %v497 = vpop.permute.xlu0 %496
    %v499 = vmul.f32 %v489, %v497
    %501 = vrot.lane.b32.xlu0 %v499, 3
    %v502 = vpop.permute.xlu0 %501
    %v504 = vadd.f32 %v494, %v502
    %v505 = vtanh.pop %v504
    %507 = vrot.lane.b32.xlu0 %v505, 6
    %v508 = vpop.permute.xlu0 %507
    %v510 = vmul.f32 %v489, %v508
    %v511 = vmul.f32 %v461, %v136
    %v512 = vadd.f32 %v184, %v511
    %v513 = vmul.f32 %v470, %v140
    %v514 = vadd.f32 %v512, %v513
    %v515 = vmul.f32 %v479, %v144
    %v516 = vadd.f32 %v514, %v515
    %518 = vset.pattern.permute.xlu0 9
    %519 = vperm.xlu0 %518, %v423
    %v520 = vpop.permute.xlu0 %519
    %v522 = vmul.f32 %v520, %v88
    %v524 = vrot.slane %v522, 6
    %v526 = vadd.f32 %v516, %v524
    %527 = vset.pattern.permute.xlu0 10
    %528 = vperm.xlu0 %527, %v423
    %v529 = vpop.permute.xlu0 %528
    %v531 = vmul.f32 %v529, %v92
    %v533 = vrot.slane %v531, 6
    %v535 = vadd.f32 %v526, %v533
    %536 = vset.pattern.permute.xlu0 11
    %537 = vperm.xlu0 %536, %v423
    %v538 = vpop.permute.xlu0 %537
    %v540 = vmul.f32 %v538, %v96
    %v542 = vrot.slane %v540, 6
    %v544 = vadd.f32 %v535, %v542
    %v545 = vmul.f32 %v544, 0.5
    %v546 = vtanh.pop %v545
    %v547 = vadd.f32 %v546, 1.0
    %v548 = vmul.f32 %v547, 0.5
    %v549 = vtanh.pop %v544
    %v551 = vrot.slane %v417, 6
    %v553 = vmul.f32 %v548, %v551
    %555 = vrot.lane.b32.xlu0 %v549, 122
    %v556 = vpop.permute.xlu0 %555
    %v558 = vmul.f32 %v548, %v556
    %560 = vrot.lane.b32.xlu0 %v558, 3
    %v561 = vpop.permute.xlu0 %560
    %v563 = vadd.f32 %v553, %v561
    %v564 = vtanh.pop %v563
    %566 = vrot.lane.b32.xlu0 %v564, 6
    %v567 = vpop.permute.xlu0 %566
    %v569 = vmul.f32 %v548, %v567
    %v570 = vmul.f32 %v520, %v148
    %v571 = vadd.f32 %v188, %v570
    %v572 = vmul.f32 %v529, %v152
    %v573 = vadd.f32 %v571, %v572
    %v574 = vmul.f32 %v538, %v156
    %v575 = vadd.f32 %v573, %v574
    %577 = vset.pattern.permute.xlu0 9
    %578 = vperm.xlu0 %577, %v457
    %v579 = vpop.permute.xlu0 %578
    %v581 = vmul.f32 %v579, %v100
    %v583 = vrot.slane %v581, 6
    %v585 = vadd.f32 %v575, %v583
    %586 = vset.pattern.permute.xlu0 10
    %587 = vperm.xlu0 %586, %v457
    %v588 = vpop.permute.xlu0 %587
    %v590 = vmul.f32 %v588, %v104
    %v592 = vrot.slane %v590, 6
    %v594 = vadd.f32 %v585, %v592
    %595 = vset.pattern.permute.xlu0 11
    %596 = vperm.xlu0 %595, %v457
    %v597 = vpop.permute.xlu0 %596
    %v599 = vmul.f32 %v597, %v108
    %v601 = vrot.slane %v599, 6
    %v603 = vadd.f32 %v594, %v601
    %v604 = vmul.f32 %v603, 0.5
    %v605 = vtanh.pop %v604
    %v606 = vadd.f32 %v605, 1.0
    %v607 = vmul.f32 %v606, 0.5
    %v608 = vtanh.pop %v603
    %v610 = vrot.slane %v451, 6
    %v612 = vmul.f32 %v607, %v610
    %614 = vrot.lane.b32.xlu0 %v608, 122
    %v615 = vpop.permute.xlu0 %614
    %v617 = vmul.f32 %v607, %v615
    %619 = vrot.lane.b32.xlu0 %v617, 3
    %v620 = vpop.permute.xlu0 %619
    %v622 = vadd.f32 %v612, %v620
    %v623 = vtanh.pop %v622
    %625 = vrot.lane.b32.xlu0 %v623, 6
    %v626 = vpop.permute.xlu0 %625
    %v628 = vmul.f32 %v607, %v626
    %v629 = vmul.f32 %v579, %v160
    %v630 = vadd.f32 %v192, %v629
    %v631 = vmul.f32 %v588, %v164
    %v632 = vadd.f32 %v630, %v631
    %v633 = vmul.f32 %v597, %v168
    %v634 = vadd.f32 %v632, %v633
    %v635 = vmul.f32 %v112, 0.0
    %v636 = vadd.f32 %v634, %v635
    %v637 = vmul.f32 %v116, 0.0
    %v638 = vadd.f32 %v636, %v637
    %v639 = vmul.f32 %v120, 0.0
    %v640 = vadd.f32 %v638, %v639
    %v641 = vmul.f32 %v640, 0.5
    %v642 = vtanh.pop %v641
    %v643 = vadd.f32 %v642, 1.0
    %v644 = vmul.f32 %v643, 0.5
    %v645 = vtanh.pop %v640
    %v646 = vmul.f32 %v644, 0.0
    %648 = vrot.lane.b32.xlu0 %v645, 122
    %v649 = vpop.permute.xlu0 %648
    %v651 = vmul.f32 %v644, %v649
    %653 = vrot.lane.b32.xlu0 %v651, 3
    %v654 = vpop.permute.xlu0 %653
    %v656 = vadd.f32 %v646, %v654
    %v657 = vtanh.pop %v656
    %659 = vrot.lane.b32.xlu0 %v657, 6
    %v660 = vpop.permute.xlu0 %659
    %v662 = vmul.f32 %v644, %v660
    %664 = vset.pattern.permute.xlu0 9
    %665 = vperm.xlu0 %664, %v510
    %v666 = vpop.permute.xlu0 %665
    %v668 = vmul.f32 %v666, %v76
    %v670 = vrot.slane %v668, 6
    %v672 = vadd.f32 %v72, %v670
    %673 = vset.pattern.permute.xlu0 10
    %674 = vperm.xlu0 %673, %v510
    %v675 = vpop.permute.xlu0 %674
    %v677 = vmul.f32 %v675, %v80
    %v679 = vrot.slane %v677, 6
    %v681 = vadd.f32 %v672, %v679
    %682 = vset.pattern.permute.xlu0 11
    %683 = vperm.xlu0 %682, %v510
    %v684 = vpop.permute.xlu0 %683
    %v686 = vmul.f32 %v684, %v84
    %v688 = vrot.slane %v686, 6
    %v690 = vadd.f32 %v681, %v688
    %v691 = vmul.f32 %v690, 0.5
    %v692 = vtanh.pop %v691
    %v693 = vadd.f32 %v692, 1.0
    %v694 = vmul.f32 %v693, 0.5
    %v695 = vtanh.pop %v690
    %v697 = vrot.slane %v504, 6
    %v699 = vmul.f32 %v694, %v697
    %701 = vrot.lane.b32.xlu0 %v695, 122
    %v702 = vpop.permute.xlu0 %701
    %v704 = vmul.f32 %v694, %v702
    %706 = vrot.lane.b32.xlu0 %v704, 3
    %v707 = vpop.permute.xlu0 %706
    %v709 = vadd.f32 %v699, %v707
    %v710 = vtanh.pop %v709
    %712 = vrot.lane.b32.xlu0 %v710, 6
    %v713 = vpop.permute.xlu0 %712
    %v715 = vmul.f32 %v694, %v713
    %v716 = vmul.f32 %v666, %v136
    %v717 = vadd.f32 %v184, %v716
    %v718 = vmul.f32 %v675, %v140
    %v719 = vadd.f32 %v717, %v718
    %v720 = vmul.f32 %v684, %v144
    %v721 = vadd.f32 %v719, %v720
    %723 = vset.pattern.permute.xlu0 9
    %724 = vperm.xlu0 %723, %v569
    %v725 = vpop.permute.xlu0 %724
    %v727 = vmul.f32 %v725, %v88
    %v729 = vrot.slane %v727, 6
    %v731 = vadd.f32 %v721, %v729
    %732 = vset.pattern.permute.xlu0 10
    %733 = vperm.xlu0 %732, %v569
    %v734 = vpop.permute.xlu0 %733
    %v736 = vmul.f32 %v734, %v92
    %v738 = vrot.slane %v736, 6
    %v740 = vadd.f32 %v731, %v738
    %741 = vset.pattern.permute.xlu0 11
    %742 = vperm.xlu0 %741, %v569
    %v743 = vpop.permute.xlu0 %742
    %v745 = vmul.f32 %v743, %v96
    %v747 = vrot.slane %v745, 6
    %v749 = vadd.f32 %v740, %v747
    %v750 = vmul.f32 %v749, 0.5
    %v751 = vtanh.pop %v750
    %v752 = vadd.f32 %v751, 1.0
    %v753 = vmul.f32 %v752, 0.5
    %v754 = vtanh.pop %v749
    %v756 = vrot.slane %v563, 6
    %v758 = vmul.f32 %v753, %v756
    %760 = vrot.lane.b32.xlu0 %v754, 122
    %v761 = vpop.permute.xlu0 %760
    %v763 = vmul.f32 %v753, %v761
    %765 = vrot.lane.b32.xlu0 %v763, 3
    %v766 = vpop.permute.xlu0 %765
    %v768 = vadd.f32 %v758, %v766
    %v769 = vtanh.pop %v768
    %771 = vrot.lane.b32.xlu0 %v769, 6
    %v772 = vpop.permute.xlu0 %771
    %v774 = vmul.f32 %v753, %v772
    %v775 = vmul.f32 %v725, %v148
    %v776 = vadd.f32 %v188, %v775
    %v777 = vmul.f32 %v734, %v152
    %v778 = vadd.f32 %v776, %v777
    %v779 = vmul.f32 %v743, %v156
    %v780 = vadd.f32 %v778, %v779
    %782 = vset.pattern.permute.xlu0 9
    %783 = vperm.xlu0 %782, %v628
    %v784 = vpop.permute.xlu0 %783
    %v786 = vmul.f32 %v784, %v100
    %v788 = vrot.slane %v786, 6
    %v790 = vadd.f32 %v780, %v788
    %791 = vset.pattern.permute.xlu0 10
    %792 = vperm.xlu0 %791, %v628
    %v793 = vpop.permute.xlu0 %792
    %v795 = vmul.f32 %v793, %v104
    %v797 = vrot.slane %v795, 6
    %v799 = vadd.f32 %v790, %v797
    %800 = vset.pattern.permute.xlu0 11
    %801 = vperm.xlu0 %800, %v628
    %v802 = vpop.permute.xlu0 %801
    %v804 = vmul.f32 %v802, %v108
    %v806 = vrot.slane %v804, 6
    %v808 = vadd.f32 %v799, %v806
    %v809 = vmul.f32 %v808, 0.5
    %v810 = vtanh.pop %v809
    %v811 = vadd.f32 %v810, 1.0
    %v812 = vmul.f32 %v811, 0.5
    %v813 = vtanh.pop %v808
    %v815 = vrot.slane %v622, 6
    %v817 = vmul.f32 %v812, %v815
    %819 = vrot.lane.b32.xlu0 %v813, 122
    %v820 = vpop.permute.xlu0 %819
    %v822 = vmul.f32 %v812, %v820
    %824 = vrot.lane.b32.xlu0 %v822, 3
    %v825 = vpop.permute.xlu0 %824
    %v827 = vadd.f32 %v817, %v825
    %v828 = vtanh.pop %v827
    %830 = vrot.lane.b32.xlu0 %v828, 6
    %v831 = vpop.permute.xlu0 %830
    %v833 = vmul.f32 %v812, %v831
    %v834 = vmul.f32 %v784, %v160
    %v835 = vadd.f32 %v192, %v834
    %v836 = vmul.f32 %v793, %v164
    %v837 = vadd.f32 %v835, %v836
    %v838 = vmul.f32 %v802, %v168
    %v839 = vadd.f32 %v837, %v838
    %841 = vset.pattern.permute.xlu0 9
    %842 = vperm.xlu0 %841, %v662
    %v843 = vpop.permute.xlu0 %842
    %v845 = vmul.f32 %v843, %v112
    %v847 = vrot.slane %v845, 6
    %v849 = vadd.f32 %v839, %v847
    %850 = vset.pattern.permute.xlu0 10
    %851 = vperm.xlu0 %850, %v662
    %v852 = vpop.permute.xlu0 %851
    %v854 = vmul.f32 %v852, %v116
    %v856 = vrot.slane %v854, 6
    %v858 = vadd.f32 %v849, %v856
    %859 = vset.pattern.permute.xlu0 11
    %860 = vperm.xlu0 %859, %v662
    %v861 = vpop.permute.xlu0 %860
    %v863 = vmul.f32 %v861, %v120
    %v865 = vrot.slane %v863, 6
    %v867 = vadd.f32 %v858, %v865
    %v868 = vmul.f32 %v867, 0.5
    %v869 = vtanh.pop %v868
    %v870 = vadd.f32 %v869, 1.0
    %v871 = vmul.f32 %v870, 0.5
    %v872 = vtanh.pop %v867
    %v874 = vrot.slane %v656, 6
    %v876 = vmul.f32 %v871, %v874
    %878 = vrot.lane.b32.xlu0 %v872, 122
    %v879 = vpop.permute.xlu0 %878
    %v881 = vmul.f32 %v871, %v879
    %883 = vrot.lane.b32.xlu0 %v881, 3
    %v884 = vpop.permute.xlu0 %883
    %v886 = vadd.f32 %v876, %v884
    %v887 = vtanh.pop %v886
    %889 = vrot.lane.b32.xlu0 %v887, 6
    %v890 = vpop.permute.xlu0 %889
    %v892 = vmul.f32 %v871, %v890
    %v893 = vmul.f32 %v843, %v172
    %v894 = vadd.f32 %v196, %v893
    %v895 = vmul.f32 %v852, %v176
    %v896 = vadd.f32 %v894, %v895
    %v897 = vmul.f32 %v861, %v180
    %v898 = vadd.f32 %v896, %v897
    %v899 = vmul.f32 %v124, 0.0
    %v900 = vadd.f32 %v898, %v899
    %v901 = vmul.f32 %v128, 0.0
    %v902 = vadd.f32 %v900, %v901
    %v903 = vmul.f32 %v132, 0.0
    %v904 = vadd.f32 %v902, %v903
    %v905 = vmul.f32 %v904, 0.5
    %v906 = vtanh.pop %v905
    %v907 = vadd.f32 %v906, 1.0
    %v908 = vmul.f32 %v907, 0.5
    %v909 = vtanh.pop %v904
    %v910 = vmul.f32 %v908, 0.0
    %912 = vrot.lane.b32.xlu0 %v909, 122
    %v913 = vpop.permute.xlu0 %912
    %v915 = vmul.f32 %v908, %v913
    %917 = vrot.lane.b32.xlu0 %v915, 3
    %v918 = vpop.permute.xlu0 %917
    %v920 = vadd.f32 %v910, %v918
    %v921 = vtanh.pop %v920
    %923 = vrot.lane.b32.xlu0 %v921, 6
    %v924 = vpop.permute.xlu0 %923
    %v926 = vmul.f32 %v908, %v924
    %928 = vset.pattern.permute.xlu0 9
    %929 = vperm.xlu0 %928, %v715
    %v930 = vpop.permute.xlu0 %929
    %v932 = vmul.f32 %v930, %v76
    %v934 = vrot.slane %v932, 6
    %v936 = vadd.f32 %v72, %v934
    %937 = vset.pattern.permute.xlu0 10
    %938 = vperm.xlu0 %937, %v715
    %v939 = vpop.permute.xlu0 %938
    %v941 = vmul.f32 %v939, %v80
    %v943 = vrot.slane %v941, 6
    %v945 = vadd.f32 %v936, %v943
    %946 = vset.pattern.permute.xlu0 11
    %947 = vperm.xlu0 %946, %v715
    %v948 = vpop.permute.xlu0 %947
    %v950 = vmul.f32 %v948, %v84
    %v952 = vrot.slane %v950, 6
    %v954 = vadd.f32 %v945, %v952
    %v955 = vmul.f32 %v954, 0.5
    %v956 = vtanh.pop %v955
    %v957 = vadd.f32 %v956, 1.0
    %v958 = vmul.f32 %v957, 0.5
    %v959 = vtanh.pop %v954
    %v961 = vrot.slane %v709, 6
    %v963 = vmul.f32 %v958, %v961
    %965 = vrot.lane.b32.xlu0 %v959, 122
    %v966 = vpop.permute.xlu0 %965
    %v968 = vmul.f32 %v958, %v966
    %970 = vrot.lane.b32.xlu0 %v968, 3
    %v971 = vpop.permute.xlu0 %970
    %v973 = vadd.f32 %v963, %v971
    %v974 = vtanh.pop %v973
    %976 = vrot.lane.b32.xlu0 %v974, 6
    %v977 = vpop.permute.xlu0 %976
    %v979 = vmul.f32 %v958, %v977
    %v980 = vmul.f32 %v930, %v136
    %v981 = vadd.f32 %v184, %v980
    %v982 = vmul.f32 %v939, %v140
    %v983 = vadd.f32 %v981, %v982
    %v984 = vmul.f32 %v948, %v144
    %v985 = vadd.f32 %v983, %v984
    %987 = vset.pattern.permute.xlu0 9
    %988 = vperm.xlu0 %987, %v774
    %v989 = vpop.permute.xlu0 %988
    %v991 = vmul.f32 %v989, %v88
    %v993 = vrot.slane %v991, 6
    %v995 = vadd.f32 %v985, %v993
    %996 = vset.pattern.permute.xlu0 10
    %997 = vperm.xlu0 %996, %v774
    %v998 = vpop.permute.xlu0 %997
    %v1000 = vmul.f32 %v998, %v92
    %v1002 = vrot.slane %v1000, 6
    %v1004 = vadd.f32 %v995, %v1002
    %1005 = vset.pattern.permute.xlu0 11
    %1006 = vperm.xlu0 %1005, %v774
    %v1007 = vpop.permute.xlu0 %1006
    %v1009 = vmul.f32 %v1007, %v96
    %v1011 = vrot.slane %v1009, 6
    %v1013 = vadd.f32 %v1004, %v1011
    %v1014 = vmul.f32 %v1013, 0.5
    %v1015 = vtanh.pop %v1014
    %v1016 = vadd.f32 %v1015, 1.0
    %v1017 = vmul.f32 %v1016, 0.5
    %v1018 = vtanh.pop %v1013
    %v1020 = vrot.slane %v768, 6
    %v1022 = vmul.f32 %v1017, %v1020
    %1024 = vrot.lane.b32.xlu0 %v1018, 122
    %v1025 = vpop.permute.xlu0 %1024
    %v1027 = vmul.f32 %v1017, %v1025
    %1029 = vrot.lane.b32.xlu0 %v1027, 3
    %v1030 = vpop.permute.xlu0 %1029
    %v1032 = vadd.f32 %v1022, %v1030
    %v1033 = vtanh.pop %v1032
    %1035 = vrot.lane.b32.xlu0 %v1033, 6
    %v1036 = vpop.permute.xlu0 %1035
    %v1038 = vmul.f32 %v1017, %v1036
    %v1039 = vmul.f32 %v989, %v148
    %v1040 = vadd.f32 %v188, %v1039
    %v1041 = vmul.f32 %v998, %v152
    %v1042 = vadd.f32 %v1040, %v1041
    %v1043 = vmul.f32 %v1007, %v156
    %v1044 = vadd.f32 %v1042, %v1043
    %1046 = vset.pattern.permute.xlu0 9
    %1047 = vperm.xlu0 %1046, %v833
    %v1048 = vpop.permute.xlu0 %1047
    %v1050 = vmul.f32 %v1048, %v100
    %v1052 = vrot.slane %v1050, 6
    %v1054 = vadd.f32 %v1044, %v1052
    %1055 = vset.pattern.permute.xlu0 10
    %1056 = vperm.xlu0 %1055, %v833
    %v1057 = vpop.permute.xlu0 %1056
    %v1059 = vmul.f32 %v1057, %v104
    %v1061 = vrot.slane %v1059, 6
    %v1063 = vadd.f32 %v1054, %v1061
    %1064 = vset.pattern.permute.xlu0 11
    %1065 = vperm.xlu0 %1064, %v833
    %v1066 = vpop.permute.xlu0 %1065
    %v1068 = vmul.f32 %v1066, %v108
    %v1070 = vrot.slane %v1068, 6
    %v1072 = vadd.f32 %v1063, %v1070
    %v1073 = vmul.f32 %v1072, 0.5
    %v1074 = vtanh.pop %v1073
    %v1075 = vadd.f32 %v1074, 1.0
    %v1076 = vmul.f32 %v1075, 0.5
    %v1077 = vtanh.pop %v1072
    %v1079 = vrot.slane %v827, 6
    %v1081 = vmul.f32 %v1076, %v1079
    %1083 = vrot.lane.b32.xlu0 %v1077, 122
    %v1084 = vpop.permute.xlu0 %1083
    %v1086 = vmul.f32 %v1076, %v1084
    %1088 = vrot.lane.b32.xlu0 %v1086, 3
    %v1089 = vpop.permute.xlu0 %1088
    %v1091 = vadd.f32 %v1081, %v1089
    %v1092 = vtanh.pop %v1091
    %1094 = vrot.lane.b32.xlu0 %v1092, 6
    %v1095 = vpop.permute.xlu0 %1094
    %v1097 = vmul.f32 %v1076, %v1095
    %v1098 = vmul.f32 %v1048, %v160
    %v1099 = vadd.f32 %v192, %v1098
    %v1100 = vmul.f32 %v1057, %v164
    %v1101 = vadd.f32 %v1099, %v1100
    %v1102 = vmul.f32 %v1066, %v168
    %v1103 = vadd.f32 %v1101, %v1102
    %1105 = vset.pattern.permute.xlu0 9
    %1106 = vperm.xlu0 %1105, %v892
    %v1107 = vpop.permute.xlu0 %1106
    %v1109 = vmul.f32 %v1107, %v112
    %v1111 = vrot.slane %v1109, 6
    %v1113 = vadd.f32 %v1103, %v1111
    %1114 = vset.pattern.permute.xlu0 10
    %1115 = vperm.xlu0 %1114, %v892
    %v1116 = vpop.permute.xlu0 %1115
    %v1118 = vmul.f32 %v1116, %v116
    %v1120 = vrot.slane %v1118, 6
    %v1122 = vadd.f32 %v1113, %v1120
    %1123 = vset.pattern.permute.xlu0 11
    %1124 = vperm.xlu0 %1123, %v892
    %v1125 = vpop.permute.xlu0 %1124
    %v1127 = vmul.f32 %v1125, %v120
    %v1129 = vrot.slane %v1127, 6
    %v1131 = vadd.f32 %v1122, %v1129
    %v1132 = vmul.f32 %v1131, 0.5
    %v1133 = vtanh.pop %v1132
    %v1134 = vadd.f32 %v1133, 1.0
    %v1135 = vmul.f32 %v1134, 0.5
    %v1136 = vtanh.pop %v1131
    %v1138 = vrot.slane %v886, 6
    %v1140 = vmul.f32 %v1135, %v1138
    %1142 = vrot.lane.b32.xlu0 %v1136, 122
    %v1143 = vpop.permute.xlu0 %1142
    %v1145 = vmul.f32 %v1135, %v1143
    %1147 = vrot.lane.b32.xlu0 %v1145, 3
    %v1148 = vpop.permute.xlu0 %1147
    %v1150 = vadd.f32 %v1140, %v1148
    %v1151 = vtanh.pop %v1150
    %1153 = vrot.lane.b32.xlu0 %v1151, 6
    %v1154 = vpop.permute.xlu0 %1153
    %v1156 = vmul.f32 %v1135, %v1154
    %v1157 = vmul.f32 %v1107, %v172
    %v1158 = vadd.f32 %v196, %v1157
    %v1159 = vmul.f32 %v1116, %v176
    %v1160 = vadd.f32 %v1158, %v1159
    %v1161 = vmul.f32 %v1125, %v180
    %v1162 = vadd.f32 %v1160, %v1161
    %1164 = vset.pattern.permute.xlu0 9
    %1165 = vperm.xlu0 %1164, %v926
    %v1166 = vpop.permute.xlu0 %1165
    %v1168 = vmul.f32 %v1166, %v124
    %v1170 = vrot.slane %v1168, 6
    %v1172 = vadd.f32 %v1162, %v1170
    %1173 = vset.pattern.permute.xlu0 10
    %1174 = vperm.xlu0 %1173, %v926
    %v1175 = vpop.permute.xlu0 %1174
    %v1177 = vmul.f32 %v1175, %v128
    %v1179 = vrot.slane %v1177, 6
    %v1181 = vadd.f32 %v1172, %v1179
    %1182 = vset.pattern.permute.xlu0 11
    %1183 = vperm.xlu0 %1182, %v926
    %v1184 = vpop.permute.xlu0 %1183
    %v1186 = vmul.f32 %v1184, %v132
    %v1188 = vrot.slane %v1186, 6
    %v1190 = vadd.f32 %v1181, %v1188
    %v1191 = vmul.f32 %v1190, 0.5
    %v1192 = vtanh.pop %v1191
    %v1193 = vadd.f32 %v1192, 1.0
    %v1194 = vmul.f32 %v1193, 0.5
    %v1195 = vtanh.pop %v1190
    %v1197 = vrot.slane %v920, 6
    %v1199 = vmul.f32 %v1194, %v1197
    %1201 = vrot.lane.b32.xlu0 %v1195, 122
    %v1202 = vpop.permute.xlu0 %1201
    %v1204 = vmul.f32 %v1194, %v1202
    %1206 = vrot.lane.b32.xlu0 %v1204, 3
    %v1207 = vpop.permute.xlu0 %1206
    %v1209 = vadd.f32 %v1199, %v1207
    %v1210 = vtanh.pop %v1209
    %1212 = vrot.lane.b32.xlu0 %v1210, 6
    %v1213 = vpop.permute.xlu0 %1212
    %v1215 = vmul.f32 %v1194, %v1213
    %1217 = vset.pattern.permute.xlu0 9
    %1218 = vperm.xlu0 %1217, %v979
    %v1219 = vpop.permute.xlu0 %1218
    %v1221 = vmul.f32 %v1219, %v76
    %v1223 = vrot.slane %v1221, 6
    %v1225 = vadd.f32 %v72, %v1223
    %1226 = vset.pattern.permute.xlu0 10
    %1227 = vperm.xlu0 %1226, %v979
    %v1228 = vpop.permute.xlu0 %1227
    %v1230 = vmul.f32 %v1228, %v80
    %v1232 = vrot.slane %v1230, 6
    %v1234 = vadd.f32 %v1225, %v1232
    %1235 = vset.pattern.permute.xlu0 11
    %1236 = vperm.xlu0 %1235, %v979
    %v1237 = vpop.permute.xlu0 %1236
    %v1239 = vmul.f32 %v1237, %v84
    %v1241 = vrot.slane %v1239, 6
    %v1243 = vadd.f32 %v1234, %v1241
    %v1244 = vmul.f32 %v1243, 0.5
    %v1245 = vtanh.pop %v1244
    %v1246 = vadd.f32 %v1245, 1.0
    %v1247 = vmul.f32 %v1246, 0.5
    %v1248 = vtanh.pop %v1243
    %v1250 = vrot.slane %v973, 6
    %v1252 = vmul.f32 %v1247, %v1250
    %1254 = vrot.lane.b32.xlu0 %v1248, 122
    %v1255 = vpop.permute.xlu0 %1254
    %v1257 = vmul.f32 %v1247, %v1255
    %1259 = vrot.lane.b32.xlu0 %v1257, 3
    %v1260 = vpop.permute.xlu0 %1259
    %v1262 = vadd.f32 %v1252, %v1260
    %v1263 = vtanh.pop %v1262
    %1265 = vrot.lane.b32.xlu0 %v1263, 6
    %v1266 = vpop.permute.xlu0 %1265
    %v1268 = vmul.f32 %v1247, %v1266
    %v1269 = vmul.f32 %v1219, %v136
    %v1270 = vadd.f32 %v184, %v1269
    %v1271 = vmul.f32 %v1228, %v140
    %v1272 = vadd.f32 %v1270, %v1271
    %v1273 = vmul.f32 %v1237, %v144
    %v1274 = vadd.f32 %v1272, %v1273
    %1276 = vset.pattern.permute.xlu0 9
    %1277 = vperm.xlu0 %1276, %v1038
    %v1278 = vpop.permute.xlu0 %1277
    %v1280 = vmul.f32 %v1278, %v88
    %v1282 = vrot.slane %v1280, 6
    %v1284 = vadd.f32 %v1274, %v1282
    %1285 = vset.pattern.permute.xlu0 10
    %1286 = vperm.xlu0 %1285, %v1038
    %v1287 = vpop.permute.xlu0 %1286
    %v1289 = vmul.f32 %v1287, %v92
    %v1291 = vrot.slane %v1289, 6
    %v1293 = vadd.f32 %v1284, %v1291
    %1294 = vset.pattern.permute.xlu0 11
    %1295 = vperm.xlu0 %1294, %v1038
    %v1296 = vpop.permute.xlu0 %1295
    %v1298 = vmul.f32 %v1296, %v96
    %v1300 = vrot.slane %v1298, 6
    %v1302 = vadd.f32 %v1293, %v1300
    %v1303 = vmul.f32 %v1302, 0.5
    %v1304 = vtanh.pop %v1303
    %v1305 = vadd.f32 %v1304, 1.0
    %v1306 = vmul.f32 %v1305, 0.5
    %v1307 = vtanh.pop %v1302
    %v1309 = vrot.slane %v1032, 6
    %v1311 = vmul.f32 %v1306, %v1309
    %1313 = vrot.lane.b32.xlu0 %v1307, 122
    %v1314 = vpop.permute.xlu0 %1313
    %v1316 = vmul.f32 %v1306, %v1314
    %1318 = vrot.lane.b32.xlu0 %v1316, 3
    %v1319 = vpop.permute.xlu0 %1318
    %v1321 = vadd.f32 %v1311, %v1319
    %v1322 = vtanh.pop %v1321
    %1324 = vrot.lane.b32.xlu0 %v1322, 6
    %v1325 = vpop.permute.xlu0 %1324
    %v1327 = vmul.f32 %v1306, %v1325
    %v1328 = vmul.f32 %v1278, %v148
    %v1329 = vadd.f32 %v188, %v1328
    %v1330 = vmul.f32 %v1287, %v152
    %v1331 = vadd.f32 %v1329, %v1330
    %v1332 = vmul.f32 %v1296, %v156
    %v1333 = vadd.f32 %v1331, %v1332
    %1335 = vset.pattern.permute.xlu0 9
    %1336 = vperm.xlu0 %1335, %v1097
    %v1337 = vpop.permute.xlu0 %1336
    %v1339 = vmul.f32 %v1337, %v100
    %v1341 = vrot.slane %v1339, 6
    %v1343 = vadd.f32 %v1333, %v1341
    %1344 = vset.pattern.permute.xlu0 10
    %1345 = vperm.xlu0 %1344, %v1097
    %v1346 = vpop.permute.xlu0 %1345
    %v1348 = vmul.f32 %v1346, %v104
    %v1350 = vrot.slane %v1348, 6
    %v1352 = vadd.f32 %v1343, %v1350
    %1353 = vset.pattern.permute.xlu0 11
    %1354 = vperm.xlu0 %1353, %v1097
    %v1355 = vpop.permute.xlu0 %1354
    %v1357 = vmul.f32 %v1355, %v108
    %v1359 = vrot.slane %v1357, 6
    %v1361 = vadd.f32 %v1352, %v1359
    %v1362 = vmul.f32 %v1361, 0.5
    %v1363 = vtanh.pop %v1362
    %v1364 = vadd.f32 %v1363, 1.0
    %v1365 = vmul.f32 %v1364, 0.5
    %v1366 = vtanh.pop %v1361
    %v1368 = vrot.slane %v1091, 6
    %v1370 = vmul.f32 %v1365, %v1368
    %1372 = vrot.lane.b32.xlu0 %v1366, 122
    %v1373 = vpop.permute.xlu0 %1372
    %v1375 = vmul.f32 %v1365, %v1373
    %1377 = vrot.lane.b32.xlu0 %v1375, 3
    %v1378 = vpop.permute.xlu0 %1377
    %v1380 = vadd.f32 %v1370, %v1378
    %v1381 = vtanh.pop %v1380
    %1383 = vrot.lane.b32.xlu0 %v1381, 6
    %v1384 = vpop.permute.xlu0 %1383
    %v1386 = vmul.f32 %v1365, %v1384
    %v1387 = vmul.f32 %v1337, %v160
    %v1388 = vadd.f32 %v192, %v1387
    %v1389 = vmul.f32 %v1346, %v164
    %v1390 = vadd.f32 %v1388, %v1389
    %v1391 = vmul.f32 %v1355, %v168
    %v1392 = vadd.f32 %v1390, %v1391
    %1394 = vset.pattern.permute.xlu0 9
    %1395 = vperm.xlu0 %1394, %v1156
    %v1396 = vpop.permute.xlu0 %1395
    %v1398 = vmul.f32 %v1396, %v112
    %v1400 = vrot.slane %v1398, 6
    %v1402 = vadd.f32 %v1392, %v1400
    %1403 = vset.pattern.permute.xlu0 10
    %1404 = vperm.xlu0 %1403, %v1156
    %v1405 = vpop.permute.xlu0 %1404
    %v1407 = vmul.f32 %v1405, %v116
    %v1409 = vrot.slane %v1407, 6
    %v1411 = vadd.f32 %v1402, %v1409
    %1412 = vset.pattern.permute.xlu0 11
    %1413 = vperm.xlu0 %1412, %v1156
    %v1414 = vpop.permute.xlu0 %1413
    %v1416 = vmul.f32 %v1414, %v120
    %v1418 = vrot.slane %v1416, 6
    %v1420 = vadd.f32 %v1411, %v1418
    %v1421 = vmul.f32 %v1420, 0.5
    %v1422 = vtanh.pop %v1421
    %v1423 = vadd.f32 %v1422, 1.0
    %v1424 = vmul.f32 %v1423, 0.5
    %v1425 = vtanh.pop %v1420
    %v1427 = vrot.slane %v1150, 6
    %v1429 = vmul.f32 %v1424, %v1427
    %1431 = vrot.lane.b32.xlu0 %v1425, 122
    %v1432 = vpop.permute.xlu0 %1431
    %v1434 = vmul.f32 %v1424, %v1432
    %1436 = vrot.lane.b32.xlu0 %v1434, 3
    %v1437 = vpop.permute.xlu0 %1436
    %v1439 = vadd.f32 %v1429, %v1437
    %v1440 = vtanh.pop %v1439
    %1442 = vrot.lane.b32.xlu0 %v1440, 6
    %v1443 = vpop.permute.xlu0 %1442
    %v1445 = vmul.f32 %v1424, %v1443
    %v1446 = vmul.f32 %v1396, %v172
    %v1447 = vadd.f32 %v196, %v1446
    %v1448 = vmul.f32 %v1405, %v176
    %v1449 = vadd.f32 %v1447, %v1448
    %v1450 = vmul.f32 %v1414, %v180
    %v1451 = vadd.f32 %v1449, %v1450
    %1453 = vset.pattern.permute.xlu0 9
    %1454 = vperm.xlu0 %1453, %v1215
    %v1455 = vpop.permute.xlu0 %1454
    %v1457 = vmul.f32 %v1455, %v124
    %v1459 = vrot.slane %v1457, 6
    %v1461 = vadd.f32 %v1451, %v1459
    %1462 = vset.pattern.permute.xlu0 10
    %1463 = vperm.xlu0 %1462, %v1215
    %v1464 = vpop.permute.xlu0 %1463
    %v1466 = vmul.f32 %v1464, %v128
    %v1468 = vrot.slane %v1466, 6
    %v1470 = vadd.f32 %v1461, %v1468
    %1471 = vset.pattern.permute.xlu0 11
    %1472 = vperm.xlu0 %1471, %v1215
    %v1473 = vpop.permute.xlu0 %1472
    %v1475 = vmul.f32 %v1473, %v132
    %v1477 = vrot.slane %v1475, 6
    %v1479 = vadd.f32 %v1470, %v1477
    %v1480 = vmul.f32 %v1479, 0.5
    %v1481 = vtanh.pop %v1480
    %v1482 = vadd.f32 %v1481, 1.0
    %v1483 = vmul.f32 %v1482, 0.5
    %v1484 = vtanh.pop %v1479
    %v1486 = vrot.slane %v1209, 6
    %v1488 = vmul.f32 %v1483, %v1486
    %1490 = vrot.lane.b32.xlu0 %v1484, 122
    %v1491 = vpop.permute.xlu0 %1490
    %v1493 = vmul.f32 %v1483, %v1491
    %1495 = vrot.lane.b32.xlu0 %v1493, 3
    %v1496 = vpop.permute.xlu0 %1495
    %v1498 = vadd.f32 %v1488, %v1496
    %v1499 = vtanh.pop %v1498
    %1501 = vrot.lane.b32.xlu0 %v1499, 6
    %v1502 = vpop.permute.xlu0 %1501
    %v1504 = vmul.f32 %v1483, %v1502
    %1506 = vset.pattern.permute.xlu0 9
    %1507 = vperm.xlu0 %1506, %v1268
    %v1508 = vpop.permute.xlu0 %1507
    %v1510 = vmul.f32 %v1508, %v76
    %v1512 = vrot.slane %v1510, 6
    %v1514 = vadd.f32 %v72, %v1512
    %1515 = vset.pattern.permute.xlu0 10
    %1516 = vperm.xlu0 %1515, %v1268
    %v1517 = vpop.permute.xlu0 %1516
    %v1519 = vmul.f32 %v1517, %v80
    %v1521 = vrot.slane %v1519, 6
    %v1523 = vadd.f32 %v1514, %v1521
    %1524 = vset.pattern.permute.xlu0 11
    %1525 = vperm.xlu0 %1524, %v1268
    %v1526 = vpop.permute.xlu0 %1525
    %v1528 = vmul.f32 %v1526, %v84
    %v1530 = vrot.slane %v1528, 6
    %v1532 = vadd.f32 %v1523, %v1530
    %v1533 = vmul.f32 %v1532, 0.5
    %v1534 = vtanh.pop %v1533
    %v1535 = vadd.f32 %v1534, 1.0
    %v1536 = vmul.f32 %v1535, 0.5
    %v1537 = vtanh.pop %v1532
    %v1539 = vrot.slane %v1262, 6
    %v1541 = vmul.f32 %v1536, %v1539
    %1543 = vrot.lane.b32.xlu0 %v1537, 122
    %v1544 = vpop.permute.xlu0 %1543
    %v1546 = vmul.f32 %v1536, %v1544
    %1548 = vrot.lane.b32.xlu0 %v1546, 3
    %v1549 = vpop.permute.xlu0 %1548
    %v1551 = vadd.f32 %v1541, %v1549
    %v1552 = vtanh.pop %v1551
    %1554 = vrot.lane.b32.xlu0 %v1552, 6
    %v1555 = vpop.permute.xlu0 %1554
    %v1557 = vmul.f32 %v1536, %v1555
    %v1558 = vmul.f32 %v1508, %v136
    %v1559 = vadd.f32 %v184, %v1558
    %v1560 = vmul.f32 %v1517, %v140
    %v1561 = vadd.f32 %v1559, %v1560
    %v1562 = vmul.f32 %v1526, %v144
    %v1563 = vadd.f32 %v1561, %v1562
    %1565 = vset.pattern.permute.xlu0 9
    %1566 = vperm.xlu0 %1565, %v1327
    %v1567 = vpop.permute.xlu0 %1566
    %v1569 = vmul.f32 %v1567, %v88
    %v1571 = vrot.slane %v1569, 6
    %v1573 = vadd.f32 %v1563, %v1571
    %1574 = vset.pattern.permute.xlu0 10
    %1575 = vperm.xlu0 %1574, %v1327
    %v1576 = vpop.permute.xlu0 %1575
    %v1578 = vmul.f32 %v1576, %v92
    %v1580 = vrot.slane %v1578, 6
    %v1582 = vadd.f32 %v1573, %v1580
    %1583 = vset.pattern.permute.xlu0 11
    %1584 = vperm.xlu0 %1583, %v1327
    %v1585 = vpop.permute.xlu0 %1584
    %v1587 = vmul.f32 %v1585, %v96
    %v1589 = vrot.slane %v1587, 6
    %v1591 = vadd.f32 %v1582, %v1589
    %v1592 = vmul.f32 %v1591, 0.5
    %v1593 = vtanh.pop %v1592
    %v1594 = vadd.f32 %v1593, 1.0
    %v1595 = vmul.f32 %v1594, 0.5
    %v1596 = vtanh.pop %v1591
    %v1598 = vrot.slane %v1321, 6
    %v1600 = vmul.f32 %v1595, %v1598
    %1602 = vrot.lane.b32.xlu0 %v1596, 122
    %v1603 = vpop.permute.xlu0 %1602
    %v1605 = vmul.f32 %v1595, %v1603
    %1607 = vrot.lane.b32.xlu0 %v1605, 3
    %v1608 = vpop.permute.xlu0 %1607
    %v1610 = vadd.f32 %v1600, %v1608
    %v1611 = vtanh.pop %v1610
    %1613 = vrot.lane.b32.xlu0 %v1611, 6
    %v1614 = vpop.permute.xlu0 %1613
    %v1616 = vmul.f32 %v1595, %v1614
    %v1617 = vmul.f32 %v1567, %v148
    %v1618 = vadd.f32 %v188, %v1617
    %v1619 = vmul.f32 %v1576, %v152
    %v1620 = vadd.f32 %v1618, %v1619
    %v1621 = vmul.f32 %v1585, %v156
    %v1622 = vadd.f32 %v1620, %v1621
    %1624 = vset.pattern.permute.xlu0 9
    %1625 = vperm.xlu0 %1624, %v1386
    %v1626 = vpop.permute.xlu0 %1625
    %v1628 = vmul.f32 %v1626, %v100
    %v1630 = vrot.slane %v1628, 6
    %v1632 = vadd.f32 %v1622, %v1630
    %1633 = vset.pattern.permute.xlu0 10
    %1634 = vperm.xlu0 %1633, %v1386
    %v1635 = vpop.permute.xlu0 %1634
    %v1637 = vmul.f32 %v1635, %v104
    %v1639 = vrot.slane %v1637, 6
    %v1641 = vadd.f32 %v1632, %v1639
    %1642 = vset.pattern.permute.xlu0 11
    %1643 = vperm.xlu0 %1642, %v1386
    %v1644 = vpop.permute.xlu0 %1643
    %v1646 = vmul.f32 %v1644, %v108
    %v1648 = vrot.slane %v1646, 6
    %v1650 = vadd.f32 %v1641, %v1648
    %v1651 = vmul.f32 %v1650, 0.5
    %v1652 = vtanh.pop %v1651
    %v1653 = vadd.f32 %v1652, 1.0
    %v1654 = vmul.f32 %v1653, 0.5
    %v1655 = vtanh.pop %v1650
    %v1657 = vrot.slane %v1380, 6
    %v1659 = vmul.f32 %v1654, %v1657
    %1661 = vrot.lane.b32.xlu0 %v1655, 122
    %v1662 = vpop.permute.xlu0 %1661
    %v1664 = vmul.f32 %v1654, %v1662
    %1666 = vrot.lane.b32.xlu0 %v1664, 3
    %v1667 = vpop.permute.xlu0 %1666
    %v1669 = vadd.f32 %v1659, %v1667
    %v1670 = vtanh.pop %v1669
    %1672 = vrot.lane.b32.xlu0 %v1670, 6
    %v1673 = vpop.permute.xlu0 %1672
    %v1675 = vmul.f32 %v1654, %v1673
    %v1676 = vmul.f32 %v1626, %v160
    %v1677 = vadd.f32 %v192, %v1676
    %v1678 = vmul.f32 %v1635, %v164
    %v1679 = vadd.f32 %v1677, %v1678
    %v1680 = vmul.f32 %v1644, %v168
    %v1681 = vadd.f32 %v1679, %v1680
    %1683 = vset.pattern.permute.xlu0 9
    %1684 = vperm.xlu0 %1683, %v1445
    %v1685 = vpop.permute.xlu0 %1684
    %v1687 = vmul.f32 %v1685, %v112
    %v1689 = vrot.slane %v1687, 6
    %v1691 = vadd.f32 %v1681, %v1689
    %1692 = vset.pattern.permute.xlu0 10
    %1693 = vperm.xlu0 %1692, %v1445
    %v1694 = vpop.permute.xlu0 %1693
    %v1696 = vmul.f32 %v1694, %v116
    %v1698 = vrot.slane %v1696, 6
    %v1700 = vadd.f32 %v1691, %v1698
    %1701 = vset.pattern.permute.xlu0 11
    %1702 = vperm.xlu0 %1701, %v1445
    %v1703 = vpop.permute.xlu0 %1702
    %v1705 = vmul.f32 %v1703, %v120
    %v1707 = vrot.slane %v1705, 6
    %v1709 = vadd.f32 %v1700, %v1707
    %v1710 = vmul.f32 %v1709, 0.5
    %v1711 = vtanh.pop %v1710
    %v1712 = vadd.f32 %v1711, 1.0
    %v1713 = vmul.f32 %v1712, 0.5
    %v1714 = vtanh.pop %v1709
    %v1716 = vrot.slane %v1439, 6
    %v1718 = vmul.f32 %v1713, %v1716
    %1720 = vrot.lane.b32.xlu0 %v1714, 122
    %v1721 = vpop.permute.xlu0 %1720
    %v1723 = vmul.f32 %v1713, %v1721
    %1725 = vrot.lane.b32.xlu0 %v1723, 3
    %v1726 = vpop.permute.xlu0 %1725
    %v1728 = vadd.f32 %v1718, %v1726
    %v1729 = vtanh.pop %v1728
    %1731 = vrot.lane.b32.xlu0 %v1729, 6
    %v1732 = vpop.permute.xlu0 %1731
    %v1734 = vmul.f32 %v1713, %v1732
    %v1735 = vmul.f32 %v1685, %v172
    %v1736 = vadd.f32 %v196, %v1735
    %v1737 = vmul.f32 %v1694, %v176
    %v1738 = vadd.f32 %v1736, %v1737
    %v1739 = vmul.f32 %v1703, %v180
    %v1740 = vadd.f32 %v1738, %v1739
    %1742 = vset.pattern.permute.xlu0 9
    %1743 = vperm.xlu0 %1742, %v1504
    %v1744 = vpop.permute.xlu0 %1743
    %v1746 = vmul.f32 %v1744, %v124
    %v1748 = vrot.slane %v1746, 6
    %v1750 = vadd.f32 %v1740, %v1748
    %1751 = vset.pattern.permute.xlu0 10
    %1752 = vperm.xlu0 %1751, %v1504
    %v1753 = vpop.permute.xlu0 %1752
    %v1755 = vmul.f32 %v1753, %v128
    %v1757 = vrot.slane %v1755, 6
    %v1759 = vadd.f32 %v1750, %v1757
    %1760 = vset.pattern.permute.xlu0 11
    %1761 = vperm.xlu0 %1760, %v1504
    %v1762 = vpop.permute.xlu0 %1761
    %v1764 = vmul.f32 %v1762, %v132
    %v1766 = vrot.slane %v1764, 6
    %v1768 = vadd.f32 %v1759, %v1766
    %v1769 = vmul.f32 %v1768, 0.5
    %v1770 = vtanh.pop %v1769
    %v1771 = vadd.f32 %v1770, 1.0
    %v1772 = vmul.f32 %v1771, 0.5
    %v1773 = vtanh.pop %v1768
    %v1775 = vrot.slane %v1498, 6
    %v1777 = vmul.f32 %v1772, %v1775
    %1779 = vrot.lane.b32.xlu0 %v1773, 122
    %v1780 = vpop.permute.xlu0 %1779
    %v1782 = vmul.f32 %v1772, %v1780
    %1784 = vrot.lane.b32.xlu0 %v1782, 3
    %v1785 = vpop.permute.xlu0 %1784
    %v1787 = vadd.f32 %v1777, %v1785
    %v1788 = vtanh.pop %v1787
    %1790 = vrot.lane.b32.xlu0 %v1788, 6
    %v1791 = vpop.permute.xlu0 %1790
    %v1793 = vmul.f32 %v1772, %v1791
    %1795 = vset.pattern.permute.xlu0 9
    %1796 = vperm.xlu0 %1795, %v1557
    %v1797 = vpop.permute.xlu0 %1796
    %v1799 = vmul.f32 %v1797, %v136
    %v1800 = vadd.f32 %v184, %v1799
    %1801 = vset.pattern.permute.xlu0 10
    %1802 = vperm.xlu0 %1801, %v1557
    %v1803 = vpop.permute.xlu0 %1802
    %v1805 = vmul.f32 %v1803, %v140
    %v1806 = vadd.f32 %v1800, %v1805
    %1807 = vset.pattern.permute.xlu0 11
    %1808 = vperm.xlu0 %1807, %v1557
    %v1809 = vpop.permute.xlu0 %1808
    %v1811 = vmul.f32 %v1809, %v144
    %v1812 = vadd.f32 %v1806, %v1811
    %1814 = vset.pattern.permute.xlu0 9
    %1815 = vperm.xlu0 %1814, %v1616
    %v1816 = vpop.permute.xlu0 %1815
    %v1818 = vmul.f32 %v1816, %v88
    %v1820 = vrot.slane %v1818, 6
    %v1822 = vadd.f32 %v1812, %v1820
    %1823 = vset.pattern.permute.xlu0 10
    %1824 = vperm.xlu0 %1823, %v1616
    %v1825 = vpop.permute.xlu0 %1824
    %v1827 = vmul.f32 %v1825, %v92
    %v1829 = vrot.slane %v1827, 6
    %v1831 = vadd.f32 %v1822, %v1829
    %1832 = vset.pattern.permute.xlu0 11
    %1833 = vperm.xlu0 %1832, %v1616
    %v1834 = vpop.permute.xlu0 %1833
    %v1836 = vmul.f32 %v1834, %v96
    %v1838 = vrot.slane %v1836, 6
    %v1840 = vadd.f32 %v1831, %v1838
    %v1841 = vmul.f32 %v1840, 0.5
    %v1842 = vtanh.pop %v1841
    %v1843 = vadd.f32 %v1842, 1.0
    %v1844 = vmul.f32 %v1843, 0.5
    %v1845 = vtanh.pop %v1840
    %v1847 = vrot.slane %v1610, 6
    %v1849 = vmul.f32 %v1844, %v1847
    %1851 = vrot.lane.b32.xlu0 %v1845, 122
    %v1852 = vpop.permute.xlu0 %1851
    %v1854 = vmul.f32 %v1844, %v1852
    %1856 = vrot.lane.b32.xlu0 %v1854, 3
    %v1857 = vpop.permute.xlu0 %1856
    %v1859 = vadd.f32 %v1849, %v1857
    %v1860 = vtanh.pop %v1859
    %1862 = vrot.lane.b32.xlu0 %v1860, 6
    %v1863 = vpop.permute.xlu0 %1862
    %v1865 = vmul.f32 %v1844, %v1863
    %v1866 = vmul.f32 %v1816, %v148
    %v1867 = vadd.f32 %v188, %v1866
    %v1868 = vmul.f32 %v1825, %v152
    %v1869 = vadd.f32 %v1867, %v1868
    %v1870 = vmul.f32 %v1834, %v156
    %v1871 = vadd.f32 %v1869, %v1870
    %1873 = vset.pattern.permute.xlu0 9
    %1874 = vperm.xlu0 %1873, %v1675
    %v1875 = vpop.permute.xlu0 %1874
    %v1877 = vmul.f32 %v1875, %v100
    %v1879 = vrot.slane %v1877, 6
    %v1881 = vadd.f32 %v1871, %v1879
    %1882 = vset.pattern.permute.xlu0 10
    %1883 = vperm.xlu0 %1882, %v1675
    %v1884 = vpop.permute.xlu0 %1883
    %v1886 = vmul.f32 %v1884, %v104
    %v1888 = vrot.slane %v1886, 6
    %v1890 = vadd.f32 %v1881, %v1888
    %1891 = vset.pattern.permute.xlu0 11
    %1892 = vperm.xlu0 %1891, %v1675
    %v1893 = vpop.permute.xlu0 %1892
    %v1895 = vmul.f32 %v1893, %v108
    %v1897 = vrot.slane %v1895, 6
    %v1899 = vadd.f32 %v1890, %v1897
    %v1900 = vmul.f32 %v1899, 0.5
    %v1901 = vtanh.pop %v1900
    %v1902 = vadd.f32 %v1901, 1.0
    %v1903 = vmul.f32 %v1902, 0.5
    %v1904 = vtanh.pop %v1899
    %v1906 = vrot.slane %v1669, 6
    %v1908 = vmul.f32 %v1903, %v1906
    %1910 = vrot.lane.b32.xlu0 %v1904, 122
    %v1911 = vpop.permute.xlu0 %1910
    %v1913 = vmul.f32 %v1903, %v1911
    %1915 = vrot.lane.b32.xlu0 %v1913, 3
    %v1916 = vpop.permute.xlu0 %1915
    %v1918 = vadd.f32 %v1908, %v1916
    %v1919 = vtanh.pop %v1918
    %1921 = vrot.lane.b32.xlu0 %v1919, 6
    %v1922 = vpop.permute.xlu0 %1921
    %v1924 = vmul.f32 %v1903, %v1922
    %v1925 = vmul.f32 %v1875, %v160
    %v1926 = vadd.f32 %v192, %v1925
    %v1927 = vmul.f32 %v1884, %v164
    %v1928 = vadd.f32 %v1926, %v1927
    %v1929 = vmul.f32 %v1893, %v168
    %v1930 = vadd.f32 %v1928, %v1929
    %1932 = vset.pattern.permute.xlu0 9
    %1933 = vperm.xlu0 %1932, %v1734
    %v1934 = vpop.permute.xlu0 %1933
    %v1936 = vmul.f32 %v1934, %v112
    %v1938 = vrot.slane %v1936, 6
    %v1940 = vadd.f32 %v1930, %v1938
    %1941 = vset.pattern.permute.xlu0 10
    %1942 = vperm.xlu0 %1941, %v1734
    %v1943 = vpop.permute.xlu0 %1942
    %v1945 = vmul.f32 %v1943, %v116
    %v1947 = vrot.slane %v1945, 6
    %v1949 = vadd.f32 %v1940, %v1947
    %1950 = vset.pattern.permute.xlu0 11
    %1951 = vperm.xlu0 %1950, %v1734
    %v1952 = vpop.permute.xlu0 %1951
    %v1954 = vmul.f32 %v1952, %v120
    %v1956 = vrot.slane %v1954, 6
    %v1958 = vadd.f32 %v1949, %v1956
    %v1959 = vmul.f32 %v1958, 0.5
    %v1960 = vtanh.pop %v1959
    %v1961 = vadd.f32 %v1960, 1.0
    %v1962 = vmul.f32 %v1961, 0.5
    %v1963 = vtanh.pop %v1958
    %v1965 = vrot.slane %v1728, 6
    %v1967 = vmul.f32 %v1962, %v1965
    %1969 = vrot.lane.b32.xlu0 %v1963, 122
    %v1970 = vpop.permute.xlu0 %1969
    %v1972 = vmul.f32 %v1962, %v1970
    %1974 = vrot.lane.b32.xlu0 %v1972, 3
    %v1975 = vpop.permute.xlu0 %1974
    %v1977 = vadd.f32 %v1967, %v1975
    %v1978 = vtanh.pop %v1977
    %1980 = vrot.lane.b32.xlu0 %v1978, 6
    %v1981 = vpop.permute.xlu0 %1980
    %v1983 = vmul.f32 %v1962, %v1981
    %v1984 = vmul.f32 %v1934, %v172
    %v1985 = vadd.f32 %v196, %v1984
    %v1986 = vmul.f32 %v1943, %v176
    %v1987 = vadd.f32 %v1985, %v1986
    %v1988 = vmul.f32 %v1952, %v180
    %v1989 = vadd.f32 %v1987, %v1988
    %1991 = vset.pattern.permute.xlu0 9
    %1992 = vperm.xlu0 %1991, %v1793
    %v1993 = vpop.permute.xlu0 %1992
    %v1995 = vmul.f32 %v1993, %v124
    %v1997 = vrot.slane %v1995, 6
    %v1999 = vadd.f32 %v1989, %v1997
    %2000 = vset.pattern.permute.xlu0 10
    %2001 = vperm.xlu0 %2000, %v1793
    %v2002 = vpop.permute.xlu0 %2001
    %v2004 = vmul.f32 %v2002, %v128
    %v2006 = vrot.slane %v2004, 6
    %v2008 = vadd.f32 %v1999, %v2006
    %2009 = vset.pattern.permute.xlu0 11
    %2010 = vperm.xlu0 %2009, %v1793
    %v2011 = vpop.permute.xlu0 %2010
    %v2013 = vmul.f32 %v2011, %v132
    %v2015 = vrot.slane %v2013, 6
    %v2017 = vadd.f32 %v2008, %v2015
    %v2018 = vmul.f32 %v2017, 0.5
    %v2019 = vtanh.pop %v2018
    %v2020 = vadd.f32 %v2019, 1.0
    %v2021 = vmul.f32 %v2020, 0.5
    %v2022 = vtanh.pop %v2017
    %v2024 = vrot.slane %v1787, 6
    %v2026 = vmul.f32 %v2021, %v2024
    %2028 = vrot.lane.b32.xlu0 %v2022, 122
    %v2029 = vpop.permute.xlu0 %2028
    %v2031 = vmul.f32 %v2021, %v2029
    %2033 = vrot.lane.b32.xlu0 %v2031, 3
    %v2034 = vpop.permute.xlu0 %2033
    %v2036 = vadd.f32 %v2026, %v2034
    %v2037 = vtanh.pop %v2036
    %2039 = vrot.lane.b32.xlu0 %v2037, 6
    %v2040 = vpop.permute.xlu0 %2039
    %v2042 = vmul.f32 %v2021, %v2040
    %2044 = vset.pattern.permute.xlu0 9
    %2045 = vperm.xlu0 %2044, %v1865
    %v2046 = vpop.permute.xlu0 %2045
    %v2048 = vmul.f32 %v2046, %v148
    %v2049 = vadd.f32 %v188, %v2048
    %2050 = vset.pattern.permute.xlu0 10
    %2051 = vperm.xlu0 %2050, %v1865
    %v2052 = vpop.permute.xlu0 %2051
    %v2054 = vmul.f32 %v2052, %v152
    %v2055 = vadd.f32 %v2049, %v2054
    %2056 = vset.pattern.permute.xlu0 11
    %2057 = vperm.xlu0 %2056, %v1865
    %v2058 = vpop.permute.xlu0 %2057
    %v2060 = vmul.f32 %v2058, %v156
    %v2061 = vadd.f32 %v2055, %v2060
    %2063 = vset.pattern.permute.xlu0 9
    %2064 = vperm.xlu0 %2063, %v1924
    %v2065 = vpop.permute.xlu0 %2064
    %v2067 = vmul.f32 %v2065, %v100
    %v2069 = vrot.slane %v2067, 6
    %v2071 = vadd.f32 %v2061, %v2069
    %2072 = vset.pattern.permute.xlu0 10
    %2073 = vperm.xlu0 %2072, %v1924
    %v2074 = vpop.permute.xlu0 %2073
    %v2076 = vmul.f32 %v2074, %v104
    %v2078 = vrot.slane %v2076, 6
    %v2080 = vadd.f32 %v2071, %v2078
    %2081 = vset.pattern.permute.xlu0 11
    %2082 = vperm.xlu0 %2081, %v1924
    %v2083 = vpop.permute.xlu0 %2082
    %v2085 = vmul.f32 %v2083, %v108
    %v2087 = vrot.slane %v2085, 6
    %v2089 = vadd.f32 %v2080, %v2087
    %v2090 = vmul.f32 %v2089, 0.5
    %v2091 = vtanh.pop %v2090
    %v2092 = vadd.f32 %v2091, 1.0
    %v2093 = vmul.f32 %v2092, 0.5
    %v2094 = vtanh.pop %v2089
    %v2096 = vrot.slane %v1918, 6
    %v2098 = vmul.f32 %v2093, %v2096
    %2100 = vrot.lane.b32.xlu0 %v2094, 122
    %v2101 = vpop.permute.xlu0 %2100
    %v2103 = vmul.f32 %v2093, %v2101
    %2105 = vrot.lane.b32.xlu0 %v2103, 3
    %v2106 = vpop.permute.xlu0 %2105
    %v2108 = vadd.f32 %v2098, %v2106
    %v2109 = vtanh.pop %v2108
    %2111 = vrot.lane.b32.xlu0 %v2109, 6
    %v2112 = vpop.permute.xlu0 %2111
    %v2114 = vmul.f32 %v2093, %v2112
    %v2115 = vmul.f32 %v2065, %v160
    %v2116 = vadd.f32 %v192, %v2115
    %v2117 = vmul.f32 %v2074, %v164
    %v2118 = vadd.f32 %v2116, %v2117
    %v2119 = vmul.f32 %v2083, %v168
    %v2120 = vadd.f32 %v2118, %v2119
    %2122 = vset.pattern.permute.xlu0 9
    %2123 = vperm.xlu0 %2122, %v1983
    %v2124 = vpop.permute.xlu0 %2123
    %v2126 = vmul.f32 %v2124, %v112
    %v2128 = vrot.slane %v2126, 6
    %v2130 = vadd.f32 %v2120, %v2128
    %2131 = vset.pattern.permute.xlu0 10
    %2132 = vperm.xlu0 %2131, %v1983
    %v2133 = vpop.permute.xlu0 %2132
    %v2135 = vmul.f32 %v2133, %v116
    %v2137 = vrot.slane %v2135, 6
    %v2139 = vadd.f32 %v2130, %v2137
    %2140 = vset.pattern.permute.xlu0 11
    %2141 = vperm.xlu0 %2140, %v1983
    %v2142 = vpop.permute.xlu0 %2141
    %v2144 = vmul.f32 %v2142, %v120
    %v2146 = vrot.slane %v2144, 6
    %v2148 = vadd.f32 %v2139, %v2146
    %v2149 = vmul.f32 %v2148, 0.5
    %v2150 = vtanh.pop %v2149
    %v2151 = vadd.f32 %v2150, 1.0
    %v2152 = vmul.f32 %v2151, 0.5
    %v2153 = vtanh.pop %v2148
    %v2155 = vrot.slane %v1977, 6
    %v2157 = vmul.f32 %v2152, %v2155
    %2159 = vrot.lane.b32.xlu0 %v2153, 122
    %v2160 = vpop.permute.xlu0 %2159
    %v2162 = vmul.f32 %v2152, %v2160
    %2164 = vrot.lane.b32.xlu0 %v2162, 3
    %v2165 = vpop.permute.xlu0 %2164
    %v2167 = vadd.f32 %v2157, %v2165
    %v2168 = vtanh.pop %v2167
    %2170 = vrot.lane.b32.xlu0 %v2168, 6
    %v2171 = vpop.permute.xlu0 %2170
    %v2173 = vmul.f32 %v2152, %v2171
    %v2174 = vmul.f32 %v2124, %v172
    %v2175 = vadd.f32 %v196, %v2174
    %v2176 = vmul.f32 %v2133, %v176
    %v2177 = vadd.f32 %v2175, %v2176
    %v2178 = vmul.f32 %v2142, %v180
    %v2179 = vadd.f32 %v2177, %v2178
    %2181 = vset.pattern.permute.xlu0 9
    %2182 = vperm.xlu0 %2181, %v2042
    %v2183 = vpop.permute.xlu0 %2182
    %v2185 = vmul.f32 %v2183, %v124
    %v2187 = vrot.slane %v2185, 6
    %v2189 = vadd.f32 %v2179, %v2187
    %2190 = vset.pattern.permute.xlu0 10
    %2191 = vperm.xlu0 %2190, %v2042
    %v2192 = vpop.permute.xlu0 %2191
    %v2194 = vmul.f32 %v2192, %v128
    %v2196 = vrot.slane %v2194, 6
    %v2198 = vadd.f32 %v2189, %v2196
    %2199 = vset.pattern.permute.xlu0 11
    %2200 = vperm.xlu0 %2199, %v2042
    %v2201 = vpop.permute.xlu0 %2200
    %v2203 = vmul.f32 %v2201, %v132
    %v2205 = vrot.slane %v2203, 6
    %v2207 = vadd.f32 %v2198, %v2205
    %v2208 = vmul.f32 %v2207, 0.5
    %v2209 = vtanh.pop %v2208
    %v2210 = vadd.f32 %v2209, 1.0
    %v2211 = vmul.f32 %v2210, 0.5
    %v2212 = vtanh.pop %v2207
    %v2214 = vrot.slane %v2036, 6
    %v2216 = vmul.f32 %v2211, %v2214
    %2218 = vrot.lane.b32.xlu0 %v2212, 122
    %v2219 = vpop.permute.xlu0 %2218
    %v2221 = vmul.f32 %v2211, %v2219
    %2223 = vrot.lane.b32.xlu0 %v2221, 3
    %v2224 = vpop.permute.xlu0 %2223
    %v2226 = vadd.f32 %v2216, %v2224
    %v2227 = vtanh.pop %v2226
    %2229 = vrot.lane.b32.xlu0 %v2227, 6
    %v2230 = vpop.permute.xlu0 %2229
    %v2232 = vmul.f32 %v2211, %v2230
    %2234 = vset.pattern.permute.xlu0 9
    %2235 = vperm.xlu0 %2234, %v2114
    %v2236 = vpop.permute.xlu0 %2235
    %v2238 = vmul.f32 %v2236, %v160
    %v2239 = vadd.f32 %v192, %v2238
    %2240 = vset.pattern.permute.xlu0 10
    %2241 = vperm.xlu0 %2240, %v2114
    %v2242 = vpop.permute.xlu0 %2241
    %v2244 = vmul.f32 %v2242, %v164
    %v2245 = vadd.f32 %v2239, %v2244
    %2246 = vset.pattern.permute.xlu0 11
    %2247 = vperm.xlu0 %2246, %v2114
    %v2248 = vpop.permute.xlu0 %2247
    %v2250 = vmul.f32 %v2248, %v168
    %v2251 = vadd.f32 %v2245, %v2250
    %2253 = vset.pattern.permute.xlu0 9
    %2254 = vperm.xlu0 %2253, %v2173
    %v2255 = vpop.permute.xlu0 %2254
    %v2257 = vmul.f32 %v2255, %v112
    %v2259 = vrot.slane %v2257, 6
    %v2261 = vadd.f32 %v2251, %v2259
    %2262 = vset.pattern.permute.xlu0 10
    %2263 = vperm.xlu0 %2262, %v2173
    %v2264 = vpop.permute.xlu0 %2263
    %v2266 = vmul.f32 %v2264, %v116
    %v2268 = vrot.slane %v2266, 6
    %v2270 = vadd.f32 %v2261, %v2268
    %2271 = vset.pattern.permute.xlu0 11
    %2272 = vperm.xlu0 %2271, %v2173
    %v2273 = vpop.permute.xlu0 %2272
    %v2275 = vmul.f32 %v2273, %v120
    %v2277 = vrot.slane %v2275, 6
    %v2279 = vadd.f32 %v2270, %v2277
    %v2280 = vmul.f32 %v2279, 0.5
    %v2281 = vtanh.pop %v2280
    %v2282 = vadd.f32 %v2281, 1.0
    %v2283 = vmul.f32 %v2282, 0.5
    %v2284 = vtanh.pop %v2279
    %v2286 = vrot.slane %v2167, 6
    %v2288 = vmul.f32 %v2283, %v2286
    %2290 = vrot.lane.b32.xlu0 %v2284, 122
    %v2291 = vpop.permute.xlu0 %2290
    %v2293 = vmul.f32 %v2283, %v2291
    %2295 = vrot.lane.b32.xlu0 %v2293, 3
    %v2296 = vpop.permute.xlu0 %2295
    %v2298 = vadd.f32 %v2288, %v2296
    %v2299 = vtanh.pop %v2298
    %2301 = vrot.lane.b32.xlu0 %v2299, 6
    %v2302 = vpop.permute.xlu0 %2301
    %v2304 = vmul.f32 %v2283, %v2302
    %v2305 = vmul.f32 %v2255, %v172
    %v2306 = vadd.f32 %v196, %v2305
    %v2307 = vmul.f32 %v2264, %v176
    %v2308 = vadd.f32 %v2306, %v2307
    %v2309 = vmul.f32 %v2273, %v180
    %v2310 = vadd.f32 %v2308, %v2309
    %2312 = vset.pattern.permute.xlu0 9
    %2313 = vperm.xlu0 %2312, %v2232
    %v2314 = vpop.permute.xlu0 %2313
    %v2316 = vmul.f32 %v2314, %v124
    %v2318 = vrot.slane %v2316, 6
    %v2320 = vadd.f32 %v2310, %v2318
    %2321 = vset.pattern.permute.xlu0 10
    %2322 = vperm.xlu0 %2321, %v2232
    %v2323 = vpop.permute.xlu0 %2322
    %v2325 = vmul.f32 %v2323, %v128
    %v2327 = vrot.slane %v2325, 6
    %v2329 = vadd.f32 %v2320, %v2327
    %2330 = vset.pattern.permute.xlu0 11
    %2331 = vperm.xlu0 %2330, %v2232
    %v2332 = vpop.permute.xlu0 %2331
    %v2334 = vmul.f32 %v2332, %v132
    %v2336 = vrot.slane %v2334, 6
    %v2338 = vadd.f32 %v2329, %v2336
    %v2339 = vmul.f32 %v2338, 0.5
    %v2340 = vtanh.pop %v2339
    %v2341 = vadd.f32 %v2340, 1.0
    %v2342 = vmul.f32 %v2341, 0.5
    %v2343 = vtanh.pop %v2338
    %v2345 = vrot.slane %v2226, 6
    %v2347 = vmul.f32 %v2342, %v2345
    %2349 = vrot.lane.b32.xlu0 %v2343, 122
    %v2350 = vpop.permute.xlu0 %2349
    %v2352 = vmul.f32 %v2342, %v2350
    %2354 = vrot.lane.b32.xlu0 %v2352, 3
    %v2355 = vpop.permute.xlu0 %2354
    %v2357 = vadd.f32 %v2347, %v2355
    %v2358 = vtanh.pop %v2357
    %2360 = vrot.lane.b32.xlu0 %v2358, 6
    %v2361 = vpop.permute.xlu0 %2360
    %v2363 = vmul.f32 %v2342, %v2361
    %2365 = vset.pattern.permute.xlu0 9
    %2366 = vperm.xlu0 %2365, %v2304
    %v2367 = vpop.permute.xlu0 %2366
    %v2369 = vmul.f32 %v2367, %v172
    %v2370 = vadd.f32 %v196, %v2369
    %2371 = vset.pattern.permute.xlu0 10
    %2372 = vperm.xlu0 %2371, %v2304
    %v2373 = vpop.permute.xlu0 %2372
    %v2375 = vmul.f32 %v2373, %v176
    %v2376 = vadd.f32 %v2370, %v2375
    %2377 = vset.pattern.permute.xlu0 11
    %2378 = vperm.xlu0 %2377, %v2304
    %v2379 = vpop.permute.xlu0 %2378
    %v2381 = vmul.f32 %v2379, %v180
    %v2382 = vadd.f32 %v2376, %v2381
    %2384 = vset.pattern.permute.xlu0 9
    %2385 = vperm.xlu0 %2384, %v2363
    %v2386 = vpop.permute.xlu0 %2385
    %v2388 = vmul.f32 %v2386, %v124
    %v2390 = vrot.slane %v2388, 6
    %v2392 = vadd.f32 %v2382, %v2390
    %2393 = vset.pattern.permute.xlu0 10
    %2394 = vperm.xlu0 %2393, %v2363
    %v2395 = vpop.permute.xlu0 %2394
    %v2397 = vmul.f32 %v2395, %v128
    %v2399 = vrot.slane %v2397, 6
    %v2401 = vadd.f32 %v2392, %v2399
    %2402 = vset.pattern.permute.xlu0 11
    %2403 = vperm.xlu0 %2402, %v2363
    %v2404 = vpop.permute.xlu0 %2403
    %v2406 = vmul.f32 %v2404, %v132
    %v2408 = vrot.slane %v2406, 6
    %v2410 = vadd.f32 %v2401, %v2408
    %v2411 = vmul.f32 %v2410, 0.5
    %v2412 = vtanh.pop %v2411
    %v2413 = vadd.f32 %v2412, 1.0
    %v2414 = vmul.f32 %v2413, 0.5
    %v2415 = vtanh.pop %v2410
    %v2417 = vrot.slane %v2357, 6
    %v2419 = vmul.f32 %v2414, %v2417
    %2421 = vrot.lane.b32.xlu0 %v2415, 122
    %v2422 = vpop.permute.xlu0 %2421
    %v2424 = vmul.f32 %v2414, %v2422
    %2426 = vrot.lane.b32.xlu0 %v2424, 3
    %v2427 = vpop.permute.xlu0 %2426
    %v2429 = vadd.f32 %v2419, %v2427
    %v2430 = vtanh.pop %v2429
    %2432 = vrot.lane.b32.xlu0 %v2430, 6
    %v2433 = vpop.permute.xlu0 %2432
    %v2435 = vmul.f32 %v2414, %v2433
    %v2436 = vlaneseq
    %v2437 = vshrl.u32 %v2436, 7
    %v2438 = vsub.s32 6, %v2437
    %v2439 = vrot.slane %v18, %v2438
    %v2440 = vlaneseq
    %v2441 = vshrl.u32 %v2440, 7
    %v2442 = vsub.s32 3, %v2441
    %v2443 = vrot.slane %v18, %v2442
    %2445 = vset.pattern.permute.xlu0 9
    %2446 = vperm.xlu0 %2445, %v2435
    %v2447 = vpop.permute.xlu0 %2446
    %v2449 = vmul.f32 %v2447, %v2443
    %v2450 = vadd.f32 %v2439, %v2449
    %v2451 = vlaneseq
    %v2452 = vshrl.u32 %v2451, 7
    %v2453 = vsub.s32 4, %v2452
    %v2454 = vrot.slane %v18, %v2453
    %2455 = vset.pattern.permute.xlu0 10
    %2456 = vperm.xlu0 %2455, %v2435
    %v2457 = vpop.permute.xlu0 %2456
    %v2459 = vmul.f32 %v2457, %v2454
    %v2460 = vadd.f32 %v2450, %v2459
    %v2461 = vlaneseq
    %v2462 = vshrl.u32 %v2461, 7
    %v2463 = vsub.s32 5, %v2462
    %v2464 = vrot.slane %v18, %v2463
    %2465 = vset.pattern.permute.xlu0 11
    %2466 = vperm.xlu0 %2465, %v2435
    %v2467 = vpop.permute.xlu0 %2466
    %v2469 = vmul.f32 %v2467, %v2464
    %v2470 = vadd.f32 %v2460, %v2469
    %v2471 = vadd.f32 %v2470, 1.0
    %v2472 = vmul.f32 %v2471, %v13
    %v2473 = vmax.f32 %v2472, 0.0
    %vm2474 = vcmask 23558
    %2475 = vst.msk [vmem:[#allocation2 - $0x6] sm:$0xc0] %vm2474, %v2473
    // Predicated region
    $region10: #{net_forward.1} parent=1 // pred_check
      _
    $region11: #{net_forward.1} parent=1 // pred_check_branch
      %2477 = sbr.rel (0) target = $region13
    $region12: #{net_forward.1} parent=1 // pred_region
      %s2479 = ssub.s32 32, 32
      %2480 = vsyncadd [#allocation3], %s2479
      %s2482 = sshll.u32 [#allocation2], 4
      %s2483 = int_to_ptr.vmem [resolvable:$true] %s2482
      %2485 = dma.vmem_to_hbm [thread:$0]  %s2483, 32, %s2, [#allocation3]
    $region13: #{net_forward.1} parent=1 // pred_fallthru
      _
    // Predicated region
    $region14: #{net_forward.1} parent=1 // pred_check
      _
    $region15: #{net_forward.1} parent=1 // pred_check_branch
      %2487 = sbr.rel (0) target = $region17
    $region16: #{net_forward.1} parent=1 // pred_region
      %2488 = dma.done [#allocation3], 32
    $region17: #{net_forward.1} parent=1 // pred_fallthru
      _
    %2489 = vsyncpa [#allocation3], 1

</llo_original>
